<compile_context>
chip_gen: v5e
topology: v5e:2x2
jax: 0.10.0
libtpu: 0.0.40
codegen_flags: <defaults>
</compile_context>

<pallas_src>
import jax
import jax.numpy as jnp
from jax import lax
from jax.experimental import pallas as pl
from jax.experimental.pallas import tpu as pltpu


# ----------------------------------------------------------------------------
# In-kernel helpers
# ----------------------------------------------------------------------------
def _shifted(h, d, t_iota, direction):
    """direction=+1: out[:, t] = h[:, t - d]; direction=-1: out[:, t] = h[:, t + d];
    zero outside the valid range.  `d` is a static Python int."""
    T = h.shape[-1]
    if d >= T:               # dilation >= tile length: every tap falls off the edge
        return jnp.zeros_like(h)
    if direction > 0:
        return jnp.where(t_iota >= d, pltpu.roll(h, shift=d, axis=1), 0)
    return jnp.where(t_iota < T - d, pltpu.roll(h, shift=T - d, axis=1), 0)


def _stage_body(x, p, dilations, t_iota, apply_softmax):
    """One SingleStageModel on a (Cin, T) f32 tile -> (Cout, T) f32.

    p = (w_in, b_in, wd_flat, bd, w11, b11, w_out, b_out) refs; weights bf16,
    biases f32; wd_flat is (L, F, 3F) with taps concatenated [left|center|right].
    """
    w_in, b_in, wd, bd, w11, b11, w_out, b_out = p

    if apply_softmax:  # F.softmax(out, dim=1): softmax over channels
        m = jnp.max(x, axis=0, keepdims=True)
        e = jnp.exp(x - m)
        x = e * pl.reciprocal(jnp.sum(e, axis=0, keepdims=True), approx=True)

    # input 1x1 conv:  (F, Cin) @ (Cin, T) + (F, 1)
    h = jnp.dot(w_in[...], x.astype(jnp.bfloat16),
                preferred_element_type=jnp.float32) + b_in[...]

    for l, d in enumerate(dilations):
        left = _shifted(h, d, t_iota, +1)          # h[:, t - d]
        right = _shifted(h, d, t_iota, -1)         # h[:, t + d]
        stacked = jnp.concatenate([left, h, right],
                                  axis=0).astype(jnp.bfloat16)   # (3F, T)
        conv = jnp.dot(wd[l], stacked,
                       preferred_element_type=jnp.float32) + bd[l]
        a = jnp.maximum(conv, 0.0).astype(jnp.bfloat16)          # ReLU
        # TODO(synk): nn.Dropout treated as identity (inference semantics).
        h = h + (jnp.dot(w11[l], a,
                         preferred_element_type=jnp.float32) + b11[l])

    return jnp.dot(w_out[...], h.astype(jnp.bfloat16),
                   preferred_element_type=jnp.float32) + b_out[...]


def make_fused_kernel(num_stages, dilations):
    dilations = tuple(int(d) for d in dilations)

    def kernel(*refs):
        x_ref = refs[0]
        o_ref = refs[-1]
        stage_refs = refs[1:-1]           # 8 refs per stage

        y = x_ref[0].astype(jnp.float32)                     # (Din, T)
        T = y.shape[-1]
        t_iota = lax.broadcasted_iota(jnp.int32, (1, T), 1)  # broadcast mask

        for s in range(num_stages):
            p = stage_refs[8 * s: 8 * (s + 1)]
            y = _stage_body(y, p, dilations, t_iota, apply_softmax=(s > 0))
            o_ref[s, 0] = y.astype(o_ref.dtype)

    return kernel


# ----------------------------------------------------------------------------
# Wrapper: ONE pallas_call for the whole multi-stage model, grid over batch.
# ----------------------------------------------------------------------------
def multi_stage_forward(x, stage_params_list, num_layers):
    N, Din, T = x.shape
    num_stages = len(stage_params_list)
    dilations = tuple(2 ** i for i in range(num_layers))
    C = stage_params_list[0][6].shape[0]          # num_classes (w_out rows)

    # Flatten params: weights -> bf16; dilated conv weights -> (L, F, 3F) with
    # the three taps concatenated so the kernel does ONE K=3F matmul per layer.
    flat = []
    for (w_in, b_in, wd, bd, w11, b11, w_out, b_out) in stage_params_list:
        L, _, F_, _ = wd.shape                               # (L, 3, F, F)
        wd_flat = jnp.transpose(wd, (0, 2, 1, 3)).reshape(L, F_, 3 * F_)
        flat += [w_in.astype(jnp.bfloat16), b_in.astype(jnp.float32),
                 wd_flat.astype(jnp.bfloat16), bd.astype(jnp.float32),
                 w11.astype(jnp.bfloat16), b11.astype(jnp.float32),
                 w_out.astype(jnp.bfloat16), b_out.astype(jnp.float32)]

    def full_spec(arr):
        r = arr.ndim
        return pl.BlockSpec(arr.shape, lambda n, _r=r: (0,) * _r)

    kernel = make_fused_kernel(num_stages, dilations)
    # TODO(synk): for production-length T (thousands of frames), add a time
    # grid axis with halo = max dilation and size the T tile per VMEM budget.
    return pl.pallas_call(
        kernel,
        out_shape=jax.ShapeDtypeStruct((num_stages, N, C, T), jnp.float32),
        grid_spec=pltpu.PrefetchScalarGridSpec(
            num_scalar_prefetch=0,
            grid=(N,),
            in_specs=[pl.BlockSpec((1, Din, T), lambda n: (n, 0, 0))]
                     + [full_spec(a) for a in flat],
            out_specs=pl.BlockSpec((num_stages, 1, C, T),
                                   lambda n: (0, n, 0, 0)),
        ),
        compiler_params=pltpu.CompilerParams(
            dimension_semantics=("parallel",)),   # batch iters independent
    )(x, *flat)


# ----------------------------------------------------------------------------
# Deterministic parameter init (shapes follow the nn.Module __init__).
# Weights stored in bf16 (what the kernel consumes), biases in f32.
# ----------------------------------------------------------------------------
def init_stage_params(key, num_layers, num_f_maps, dim, num_classes):
    ks = jax.random.split(key, 8)
    s = 0.1
    w_in = (jax.random.normal(ks[0], (num_f_maps, dim), jnp.float32) * s
            ).astype(jnp.bfloat16)
    b_in = jax.random.normal(ks[1], (num_f_maps, 1), jnp.float32) * s
    wd = (jax.random.normal(ks[2], (num_layers, 3, num_f_maps, num_f_maps),
                            jnp.float32) * s).astype(jnp.bfloat16)
    bd = jax.random.normal(ks[3], (num_layers, num_f_maps, 1), jnp.float32) * s
    w11 = (jax.random.normal(ks[4], (num_layers, num_f_maps, num_f_maps),
                             jnp.float32) * s).astype(jnp.bfloat16)
    b11 = jax.random.normal(ks[5], (num_layers, num_f_maps, 1), jnp.float32) * s
    w_out = (jax.random.normal(ks[6], (num_classes, num_f_maps),
                               jnp.float32) * s).astype(jnp.bfloat16)
    b_out = jax.random.normal(ks[7], (num_classes, 1), jnp.float32) * s
    return (w_in, b_in, wd, bd, w11, b11, w_out, b_out)


# ----------------------------------------------------------------------------
# Pure-JAX reference (independent path via lax.conv_general_dilated, f32).
# ----------------------------------------------------------------------------
def _conv1d_ref(x, w, b, dilation=1, padding=0):
    y = lax.conv_general_dilated(
        x, w.astype(x.dtype), window_strides=(1,),
        padding=[(padding, padding)], rhs_dilation=(dilation,),
        dimension_numbers=("NCH", "OIH", "NCH"))
    return y + b[None, :, None]


def _ref_stage(x, params, dilations, apply_softmax):
    w_in, b_in, wd, bd, w11, b11, w_out, b_out = params
    if apply_softmax:
        x = jax.nn.softmax(x, axis=1)
    h = _conv1d_ref(x, w_in[:, :, None], b_in[:, 0])
    for l, d in enumerate(dilations):
        wk = jnp.transpose(wd[l], (1, 2, 0))            # (F, F, 3), taps last
        c = jax.nn.relu(_conv1d_ref(h, wk, bd[l, :, 0], dilation=d, padding=d))
        o = _conv1d_ref(c, w11[l][:, :, None], b11[l, :, 0])
        h = h + o
    return _conv1d_ref(h, w_out[:, :, None], b_out[:, 0])


def _ref_forward(x, stage_params_list, num_layers):
    dilations = tuple(2 ** i for i in range(num_layers))
    outs = []
    out = _ref_stage(x, stage_params_list[0], dilations, apply_softmax=False)
    outs.append(out)
    for params in stage_params_list[1:]:
        out = _ref_stage(out, params, dilations, apply_softmax=True)
        outs.append(out)
    return jnp.stack(outs, axis=0)


# ----------------------------------------------------------------------------
if __name__ == "__main__":
    num_stages, num_layers = 3, 3
    num_f_maps, dim, num_classes = 32, 4, 8
    N, T = 2, 128

    root = jax.random.PRNGKey(0)
    k_x, *k_stages = jax.random.split(root, num_stages + 1)

    stage_params = [init_stage_params(k_stages[0], num_layers, num_f_maps,
                                      dim, num_classes)]
    for s in range(1, num_stages):
        stage_params.append(init_stage_params(k_stages[s], num_layers,
                                              num_f_maps, num_classes,
                                              num_classes))

    x = jax.random.normal(k_x, (N, dim, T), jnp.float32)

    out = multi_stage_forward(x, stage_params, num_layers)
    out = jax.block_until_ready(out)

    ref = _ref_forward(x, stage_params, num_layers)
    assert out.shape == (num_stages, N, num_classes, T)
    assert jnp.allclose(out, ref, rtol=2e-2, atol=2e-2)

    print("KERNEL_OK")
</pallas_src>

<mosaic_0001>
module attributes {stable_mosaic.version = 11 : i64} {
  func.func @kernel(%arg0: i32, %arg1: memref<1x4x128xf32, #tpu.memory_space<vmem>>, %arg2: memref<32x4xbf16, #tpu.memory_space<vmem>>, %arg3: memref<32x1xf32, #tpu.memory_space<vmem>>, %arg4: memref<3x32x96xbf16, #tpu.memory_space<vmem>>, %arg5: memref<3x32x1xf32, #tpu.memory_space<vmem>>, %arg6: memref<3x32x32xbf16, #tpu.memory_space<vmem>>, %arg7: memref<3x32x1xf32, #tpu.memory_space<vmem>>, %arg8: memref<8x32xbf16, #tpu.memory_space<vmem>>, %arg9: memref<8x1xf32, #tpu.memory_space<vmem>>, %arg10: memref<32x8xbf16, #tpu.memory_space<vmem>>, %arg11: memref<32x1xf32, #tpu.memory_space<vmem>>, %arg12: memref<3x32x96xbf16, #tpu.memory_space<vmem>>, %arg13: memref<3x32x1xf32, #tpu.memory_space<vmem>>, %arg14: memref<3x32x32xbf16, #tpu.memory_space<vmem>>, %arg15: memref<3x32x1xf32, #tpu.memory_space<vmem>>, %arg16: memref<8x32xbf16, #tpu.memory_space<vmem>>, %arg17: memref<8x1xf32, #tpu.memory_space<vmem>>, %arg18: memref<32x8xbf16, #tpu.memory_space<vmem>>, %arg19: memref<32x1xf32, #tpu.memory_space<vmem>>, %arg20: memref<3x32x96xbf16, #tpu.memory_space<vmem>>, %arg21: memref<3x32x1xf32, #tpu.memory_space<vmem>>, %arg22: memref<3x32x32xbf16, #tpu.memory_space<vmem>>, %arg23: memref<3x32x1xf32, #tpu.memory_space<vmem>>, %arg24: memref<8x32xbf16, #tpu.memory_space<vmem>>, %arg25: memref<8x1xf32, #tpu.memory_space<vmem>>, %arg26: memref<3x1x8x128xf32, #tpu.memory_space<vmem>>) attributes {dimension_semantics = [#tpu.dimension_semantics<parallel>], iteration_bounds = array<i64: 2>, scalar_prefetch = 0 : i64, scratch_operands = 0 : i64, tpu.core_type = #tpu.core_type<tc>, window_params = [{transform_indices = @transform_0, window_bounds = array<i64: 1, 4, 128>}, {pipeline_mode = #tpu.pipeline_mode<synchronous>, transform_indices = @transform_1, window_bounds = array<i64: 32, 4>}, {pipeline_mode = #tpu.pipeline_mode<synchronous>, transform_indices = @transform_2, window_bounds = array<i64: 32, 1>}, {pipeline_mode = #tpu.pipeline_mode<synchronous>, transform_indices = @transform_3, window_bounds = array<i64: 3, 32, 96>}, {pipeline_mode = #tpu.pipeline_mode<synchronous>, transform_indices = @transform_4, window_bounds = array<i64: 3, 32, 1>}, {pipeline_mode = #tpu.pipeline_mode<synchronous>, transform_indices = @transform_5, window_bounds = array<i64: 3, 32, 32>}, {pipeline_mode = #tpu.pipeline_mode<synchronous>, transform_indices = @transform_6, window_bounds = array<i64: 3, 32, 1>}, {pipeline_mode = #tpu.pipeline_mode<synchronous>, transform_indices = @transform_7, window_bounds = array<i64: 8, 32>}, {pipeline_mode = #tpu.pipeline_mode<synchronous>, transform_indices = @transform_8, window_bounds = array<i64: 8, 1>}, {pipeline_mode = #tpu.pipeline_mode<synchronous>, transform_indices = @transform_9, window_bounds = array<i64: 32, 8>}, {pipeline_mode = #tpu.pipeline_mode<synchronous>, transform_indices = @transform_10, window_bounds = array<i64: 32, 1>}, {pipeline_mode = #tpu.pipeline_mode<synchronous>, transform_indices = @transform_11, window_bounds = array<i64: 3, 32, 96>}, {pipeline_mode = #tpu.pipeline_mode<synchronous>, transform_indices = @transform_12, window_bounds = array<i64: 3, 32, 1>}, {pipeline_mode = #tpu.pipeline_mode<synchronous>, transform_indices = @transform_13, window_bounds = array<i64: 3, 32, 32>}, {pipeline_mode = #tpu.pipeline_mode<synchronous>, transform_indices = @transform_14, window_bounds = array<i64: 3, 32, 1>}, {pipeline_mode = #tpu.pipeline_mode<synchronous>, transform_indices = @transform_15, window_bounds = array<i64: 8, 32>}, {pipeline_mode = #tpu.pipeline_mode<synchronous>, transform_indices = @transform_16, window_bounds = array<i64: 8, 1>}, {pipeline_mode = #tpu.pipeline_mode<synchronous>, transform_indices = @transform_17, window_bounds = array<i64: 32, 8>}, {pipeline_mode = #tpu.pipeline_mode<synchronous>, transform_indices = @transform_18, window_bounds = array<i64: 32, 1>}, {pipeline_mode = #tpu.pipeline_mode<synchronous>, transform_indices = @transform_19, window_bounds = array<i64: 3, 32, 96>}, {pipeline_mode = #tpu.pipeline_mode<synchronous>, transform_indices = @transform_20, window_bounds = array<i64: 3, 32, 1>}, {pipeline_mode = #tpu.pipeline_mode<synchronous>, transform_indices = @transform_21, window_bounds = array<i64: 3, 32, 32>}, {pipeline_mode = #tpu.pipeline_mode<synchronous>, transform_indices = @transform_22, window_bounds = array<i64: 3, 32, 1>}, {pipeline_mode = #tpu.pipeline_mode<synchronous>, transform_indices = @transform_23, window_bounds = array<i64: 8, 32>}, {pipeline_mode = #tpu.pipeline_mode<synchronous>, transform_indices = @transform_24, window_bounds = array<i64: 8, 1>}, {transform_indices = @transform_25, window_bounds = array<i64: 3, 1, 8, 128>}]} {
    %c0 = arith.constant 0 : index
    %c0_0 = arith.constant 0 : index
    %c0_1 = arith.constant 0 : index
    %0 = vector.load %arg1[%c0, %c0_0, %c0_1] : memref<1x4x128xf32, #tpu.memory_space<vmem>>, vector<1x4x128xf32>
    %1 = vector.shape_cast %0 : vector<1x4x128xf32> to vector<4x128xf32>
    %2 = tpu.iota {dimensions = array<i32: 1>} : vector<1x128xi32>
    %c0_2 = arith.constant 0 : index
    %c0_3 = arith.constant 0 : index
    %3 = vector.load %arg2[%c0_2, %c0_3] : memref<32x4xbf16, #tpu.memory_space<vmem>>, vector<32x4xbf16>
    %4 = arith.truncf %1 : vector<4x128xf32> to vector<4x128xbf16>
    %cst = arith.constant dense<0.000000e+00> : vector<32x128xf32>
    %5 = tpu.matmul %3, %4, %cst {dimension_numbers = #tpu.dot_dimension_numbers<[1], [0], [0], [1], [0, 0, 1, 1], [], []>} : vector<32x4xbf16>, vector<4x128xbf16>, vector<32x128xf32> -> vector<32x128xf32>
    %c0_4 = arith.constant 0 : index
    %c0_5 = arith.constant 0 : index
    %6 = vector.load %arg3[%c0_4, %c0_5] : memref<32x1xf32, #tpu.memory_space<vmem>>, vector<32x1xf32>
    %7 = vector.broadcast %6 : vector<32x1xf32> to vector<32x128xf32>
    %8 = arith.addf %5, %7 : vector<32x128xf32>
    %c1_i32 = arith.constant 1 : i32
    %9 = vector.broadcast %c1_i32 : i32 to vector<1x128xi32>
    %10 = arith.cmpi sge, %2, %9 : vector<1x128xi32>
    %c1_i32_6 = arith.constant 1 : i32
    %11 = tpu.dynamic_rotate %8 by %c1_i32_6 dim 1 : vector<32x128xf32>, i32 -> vector<32x128xf32>
    %c0_i32 = arith.constant 0 : i32
    %12 = arith.sitofp %c0_i32 : i32 to f32
    %13 = vector.shape_cast %10 : vector<1x128xi1> to vector<1x128xi1>
    %14 = vector.broadcast %13 : vector<1x128xi1> to vector<32x128xi1>
    %15 = vector.broadcast %12 : f32 to vector<32x128xf32>
    %16 = arith.select %14, %11, %15 : vector<32x128xi1>, vector<32x128xf32>
    %c127_i32 = arith.constant 127 : i32
    %17 = vector.broadcast %c127_i32 : i32 to vector<1x128xi32>
    %18 = arith.cmpi slt, %2, %17 : vector<1x128xi32>
    %c127_i32_7 = arith.constant 127 : i32
    %19 = tpu.dynamic_rotate %8 by %c127_i32_7 dim 1 : vector<32x128xf32>, i32 -> vector<32x128xf32>
    %c0_i32_8 = arith.constant 0 : i32
    %20 = arith.sitofp %c0_i32_8 : i32 to f32
    %21 = vector.shape_cast %18 : vector<1x128xi1> to vector<1x128xi1>
    %22 = vector.broadcast %21 : vector<1x128xi1> to vector<32x128xi1>
    %23 = vector.broadcast %20 : f32 to vector<32x128xf32>
    %24 = arith.select %22, %19, %23 : vector<32x128xi1>, vector<32x128xf32>
    %25 = tpu.concatenate %16, %8, %24 in 0 : vector<32x128xf32>, vector<32x128xf32>, vector<32x128xf32> -> vector<96x128xf32>
    %26 = arith.truncf %25 : vector<96x128xf32> to vector<96x128xbf16>
    %c0_9 = arith.constant 0 : index
    %c0_10 = arith.constant 0 : index
    %c0_11 = arith.constant 0 : index
    %27 = vector.load %arg4[%c0_9, %c0_10, %c0_11] : memref<3x32x96xbf16, #tpu.memory_space<vmem>>, vector<1x32x96xbf16>
    %28 = vector.shape_cast %27 : vector<1x32x96xbf16> to vector<32x96xbf16>
    %cst_12 = arith.constant dense<0.000000e+00> : vector<32x128xf32>
    %29 = tpu.matmul %28, %26, %cst_12 {dimension_numbers = #tpu.dot_dimension_numbers<[1], [0], [0], [1], [0, 0, 1, 1], [], []>} : vector<32x96xbf16>, vector<96x128xbf16>, vector<32x128xf32> -> vector<32x128xf32>
    %c0_13 = arith.constant 0 : index
    %c0_14 = arith.constant 0 : index
    %c0_15 = arith.constant 0 : index
    %30 = vector.load %arg5[%c0_13, %c0_14, %c0_15] : memref<3x32x1xf32, #tpu.memory_space<vmem>>, vector<1x32x1xf32>
    %31 = vector.shape_cast %30 : vector<1x32x1xf32> to vector<32x1xf32>
    %32 = vector.broadcast %31 : vector<32x1xf32> to vector<32x128xf32>
    %33 = arith.addf %29, %32 : vector<32x128xf32>
    %cst_16 = arith.constant 0.000000e+00 : f32
    %34 = vector.broadcast %cst_16 : f32 to vector<32x128xf32>
    %35 = arith.maximumf %33, %34 : vector<32x128xf32>
    %36 = arith.truncf %35 : vector<32x128xf32> to vector<32x128xbf16>
    %c0_17 = arith.constant 0 : index
    %c0_18 = arith.constant 0 : index
    %c0_19 = arith.constant 0 : index
    %37 = vector.load %arg6[%c0_17, %c0_18, %c0_19] : memref<3x32x32xbf16, #tpu.memory_space<vmem>>, vector<1x32x32xbf16>
    %38 = vector.shape_cast %37 : vector<1x32x32xbf16> to vector<32x32xbf16>
    %cst_20 = arith.constant dense<0.000000e+00> : vector<32x128xf32>
    %39 = tpu.matmul %38, %36, %cst_20 {dimension_numbers = #tpu.dot_dimension_numbers<[1], [0], [0], [1], [0, 0, 1, 1], [], []>} : vector<32x32xbf16>, vector<32x128xbf16>, vector<32x128xf32> -> vector<32x128xf32>
    %c0_21 = arith.constant 0 : index
    %c0_22 = arith.constant 0 : index
    %c0_23 = arith.constant 0 : index
    %40 = vector.load %arg7[%c0_21, %c0_22, %c0_23] : memref<3x32x1xf32, #tpu.memory_space<vmem>>, vector<1x32x1xf32>
    %41 = vector.shape_cast %40 : vector<1x32x1xf32> to vector<32x1xf32>
    %42 = vector.broadcast %41 : vector<32x1xf32> to vector<32x128xf32>
    %43 = arith.addf %39, %42 : vector<32x128xf32>
    %44 = arith.addf %8, %43 : vector<32x128xf32>
    %c2_i32 = arith.constant 2 : i32
    %45 = vector.broadcast %c2_i32 : i32 to vector<1x128xi32>
    %46 = arith.cmpi sge, %2, %45 : vector<1x128xi32>
    %c2_i32_24 = arith.constant 2 : i32
    %47 = tpu.dynamic_rotate %44 by %c2_i32_24 dim 1 : vector<32x128xf32>, i32 -> vector<32x128xf32>
    %c0_i32_25 = arith.constant 0 : i32
    %48 = arith.sitofp %c0_i32_25 : i32 to f32
    %49 = vector.shape_cast %46 : vector<1x128xi1> to vector<1x128xi1>
    %50 = vector.broadcast %49 : vector<1x128xi1> to vector<32x128xi1>
    %51 = vector.broadcast %48 : f32 to vector<32x128xf32>
    %52 = arith.select %50, %47, %51 : vector<32x128xi1>, vector<32x128xf32>
    %c126_i32 = arith.constant 126 : i32
    %53 = vector.broadcast %c126_i32 : i32 to vector<1x128xi32>
    %54 = arith.cmpi slt, %2, %53 : vector<1x128xi32>
    %c126_i32_26 = arith.constant 126 : i32
    %55 = tpu.dynamic_rotate %44 by %c126_i32_26 dim 1 : vector<32x128xf32>, i32 -> vector<32x128xf32>
    %c0_i32_27 = arith.constant 0 : i32
    %56 = arith.sitofp %c0_i32_27 : i32 to f32
    %57 = vector.shape_cast %54 : vector<1x128xi1> to vector<1x128xi1>
    %58 = vector.broadcast %57 : vector<1x128xi1> to vector<32x128xi1>
    %59 = vector.broadcast %56 : f32 to vector<32x128xf32>
    %60 = arith.select %58, %55, %59 : vector<32x128xi1>, vector<32x128xf32>
    %61 = tpu.concatenate %52, %44, %60 in 0 : vector<32x128xf32>, vector<32x128xf32>, vector<32x128xf32> -> vector<96x128xf32>
    %62 = arith.truncf %61 : vector<96x128xf32> to vector<96x128xbf16>
    %c1 = arith.constant 1 : index
    %c0_28 = arith.constant 0 : index
    %c0_29 = arith.constant 0 : index
    %63 = vector.load %arg4[%c1, %c0_28, %c0_29] : memref<3x32x96xbf16, #tpu.memory_space<vmem>>, vector<1x32x96xbf16>
    %64 = vector.shape_cast %63 : vector<1x32x96xbf16> to vector<32x96xbf16>
    %cst_30 = arith.constant dense<0.000000e+00> : vector<32x128xf32>
    %65 = tpu.matmul %64, %62, %cst_30 {dimension_numbers = #tpu.dot_dimension_numbers<[1], [0], [0], [1], [0, 0, 1, 1], [], []>} : vector<32x96xbf16>, vector<96x128xbf16>, vector<32x128xf32> -> vector<32x128xf32>
    %c1_31 = arith.constant 1 : index
    %c0_32 = arith.constant 0 : index
    %c0_33 = arith.constant 0 : index
    %66 = vector.load %arg5[%c1_31, %c0_32, %c0_33] : memref<3x32x1xf32, #tpu.memory_space<vmem>>, vector<1x32x1xf32>
    %67 = vector.shape_cast %66 : vector<1x32x1xf32> to vector<32x1xf32>
    %68 = vector.broadcast %67 : vector<32x1xf32> to vector<32x128xf32>
    %69 = arith.addf %65, %68 : vector<32x128xf32>
    %cst_34 = arith.constant 0.000000e+00 : f32
    %70 = vector.broadcast %cst_34 : f32 to vector<32x128xf32>
    %71 = arith.maximumf %69, %70 : vector<32x128xf32>
    %72 = arith.truncf %71 : vector<32x128xf32> to vector<32x128xbf16>
    %c1_35 = arith.constant 1 : index
    %c0_36 = arith.constant 0 : index
    %c0_37 = arith.constant 0 : index
    %73 = vector.load %arg6[%c1_35, %c0_36, %c0_37] : memref<3x32x32xbf16, #tpu.memory_space<vmem>>, vector<1x32x32xbf16>
    %74 = vector.shape_cast %73 : vector<1x32x32xbf16> to vector<32x32xbf16>
    %cst_38 = arith.constant dense<0.000000e+00> : vector<32x128xf32>
    %75 = tpu.matmul %74, %72, %cst_38 {dimension_numbers = #tpu.dot_dimension_numbers<[1], [0], [0], [1], [0, 0, 1, 1], [], []>} : vector<32x32xbf16>, vector<32x128xbf16>, vector<32x128xf32> -> vector<32x128xf32>
    %c1_39 = arith.constant 1 : index
    %c0_40 = arith.constant 0 : index
    %c0_41 = arith.constant 0 : index
    %76 = vector.load %arg7[%c1_39, %c0_40, %c0_41] : memref<3x32x1xf32, #tpu.memory_space<vmem>>, vector<1x32x1xf32>
    %77 = vector.shape_cast %76 : vector<1x32x1xf32> to vector<32x1xf32>
    %78 = vector.broadcast %77 : vector<32x1xf32> to vector<32x128xf32>
    %79 = arith.addf %75, %78 : vector<32x128xf32>
    %80 = arith.addf %44, %79 : vector<32x128xf32>
    %c4_i32 = arith.constant 4 : i32
    %81 = vector.broadcast %c4_i32 : i32 to vector<1x128xi32>
    %82 = arith.cmpi sge, %2, %81 : vector<1x128xi32>
    %c4_i32_42 = arith.constant 4 : i32
    %83 = tpu.dynamic_rotate %80 by %c4_i32_42 dim 1 : vector<32x128xf32>, i32 -> vector<32x128xf32>
    %c0_i32_43 = arith.constant 0 : i32
    %84 = arith.sitofp %c0_i32_43 : i32 to f32
    %85 = vector.shape_cast %82 : vector<1x128xi1> to vector<1x128xi1>
    %86 = vector.broadcast %85 : vector<1x128xi1> to vector<32x128xi1>
    %87 = vector.broadcast %84 : f32 to vector<32x128xf32>
    %88 = arith.select %86, %83, %87 : vector<32x128xi1>, vector<32x128xf32>
    %c124_i32 = arith.constant 124 : i32
    %89 = vector.broadcast %c124_i32 : i32 to vector<1x128xi32>
    %90 = arith.cmpi slt, %2, %89 : vector<1x128xi32>
    %c124_i32_44 = arith.constant 124 : i32
    %91 = tpu.dynamic_rotate %80 by %c124_i32_44 dim 1 : vector<32x128xf32>, i32 -> vector<32x128xf32>
    %c0_i32_45 = arith.constant 0 : i32
    %92 = arith.sitofp %c0_i32_45 : i32 to f32
    %93 = vector.shape_cast %90 : vector<1x128xi1> to vector<1x128xi1>
    %94 = vector.broadcast %93 : vector<1x128xi1> to vector<32x128xi1>
    %95 = vector.broadcast %92 : f32 to vector<32x128xf32>
    %96 = arith.select %94, %91, %95 : vector<32x128xi1>, vector<32x128xf32>
    %97 = tpu.concatenate %88, %80, %96 in 0 : vector<32x128xf32>, vector<32x128xf32>, vector<32x128xf32> -> vector<96x128xf32>
    %98 = arith.truncf %97 : vector<96x128xf32> to vector<96x128xbf16>
    %c2 = arith.constant 2 : index
    %c0_46 = arith.constant 0 : index
    %c0_47 = arith.constant 0 : index
    %99 = vector.load %arg4[%c2, %c0_46, %c0_47] : memref<3x32x96xbf16, #tpu.memory_space<vmem>>, vector<1x32x96xbf16>
    %100 = vector.shape_cast %99 : vector<1x32x96xbf16> to vector<32x96xbf16>
    %cst_48 = arith.constant dense<0.000000e+00> : vector<32x128xf32>
    %101 = tpu.matmul %100, %98, %cst_48 {dimension_numbers = #tpu.dot_dimension_numbers<[1], [0], [0], [1], [0, 0, 1, 1], [], []>} : vector<32x96xbf16>, vector<96x128xbf16>, vector<32x128xf32> -> vector<32x128xf32>
    %c2_49 = arith.constant 2 : index
    %c0_50 = arith.constant 0 : index
    %c0_51 = arith.constant 0 : index
    %102 = vector.load %arg5[%c2_49, %c0_50, %c0_51] : memref<3x32x1xf32, #tpu.memory_space<vmem>>, vector<1x32x1xf32>
    %103 = vector.shape_cast %102 : vector<1x32x1xf32> to vector<32x1xf32>
    %104 = vector.broadcast %103 : vector<32x1xf32> to vector<32x128xf32>
    %105 = arith.addf %101, %104 : vector<32x128xf32>
    %cst_52 = arith.constant 0.000000e+00 : f32
    %106 = vector.broadcast %cst_52 : f32 to vector<32x128xf32>
    %107 = arith.maximumf %105, %106 : vector<32x128xf32>
    %108 = arith.truncf %107 : vector<32x128xf32> to vector<32x128xbf16>
    %c2_53 = arith.constant 2 : index
    %c0_54 = arith.constant 0 : index
    %c0_55 = arith.constant 0 : index
    %109 = vector.load %arg6[%c2_53, %c0_54, %c0_55] : memref<3x32x32xbf16, #tpu.memory_space<vmem>>, vector<1x32x32xbf16>
    %110 = vector.shape_cast %109 : vector<1x32x32xbf16> to vector<32x32xbf16>
    %cst_56 = arith.constant dense<0.000000e+00> : vector<32x128xf32>
    %111 = tpu.matmul %110, %108, %cst_56 {dimension_numbers = #tpu.dot_dimension_numbers<[1], [0], [0], [1], [0, 0, 1, 1], [], []>} : vector<32x32xbf16>, vector<32x128xbf16>, vector<32x128xf32> -> vector<32x128xf32>
    %c2_57 = arith.constant 2 : index
    %c0_58 = arith.constant 0 : index
    %c0_59 = arith.constant 0 : index
    %112 = vector.load %arg7[%c2_57, %c0_58, %c0_59] : memref<3x32x1xf32, #tpu.memory_space<vmem>>, vector<1x32x1xf32>
    %113 = vector.shape_cast %112 : vector<1x32x1xf32> to vector<32x1xf32>
    %114 = vector.broadcast %113 : vector<32x1xf32> to vector<32x128xf32>
    %115 = arith.addf %111, %114 : vector<32x128xf32>
    %116 = arith.addf %80, %115 : vector<32x128xf32>
    %c0_60 = arith.constant 0 : index
    %c0_61 = arith.constant 0 : index
    %117 = vector.load %arg8[%c0_60, %c0_61] : memref<8x32xbf16, #tpu.memory_space<vmem>>, vector<8x32xbf16>
    %118 = arith.truncf %116 : vector<32x128xf32> to vector<32x128xbf16>
    %cst_62 = arith.constant dense<0.000000e+00> : vector<8x128xf32>
    %119 = tpu.matmul %117, %118, %cst_62 {dimension_numbers = #tpu.dot_dimension_numbers<[1], [0], [0], [1], [0, 0, 1, 1], [], []>} : vector<8x32xbf16>, vector<32x128xbf16>, vector<8x128xf32> -> vector<8x128xf32>
    %c0_63 = arith.constant 0 : index
    %c0_64 = arith.constant 0 : index
    %120 = vector.load %arg9[%c0_63, %c0_64] : memref<8x1xf32, #tpu.memory_space<vmem>>, vector<8x1xf32>
    %121 = vector.broadcast %120 : vector<8x1xf32> to vector<8x128xf32>
    %122 = arith.addf %119, %121 : vector<8x128xf32>
    %c0_65 = arith.constant 0 : index
    %c0_66 = arith.constant 0 : index
    %c0_67 = arith.constant 0 : index
    %c0_68 = arith.constant 0 : index
    %123 = vector.load %arg26[%c0_65, %c0_66, %c0_67, %c0_68] : memref<3x1x8x128xf32, #tpu.memory_space<vmem>>, vector<1x1x8x128xf32>
    %124 = vector.shape_cast %123 : vector<1x1x8x128xf32> to vector<8x128xf32>
    %125 = vector.shape_cast %122 : vector<8x128xf32> to vector<1x1x8x128xf32>
    tpu.vector_store %arg26[%c0_65, %c0_66, %c0_67, %c0_68], %125 {strides = array<i32>} : memref<3x1x8x128xf32, #tpu.memory_space<vmem>>, vector<1x1x8x128xf32>,
    %cst_69 = arith.constant dense<0xFF800000> : vector<128xf32>
    %126 = vector.multi_reduction <maximumf>, %122, %cst_69 [0] : vector<8x128xf32> to vector<128xf32>
    %127 = vector.shape_cast %126 : vector<128xf32> to vector<1x128xf32>
    %128 = vector.broadcast %127 : vector<1x128xf32> to vector<8x128xf32>
    %129 = arith.subf %122, %128 : vector<8x128xf32>
    %130 = math.exp %129 : vector<8x128xf32>
    %cst_70 = arith.constant dense<0.000000e+00> : vector<128xf32>
    %131 = vector.multi_reduction <add>, %130, %cst_70 [0] : vector<8x128xf32> to vector<128xf32>
    %132 = vector.shape_cast %131 : vector<128xf32> to vector<1x128xf32>
    %133 = tpu.reciprocal %132 {approx = true} : vector<1x128xf32> -> vector<1x128xf32>
    %134 = vector.broadcast %133 : vector<1x128xf32> to vector<8x128xf32>
    %135 = arith.mulf %130, %134 : vector<8x128xf32>
    %c0_71 = arith.constant 0 : index
    %c0_72 = arith.constant 0 : index
    %136 = vector.load %arg10[%c0_71, %c0_72] : memref<32x8xbf16, #tpu.memory_space<vmem>>, vector<32x8xbf16>
    %137 = arith.truncf %135 : vector<8x128xf32> to vector<8x128xbf16>
    %cst_73 = arith.constant dense<0.000000e+00> : vector<32x128xf32>
    %138 = tpu.matmul %136, %137, %cst_73 {dimension_numbers = #tpu.dot_dimension_numbers<[1], [0], [0], [1], [0, 0, 1, 1], [], []>} : vector<32x8xbf16>, vector<8x128xbf16>, vector<32x128xf32> -> vector<32x128xf32>
    %c0_74 = arith.constant 0 : index
    %c0_75 = arith.constant 0 : index
    %139 = vector.load %arg11[%c0_74, %c0_75] : memref<32x1xf32, #tpu.memory_space<vmem>>, vector<32x1xf32>
    %140 = vector.broadcast %139 : vector<32x1xf32> to vector<32x128xf32>
    %141 = arith.addf %138, %140 : vector<32x128xf32>
    %c1_i32_76 = arith.constant 1 : i32
    %142 = vector.broadcast %c1_i32_76 : i32 to vector<1x128xi32>
    %143 = arith.cmpi sge, %2, %142 : vector<1x128xi32>
    %c1_i32_77 = arith.constant 1 : i32
    %144 = tpu.dynamic_rotate %141 by %c1_i32_77 dim 1 : vector<32x128xf32>, i32 -> vector<32x128xf32>
    %c0_i32_78 = arith.constant 0 : i32
    %145 = arith.sitofp %c0_i32_78 : i32 to f32
    %146 = vector.shape_cast %143 : vector<1x128xi1> to vector<1x128xi1>
    %147 = vector.broadcast %146 : vector<1x128xi1> to vector<32x128xi1>
    %148 = vector.broadcast %145 : f32 to vector<32x128xf32>
    %149 = arith.select %147, %144, %148 : vector<32x128xi1>, vector<32x128xf32>
    %c127_i32_79 = arith.constant 127 : i32
    %150 = vector.broadcast %c127_i32_79 : i32 to vector<1x128xi32>
    %151 = arith.cmpi slt, %2, %150 : vector<1x128xi32>
    %c127_i32_80 = arith.constant 127 : i32
    %152 = tpu.dynamic_rotate %141 by %c127_i32_80 dim 1 : vector<32x128xf32>, i32 -> vector<32x128xf32>
    %c0_i32_81 = arith.constant 0 : i32
    %153 = arith.sitofp %c0_i32_81 : i32 to f32
    %154 = vector.shape_cast %151 : vector<1x128xi1> to vector<1x128xi1>
    %155 = vector.broadcast %154 : vector<1x128xi1> to vector<32x128xi1>
    %156 = vector.broadcast %153 : f32 to vector<32x128xf32>
    %157 = arith.select %155, %152, %156 : vector<32x128xi1>, vector<32x128xf32>
    %158 = tpu.concatenate %149, %141, %157 in 0 : vector<32x128xf32>, vector<32x128xf32>, vector<32x128xf32> -> vector<96x128xf32>
    %159 = arith.truncf %158 : vector<96x128xf32> to vector<96x128xbf16>
    %c0_82 = arith.constant 0 : index
    %c0_83 = arith.constant 0 : index
    %c0_84 = arith.constant 0 : index
    %160 = vector.load %arg12[%c0_82, %c0_83, %c0_84] : memref<3x32x96xbf16, #tpu.memory_space<vmem>>, vector<1x32x96xbf16>
    %161 = vector.shape_cast %160 : vector<1x32x96xbf16> to vector<32x96xbf16>
    %cst_85 = arith.constant dense<0.000000e+00> : vector<32x128xf32>
    %162 = tpu.matmul %161, %159, %cst_85 {dimension_numbers = #tpu.dot_dimension_numbers<[1], [0], [0], [1], [0, 0, 1, 1], [], []>} : vector<32x96xbf16>, vector<96x128xbf16>, vector<32x128xf32> -> vector<32x128xf32>
    %c0_86 = arith.constant 0 : index
    %c0_87 = arith.constant 0 : index
    %c0_88 = arith.constant 0 : index
    %163 = vector.load %arg13[%c0_86, %c0_87, %c0_88] : memref<3x32x1xf32, #tpu.memory_space<vmem>>, vector<1x32x1xf32>
    %164 = vector.shape_cast %163 : vector<1x32x1xf32> to vector<32x1xf32>
    %165 = vector.broadcast %164 : vector<32x1xf32> to vector<32x128xf32>
    %166 = arith.addf %162, %165 : vector<32x128xf32>
    %cst_89 = arith.constant 0.000000e+00 : f32
    %167 = vector.broadcast %cst_89 : f32 to vector<32x128xf32>
    %168 = arith.maximumf %166, %167 : vector<32x128xf32>
    %169 = arith.truncf %168 : vector<32x128xf32> to vector<32x128xbf16>
    %c0_90 = arith.constant 0 : index
    %c0_91 = arith.constant 0 : index
    %c0_92 = arith.constant 0 : index
    %170 = vector.load %arg14[%c0_90, %c0_91, %c0_92] : memref<3x32x32xbf16, #tpu.memory_space<vmem>>, vector<1x32x32xbf16>
    %171 = vector.shape_cast %170 : vector<1x32x32xbf16> to vector<32x32xbf16>
    %cst_93 = arith.constant dense<0.000000e+00> : vector<32x128xf32>
    %172 = tpu.matmul %171, %169, %cst_93 {dimension_numbers = #tpu.dot_dimension_numbers<[1], [0], [0], [1], [0, 0, 1, 1], [], []>} : vector<32x32xbf16>, vector<32x128xbf16>, vector<32x128xf32> -> vector<32x128xf32>
    %c0_94 = arith.constant 0 : index
    %c0_95 = arith.constant 0 : index
    %c0_96 = arith.constant 0 : index
    %173 = vector.load %arg15[%c0_94, %c0_95, %c0_96] : memref<3x32x1xf32, #tpu.memory_space<vmem>>, vector<1x32x1xf32>
    %174 = vector.shape_cast %173 : vector<1x32x1xf32> to vector<32x1xf32>
    %175 = vector.broadcast %174 : vector<32x1xf32> to vector<32x128xf32>
    %176 = arith.addf %172, %175 : vector<32x128xf32>
    %177 = arith.addf %141, %176 : vector<32x128xf32>
    %c2_i32_97 = arith.constant 2 : i32
    %178 = vector.broadcast %c2_i32_97 : i32 to vector<1x128xi32>
    %179 = arith.cmpi sge, %2, %178 : vector<1x128xi32>
    %c2_i32_98 = arith.constant 2 : i32
    %180 = tpu.dynamic_rotate %177 by %c2_i32_98 dim 1 : vector<32x128xf32>, i32 -> vector<32x128xf32>
    %c0_i32_99 = arith.constant 0 : i32
    %181 = arith.sitofp %c0_i32_99 : i32 to f32
    %182 = vector.shape_cast %179 : vector<1x128xi1> to vector<1x128xi1>
    %183 = vector.broadcast %182 : vector<1x128xi1> to vector<32x128xi1>
    %184 = vector.broadcast %181 : f32 to vector<32x128xf32>
    %185 = arith.select %183, %180, %184 : vector<32x128xi1>, vector<32x128xf32>
    %c126_i32_100 = arith.constant 126 : i32
    %186 = vector.broadcast %c126_i32_100 : i32 to vector<1x128xi32>
    %187 = arith.cmpi slt, %2, %186 : vector<1x128xi32>
    %c126_i32_101 = arith.constant 126 : i32
    %188 = tpu.dynamic_rotate %177 by %c126_i32_101 dim 1 : vector<32x128xf32>, i32 -> vector<32x128xf32>
    %c0_i32_102 = arith.constant 0 : i32
    %189 = arith.sitofp %c0_i32_102 : i32 to f32
    %190 = vector.shape_cast %187 : vector<1x128xi1> to vector<1x128xi1>
    %191 = vector.broadcast %190 : vector<1x128xi1> to vector<32x128xi1>
    %192 = vector.broadcast %189 : f32 to vector<32x128xf32>
    %193 = arith.select %191, %188, %192 : vector<32x128xi1>, vector<32x128xf32>
    %194 = tpu.concatenate %185, %177, %193 in 0 : vector<32x128xf32>, vector<32x128xf32>, vector<32x128xf32> -> vector<96x128xf32>
    %195 = arith.truncf %194 : vector<96x128xf32> to vector<96x128xbf16>
    %c1_103 = arith.constant 1 : index
    %c0_104 = arith.constant 0 : index
    %c0_105 = arith.constant 0 : index
    %196 = vector.load %arg12[%c1_103, %c0_104, %c0_105] : memref<3x32x96xbf16, #tpu.memory_space<vmem>>, vector<1x32x96xbf16>
    %197 = vector.shape_cast %196 : vector<1x32x96xbf16> to vector<32x96xbf16>
    %cst_106 = arith.constant dense<0.000000e+00> : vector<32x128xf32>
    %198 = tpu.matmul %197, %195, %cst_106 {dimension_numbers = #tpu.dot_dimension_numbers<[1], [0], [0], [1], [0, 0, 1, 1], [], []>} : vector<32x96xbf16>, vector<96x128xbf16>, vector<32x128xf32> -> vector<32x128xf32>
    %c1_107 = arith.constant 1 : index
    %c0_108 = arith.constant 0 : index
    %c0_109 = arith.constant 0 : index
    %199 = vector.load %arg13[%c1_107, %c0_108, %c0_109] : memref<3x32x1xf32, #tpu.memory_space<vmem>>, vector<1x32x1xf32>
    %200 = vector.shape_cast %199 : vector<1x32x1xf32> to vector<32x1xf32>
    %201 = vector.broadcast %200 : vector<32x1xf32> to vector<32x128xf32>
    %202 = arith.addf %198, %201 : vector<32x128xf32>
    %cst_110 = arith.constant 0.000000e+00 : f32
    %203 = vector.broadcast %cst_110 : f32 to vector<32x128xf32>
    %204 = arith.maximumf %202, %203 : vector<32x128xf32>
    %205 = arith.truncf %204 : vector<32x128xf32> to vector<32x128xbf16>
    %c1_111 = arith.constant 1 : index
    %c0_112 = arith.constant 0 : index
    %c0_113 = arith.constant 0 : index
    %206 = vector.load %arg14[%c1_111, %c0_112, %c0_113] : memref<3x32x32xbf16, #tpu.memory_space<vmem>>, vector<1x32x32xbf16>
    %207 = vector.shape_cast %206 : vector<1x32x32xbf16> to vector<32x32xbf16>
    %cst_114 = arith.constant dense<0.000000e+00> : vector<32x128xf32>
    %208 = tpu.matmul %207, %205, %cst_114 {dimension_numbers = #tpu.dot_dimension_numbers<[1], [0], [0], [1], [0, 0, 1, 1], [], []>} : vector<32x32xbf16>, vector<32x128xbf16>, vector<32x128xf32> -> vector<32x128xf32>
    %c1_115 = arith.constant 1 : index
    %c0_116 = arith.constant 0 : index
    %c0_117 = arith.constant 0 : index
    %209 = vector.load %arg15[%c1_115, %c0_116, %c0_117] : memref<3x32x1xf32, #tpu.memory_space<vmem>>, vector<1x32x1xf32>
    %210 = vector.shape_cast %209 : vector<1x32x1xf32> to vector<32x1xf32>
    %211 = vector.broadcast %210 : vector<32x1xf32> to vector<32x128xf32>
    %212 = arith.addf %208, %211 : vector<32x128xf32>
    %213 = arith.addf %177, %212 : vector<32x128xf32>
    %c4_i32_118 = arith.constant 4 : i32
    %214 = vector.broadcast %c4_i32_118 : i32 to vector<1x128xi32>
    %215 = arith.cmpi sge, %2, %214 : vector<1x128xi32>
    %c4_i32_119 = arith.constant 4 : i32
    %216 = tpu.dynamic_rotate %213 by %c4_i32_119 dim 1 : vector<32x128xf32>, i32 -> vector<32x128xf32>
    %c0_i32_120 = arith.constant 0 : i32
    %217 = arith.sitofp %c0_i32_120 : i32 to f32
    %218 = vector.shape_cast %215 : vector<1x128xi1> to vector<1x128xi1>
    %219 = vector.broadcast %218 : vector<1x128xi1> to vector<32x128xi1>
    %220 = vector.broadcast %217 : f32 to vector<32x128xf32>
    %221 = arith.select %219, %216, %220 : vector<32x128xi1>, vector<32x128xf32>
    %c124_i32_121 = arith.constant 124 : i32
    %222 = vector.broadcast %c124_i32_121 : i32 to vector<1x128xi32>
    %223 = arith.cmpi slt, %2, %222 : vector<1x128xi32>
    %c124_i32_122 = arith.constant 124 : i32
    %224 = tpu.dynamic_rotate %213 by %c124_i32_122 dim 1 : vector<32x128xf32>, i32 -> vector<32x128xf32>
    %c0_i32_123 = arith.constant 0 : i32
    %225 = arith.sitofp %c0_i32_123 : i32 to f32
    %226 = vector.shape_cast %223 : vector<1x128xi1> to vector<1x128xi1>
    %227 = vector.broadcast %226 : vector<1x128xi1> to vector<32x128xi1>
    %228 = vector.broadcast %225 : f32 to vector<32x128xf32>
    %229 = arith.select %227, %224, %228 : vector<32x128xi1>, vector<32x128xf32>
    %230 = tpu.concatenate %221, %213, %229 in 0 : vector<32x128xf32>, vector<32x128xf32>, vector<32x128xf32> -> vector<96x128xf32>
    %231 = arith.truncf %230 : vector<96x128xf32> to vector<96x128xbf16>
    %c2_124 = arith.constant 2 : index
    %c0_125 = arith.constant 0 : index
    %c0_126 = arith.constant 0 : index
    %232 = vector.load %arg12[%c2_124, %c0_125, %c0_126] : memref<3x32x96xbf16, #tpu.memory_space<vmem>>, vector<1x32x96xbf16>
    %233 = vector.shape_cast %232 : vector<1x32x96xbf16> to vector<32x96xbf16>
    %cst_127 = arith.constant dense<0.000000e+00> : vector<32x128xf32>
    %234 = tpu.matmul %233, %231, %cst_127 {dimension_numbers = #tpu.dot_dimension_numbers<[1], [0], [0], [1], [0, 0, 1, 1], [], []>} : vector<32x96xbf16>, vector<96x128xbf16>, vector<32x128xf32> -> vector<32x128xf32>
    %c2_128 = arith.constant 2 : index
    %c0_129 = arith.constant 0 : index
    %c0_130 = arith.constant 0 : index
    %235 = vector.load %arg13[%c2_128, %c0_129, %c0_130] : memref<3x32x1xf32, #tpu.memory_space<vmem>>, vector<1x32x1xf32>
    %236 = vector.shape_cast %235 : vector<1x32x1xf32> to vector<32x1xf32>
    %237 = vector.broadcast %236 : vector<32x1xf32> to vector<32x128xf32>
    %238 = arith.addf %234, %237 : vector<32x128xf32>
    %cst_131 = arith.constant 0.000000e+00 : f32
    %239 = vector.broadcast %cst_131 : f32 to vector<32x128xf32>
    %240 = arith.maximumf %238, %239 : vector<32x128xf32>
    %241 = arith.truncf %240 : vector<32x128xf32> to vector<32x128xbf16>
    %c2_132 = arith.constant 2 : index
    %c0_133 = arith.constant 0 : index
    %c0_134 = arith.constant 0 : index
    %242 = vector.load %arg14[%c2_132, %c0_133, %c0_134] : memref<3x32x32xbf16, #tpu.memory_space<vmem>>, vector<1x32x32xbf16>
    %243 = vector.shape_cast %242 : vector<1x32x32xbf16> to vector<32x32xbf16>
    %cst_135 = arith.constant dense<0.000000e+00> : vector<32x128xf32>
    %244 = tpu.matmul %243, %241, %cst_135 {dimension_numbers = #tpu.dot_dimension_numbers<[1], [0], [0], [1], [0, 0, 1, 1], [], []>} : vector<32x32xbf16>, vector<32x128xbf16>, vector<32x128xf32> -> vector<32x128xf32>
    %c2_136 = arith.constant 2 : index
    %c0_137 = arith.constant 0 : index
    %c0_138 = arith.constant 0 : index
    %245 = vector.load %arg15[%c2_136, %c0_137, %c0_138] : memref<3x32x1xf32, #tpu.memory_space<vmem>>, vector<1x32x1xf32>
    %246 = vector.shape_cast %245 : vector<1x32x1xf32> to vector<32x1xf32>
    %247 = vector.broadcast %246 : vector<32x1xf32> to vector<32x128xf32>
    %248 = arith.addf %244, %247 : vector<32x128xf32>
    %249 = arith.addf %213, %248 : vector<32x128xf32>
    %c0_139 = arith.constant 0 : index
    %c0_140 = arith.constant 0 : index
    %250 = vector.load %arg16[%c0_139, %c0_140] : memref<8x32xbf16, #tpu.memory_space<vmem>>, vector<8x32xbf16>
    %251 = arith.truncf %249 : vector<32x128xf32> to vector<32x128xbf16>
    %cst_141 = arith.constant dense<0.000000e+00> : vector<8x128xf32>
    %252 = tpu.matmul %250, %251, %cst_141 {dimension_numbers = #tpu.dot_dimension_numbers<[1], [0], [0], [1], [0, 0, 1, 1], [], []>} : vector<8x32xbf16>, vector<32x128xbf16>, vector<8x128xf32> -> vector<8x128xf32>
    %c0_142 = arith.constant 0 : index
    %c0_143 = arith.constant 0 : index
    %253 = vector.load %arg17[%c0_142, %c0_143] : memref<8x1xf32, #tpu.memory_space<vmem>>, vector<8x1xf32>
    %254 = vector.broadcast %253 : vector<8x1xf32> to vector<8x128xf32>
    %255 = arith.addf %252, %254 : vector<8x128xf32>
    %c1_144 = arith.constant 1 : index
    %c0_145 = arith.constant 0 : index
    %c0_146 = arith.constant 0 : index
    %c0_147 = arith.constant 0 : index
    %256 = vector.load %arg26[%c1_144, %c0_145, %c0_146, %c0_147] : memref<3x1x8x128xf32, #tpu.memory_space<vmem>>, vector<1x1x8x128xf32>
    %257 = vector.shape_cast %256 : vector<1x1x8x128xf32> to vector<8x128xf32>
    %258 = vector.shape_cast %255 : vector<8x128xf32> to vector<1x1x8x128xf32>
    tpu.vector_store %arg26[%c1_144, %c0_145, %c0_146, %c0_147], %258 {strides = array<i32>} : memref<3x1x8x128xf32, #tpu.memory_space<vmem>>, vector<1x1x8x128xf32>,
    %cst_148 = arith.constant dense<0xFF800000> : vector<128xf32>
    %259 = vector.multi_reduction <maximumf>, %255, %cst_148 [0] : vector<8x128xf32> to vector<128xf32>
    %260 = vector.shape_cast %259 : vector<128xf32> to vector<1x128xf32>
    %261 = vector.broadcast %260 : vector<1x128xf32> to vector<8x128xf32>
    %262 = arith.subf %255, %261 : vector<8x128xf32>
    %263 = math.exp %262 : vector<8x128xf32>
    %cst_149 = arith.constant dense<0.000000e+00> : vector<128xf32>
    %264 = vector.multi_reduction <add>, %263, %cst_149 [0] : vector<8x128xf32> to vector<128xf32>
    %265 = vector.shape_cast %264 : vector<128xf32> to vector<1x128xf32>
    %266 = tpu.reciprocal %265 {approx = true} : vector<1x128xf32> -> vector<1x128xf32>
    %267 = vector.broadcast %266 : vector<1x128xf32> to vector<8x128xf32>
    %268 = arith.mulf %263, %267 : vector<8x128xf32>
    %c0_150 = arith.constant 0 : index
    %c0_151 = arith.constant 0 : index
    %269 = vector.load %arg18[%c0_150, %c0_151] : memref<32x8xbf16, #tpu.memory_space<vmem>>, vector<32x8xbf16>
    %270 = arith.truncf %268 : vector<8x128xf32> to vector<8x128xbf16>
    %cst_152 = arith.constant dense<0.000000e+00> : vector<32x128xf32>
    %271 = tpu.matmul %269, %270, %cst_152 {dimension_numbers = #tpu.dot_dimension_numbers<[1], [0], [0], [1], [0, 0, 1, 1], [], []>} : vector<32x8xbf16>, vector<8x128xbf16>, vector<32x128xf32> -> vector<32x128xf32>
    %c0_153 = arith.constant 0 : index
    %c0_154 = arith.constant 0 : index
    %272 = vector.load %arg19[%c0_153, %c0_154] : memref<32x1xf32, #tpu.memory_space<vmem>>, vector<32x1xf32>
    %273 = vector.broadcast %272 : vector<32x1xf32> to vector<32x128xf32>
    %274 = arith.addf %271, %273 : vector<32x128xf32>
    %c1_i32_155 = arith.constant 1 : i32
    %275 = vector.broadcast %c1_i32_155 : i32 to vector<1x128xi32>
    %276 = arith.cmpi sge, %2, %275 : vector<1x128xi32>
    %c1_i32_156 = arith.constant 1 : i32
    %277 = tpu.dynamic_rotate %274 by %c1_i32_156 dim 1 : vector<32x128xf32>, i32 -> vector<32x128xf32>
    %c0_i32_157 = arith.constant 0 : i32
    %278 = arith.sitofp %c0_i32_157 : i32 to f32
    %279 = vector.shape_cast %276 : vector<1x128xi1> to vector<1x128xi1>
    %280 = vector.broadcast %279 : vector<1x128xi1> to vector<32x128xi1>
    %281 = vector.broadcast %278 : f32 to vector<32x128xf32>
    %282 = arith.select %280, %277, %281 : vector<32x128xi1>, vector<32x128xf32>
    %c127_i32_158 = arith.constant 127 : i32
    %283 = vector.broadcast %c127_i32_158 : i32 to vector<1x128xi32>
    %284 = arith.cmpi slt, %2, %283 : vector<1x128xi32>
    %c127_i32_159 = arith.constant 127 : i32
    %285 = tpu.dynamic_rotate %274 by %c127_i32_159 dim 1 : vector<32x128xf32>, i32 -> vector<32x128xf32>
    %c0_i32_160 = arith.constant 0 : i32
    %286 = arith.sitofp %c0_i32_160 : i32 to f32
    %287 = vector.shape_cast %284 : vector<1x128xi1> to vector<1x128xi1>
    %288 = vector.broadcast %287 : vector<1x128xi1> to vector<32x128xi1>
    %289 = vector.broadcast %286 : f32 to vector<32x128xf32>
    %290 = arith.select %288, %285, %289 : vector<32x128xi1>, vector<32x128xf32>
    %291 = tpu.concatenate %282, %274, %290 in 0 : vector<32x128xf32>, vector<32x128xf32>, vector<32x128xf32> -> vector<96x128xf32>
    %292 = arith.truncf %291 : vector<96x128xf32> to vector<96x128xbf16>
    %c0_161 = arith.constant 0 : index
    %c0_162 = arith.constant 0 : index
    %c0_163 = arith.constant 0 : index
    %293 = vector.load %arg20[%c0_161, %c0_162, %c0_163] : memref<3x32x96xbf16, #tpu.memory_space<vmem>>, vector<1x32x96xbf16>
    %294 = vector.shape_cast %293 : vector<1x32x96xbf16> to vector<32x96xbf16>
    %cst_164 = arith.constant dense<0.000000e+00> : vector<32x128xf32>
    %295 = tpu.matmul %294, %292, %cst_164 {dimension_numbers = #tpu.dot_dimension_numbers<[1], [0], [0], [1], [0, 0, 1, 1], [], []>} : vector<32x96xbf16>, vector<96x128xbf16>, vector<32x128xf32> -> vector<32x128xf32>
    %c0_165 = arith.constant 0 : index
    %c0_166 = arith.constant 0 : index
    %c0_167 = arith.constant 0 : index
    %296 = vector.load %arg21[%c0_165, %c0_166, %c0_167] : memref<3x32x1xf32, #tpu.memory_space<vmem>>, vector<1x32x1xf32>
    %297 = vector.shape_cast %296 : vector<1x32x1xf32> to vector<32x1xf32>
    %298 = vector.broadcast %297 : vector<32x1xf32> to vector<32x128xf32>
    %299 = arith.addf %295, %298 : vector<32x128xf32>
    %cst_168 = arith.constant 0.000000e+00 : f32
    %300 = vector.broadcast %cst_168 : f32 to vector<32x128xf32>
    %301 = arith.maximumf %299, %300 : vector<32x128xf32>
    %302 = arith.truncf %301 : vector<32x128xf32> to vector<32x128xbf16>
    %c0_169 = arith.constant 0 : index
    %c0_170 = arith.constant 0 : index
    %c0_171 = arith.constant 0 : index
    %303 = vector.load %arg22[%c0_169, %c0_170, %c0_171] : memref<3x32x32xbf16, #tpu.memory_space<vmem>>, vector<1x32x32xbf16>
    %304 = vector.shape_cast %303 : vector<1x32x32xbf16> to vector<32x32xbf16>
    %cst_172 = arith.constant dense<0.000000e+00> : vector<32x128xf32>
    %305 = tpu.matmul %304, %302, %cst_172 {dimension_numbers = #tpu.dot_dimension_numbers<[1], [0], [0], [1], [0, 0, 1, 1], [], []>} : vector<32x32xbf16>, vector<32x128xbf16>, vector<32x128xf32> -> vector<32x128xf32>
    %c0_173 = arith.constant 0 : index
    %c0_174 = arith.constant 0 : index
    %c0_175 = arith.constant 0 : index
    %306 = vector.load %arg23[%c0_173, %c0_174, %c0_175] : memref<3x32x1xf32, #tpu.memory_space<vmem>>, vector<1x32x1xf32>
    %307 = vector.shape_cast %306 : vector<1x32x1xf32> to vector<32x1xf32>
    %308 = vector.broadcast %307 : vector<32x1xf32> to vector<32x128xf32>
    %309 = arith.addf %305, %308 : vector<32x128xf32>
    %310 = arith.addf %274, %309 : vector<32x128xf32>
    %c2_i32_176 = arith.constant 2 : i32
    %311 = vector.broadcast %c2_i32_176 : i32 to vector<1x128xi32>
    %312 = arith.cmpi sge, %2, %311 : vector<1x128xi32>
    %c2_i32_177 = arith.constant 2 : i32
    %313 = tpu.dynamic_rotate %310 by %c2_i32_177 dim 1 : vector<32x128xf32>, i32 -> vector<32x128xf32>
    %c0_i32_178 = arith.constant 0 : i32
    %314 = arith.sitofp %c0_i32_178 : i32 to f32
    %315 = vector.shape_cast %312 : vector<1x128xi1> to vector<1x128xi1>
    %316 = vector.broadcast %315 : vector<1x128xi1> to vector<32x128xi1>
    %317 = vector.broadcast %314 : f32 to vector<32x128xf32>
    %318 = arith.select %316, %313, %317 : vector<32x128xi1>, vector<32x128xf32>
    %c126_i32_179 = arith.constant 126 : i32
    %319 = vector.broadcast %c126_i32_179 : i32 to vector<1x128xi32>
    %320 = arith.cmpi slt, %2, %319 : vector<1x128xi32>
    %c126_i32_180 = arith.constant 126 : i32
    %321 = tpu.dynamic_rotate %310 by %c126_i32_180 dim 1 : vector<32x128xf32>, i32 -> vector<32x128xf32>
    %c0_i32_181 = arith.constant 0 : i32
    %322 = arith.sitofp %c0_i32_181 : i32 to f32
    %323 = vector.shape_cast %320 : vector<1x128xi1> to vector<1x128xi1>
    %324 = vector.broadcast %323 : vector<1x128xi1> to vector<32x128xi1>
    %325 = vector.broadcast %322 : f32 to vector<32x128xf32>
    %326 = arith.select %324, %321, %325 : vector<32x128xi1>, vector<32x128xf32>
    %327 = tpu.concatenate %318, %310, %326 in 0 : vector<32x128xf32>, vector<32x128xf32>, vector<32x128xf32> -> vector<96x128xf32>
    %328 = arith.truncf %327 : vector<96x128xf32> to vector<96x128xbf16>
    %c1_182 = arith.constant 1 : index
    %c0_183 = arith.constant 0 : index
    %c0_184 = arith.constant 0 : index
    %329 = vector.load %arg20[%c1_182, %c0_183, %c0_184] : memref<3x32x96xbf16, #tpu.memory_space<vmem>>, vector<1x32x96xbf16>
    %330 = vector.shape_cast %329 : vector<1x32x96xbf16> to vector<32x96xbf16>
    %cst_185 = arith.constant dense<0.000000e+00> : vector<32x128xf32>
    %331 = tpu.matmul %330, %328, %cst_185 {dimension_numbers = #tpu.dot_dimension_numbers<[1], [0], [0], [1], [0, 0, 1, 1], [], []>} : vector<32x96xbf16>, vector<96x128xbf16>, vector<32x128xf32> -> vector<32x128xf32>
    %c1_186 = arith.constant 1 : index
    %c0_187 = arith.constant 0 : index
    %c0_188 = arith.constant 0 : index
    %332 = vector.load %arg21[%c1_186, %c0_187, %c0_188] : memref<3x32x1xf32, #tpu.memory_space<vmem>>, vector<1x32x1xf32>
    %333 = vector.shape_cast %332 : vector<1x32x1xf32> to vector<32x1xf32>
    %334 = vector.broadcast %333 : vector<32x1xf32> to vector<32x128xf32>
    %335 = arith.addf %331, %334 : vector<32x128xf32>
    %cst_189 = arith.constant 0.000000e+00 : f32
    %336 = vector.broadcast %cst_189 : f32 to vector<32x128xf32>
    %337 = arith.maximumf %335, %336 : vector<32x128xf32>
    %338 = arith.truncf %337 : vector<32x128xf32> to vector<32x128xbf16>
    %c1_190 = arith.constant 1 : index
    %c0_191 = arith.constant 0 : index
    %c0_192 = arith.constant 0 : index
    %339 = vector.load %arg22[%c1_190, %c0_191, %c0_192] : memref<3x32x32xbf16, #tpu.memory_space<vmem>>, vector<1x32x32xbf16>
    %340 = vector.shape_cast %339 : vector<1x32x32xbf16> to vector<32x32xbf16>
    %cst_193 = arith.constant dense<0.000000e+00> : vector<32x128xf32>
    %341 = tpu.matmul %340, %338, %cst_193 {dimension_numbers = #tpu.dot_dimension_numbers<[1], [0], [0], [1], [0, 0, 1, 1], [], []>} : vector<32x32xbf16>, vector<32x128xbf16>, vector<32x128xf32> -> vector<32x128xf32>
    %c1_194 = arith.constant 1 : index
    %c0_195 = arith.constant 0 : index
    %c0_196 = arith.constant 0 : index
    %342 = vector.load %arg23[%c1_194, %c0_195, %c0_196] : memref<3x32x1xf32, #tpu.memory_space<vmem>>, vector<1x32x1xf32>
    %343 = vector.shape_cast %342 : vector<1x32x1xf32> to vector<32x1xf32>
    %344 = vector.broadcast %343 : vector<32x1xf32> to vector<32x128xf32>
    %345 = arith.addf %341, %344 : vector<32x128xf32>
    %346 = arith.addf %310, %345 : vector<32x128xf32>
    %c4_i32_197 = arith.constant 4 : i32
    %347 = vector.broadcast %c4_i32_197 : i32 to vector<1x128xi32>
    %348 = arith.cmpi sge, %2, %347 : vector<1x128xi32>
    %c4_i32_198 = arith.constant 4 : i32
    %349 = tpu.dynamic_rotate %346 by %c4_i32_198 dim 1 : vector<32x128xf32>, i32 -> vector<32x128xf32>
    %c0_i32_199 = arith.constant 0 : i32
    %350 = arith.sitofp %c0_i32_199 : i32 to f32
    %351 = vector.shape_cast %348 : vector<1x128xi1> to vector<1x128xi1>
    %352 = vector.broadcast %351 : vector<1x128xi1> to vector<32x128xi1>
    %353 = vector.broadcast %350 : f32 to vector<32x128xf32>
    %354 = arith.select %352, %349, %353 : vector<32x128xi1>, vector<32x128xf32>
    %c124_i32_200 = arith.constant 124 : i32
    %355 = vector.broadcast %c124_i32_200 : i32 to vector<1x128xi32>
    %356 = arith.cmpi slt, %2, %355 : vector<1x128xi32>
    %c124_i32_201 = arith.constant 124 : i32
    %357 = tpu.dynamic_rotate %346 by %c124_i32_201 dim 1 : vector<32x128xf32>, i32 -> vector<32x128xf32>
    %c0_i32_202 = arith.constant 0 : i32
    %358 = arith.sitofp %c0_i32_202 : i32 to f32
    %359 = vector.shape_cast %356 : vector<1x128xi1> to vector<1x128xi1>
    %360 = vector.broadcast %359 : vector<1x128xi1> to vector<32x128xi1>
    %361 = vector.broadcast %358 : f32 to vector<32x128xf32>
    %362 = arith.select %360, %357, %361 : vector<32x128xi1>, vector<32x128xf32>
    %363 = tpu.concatenate %354, %346, %362 in 0 : vector<32x128xf32>, vector<32x128xf32>, vector<32x128xf32> -> vector<96x128xf32>
    %364 = arith.truncf %363 : vector<96x128xf32> to vector<96x128xbf16>
    %c2_203 = arith.constant 2 : index
    %c0_204 = arith.constant 0 : index
    %c0_205 = arith.constant 0 : index
    %365 = vector.load %arg20[%c2_203, %c0_204, %c0_205] : memref<3x32x96xbf16, #tpu.memory_space<vmem>>, vector<1x32x96xbf16>
    %366 = vector.shape_cast %365 : vector<1x32x96xbf16> to vector<32x96xbf16>
    %cst_206 = arith.constant dense<0.000000e+00> : vector<32x128xf32>
    %367 = tpu.matmul %366, %364, %cst_206 {dimension_numbers = #tpu.dot_dimension_numbers<[1], [0], [0], [1], [0, 0, 1, 1], [], []>} : vector<32x96xbf16>, vector<96x128xbf16>, vector<32x128xf32> -> vector<32x128xf32>
    %c2_207 = arith.constant 2 : index
    %c0_208 = arith.constant 0 : index
    %c0_209 = arith.constant 0 : index
    %368 = vector.load %arg21[%c2_207, %c0_208, %c0_209] : memref<3x32x1xf32, #tpu.memory_space<vmem>>, vector<1x32x1xf32>
    %369 = vector.shape_cast %368 : vector<1x32x1xf32> to vector<32x1xf32>
    %370 = vector.broadcast %369 : vector<32x1xf32> to vector<32x128xf32>
    %371 = arith.addf %367, %370 : vector<32x128xf32>
    %cst_210 = arith.constant 0.000000e+00 : f32
    %372 = vector.broadcast %cst_210 : f32 to vector<32x128xf32>
    %373 = arith.maximumf %371, %372 : vector<32x128xf32>
    %374 = arith.truncf %373 : vector<32x128xf32> to vector<32x128xbf16>
    %c2_211 = arith.constant 2 : index
    %c0_212 = arith.constant 0 : index
    %c0_213 = arith.constant 0 : index
    %375 = vector.load %arg22[%c2_211, %c0_212, %c0_213] : memref<3x32x32xbf16, #tpu.memory_space<vmem>>, vector<1x32x32xbf16>
    %376 = vector.shape_cast %375 : vector<1x32x32xbf16> to vector<32x32xbf16>
    %cst_214 = arith.constant dense<0.000000e+00> : vector<32x128xf32>
    %377 = tpu.matmul %376, %374, %cst_214 {dimension_numbers = #tpu.dot_dimension_numbers<[1], [0], [0], [1], [0, 0, 1, 1], [], []>} : vector<32x32xbf16>, vector<32x128xbf16>, vector<32x128xf32> -> vector<32x128xf32>
    %c2_215 = arith.constant 2 : index
    %c0_216 = arith.constant 0 : index
    %c0_217 = arith.constant 0 : index
    %378 = vector.load %arg23[%c2_215, %c0_216, %c0_217] : memref<3x32x1xf32, #tpu.memory_space<vmem>>, vector<1x32x1xf32>
    %379 = vector.shape_cast %378 : vector<1x32x1xf32> to vector<32x1xf32>
    %380 = vector.broadcast %379 : vector<32x1xf32> to vector<32x128xf32>
    %381 = arith.addf %377, %380 : vector<32x128xf32>
    %382 = arith.addf %346, %381 : vector<32x128xf32>
    %c0_218 = arith.constant 0 : index
    %c0_219 = arith.constant 0 : index
    %383 = vector.load %arg24[%c0_218, %c0_219] : memref<8x32xbf16, #tpu.memory_space<vmem>>, vector<8x32xbf16>
    %384 = arith.truncf %382 : vector<32x128xf32> to vector<32x128xbf16>
    %cst_220 = arith.constant dense<0.000000e+00> : vector<8x128xf32>
    %385 = tpu.matmul %383, %384, %cst_220 {dimension_numbers = #tpu.dot_dimension_numbers<[1], [0], [0], [1], [0, 0, 1, 1], [], []>} : vector<8x32xbf16>, vector<32x128xbf16>, vector<8x128xf32> -> vector<8x128xf32>
    %c0_221 = arith.constant 0 : index
    %c0_222 = arith.constant 0 : index
    %386 = vector.load %arg25[%c0_221, %c0_222] : memref<8x1xf32, #tpu.memory_space<vmem>>, vector<8x1xf32>
    %387 = vector.broadcast %386 : vector<8x1xf32> to vector<8x128xf32>
    %388 = arith.addf %385, %387 : vector<8x128xf32>
    %c2_223 = arith.constant 2 : index
    %c0_224 = arith.constant 0 : index
    %c0_225 = arith.constant 0 : index
    %c0_226 = arith.constant 0 : index
    %389 = vector.load %arg26[%c2_223, %c0_224, %c0_225, %c0_226] : memref<3x1x8x128xf32, #tpu.memory_space<vmem>>, vector<1x1x8x128xf32>
    %390 = vector.shape_cast %389 : vector<1x1x8x128xf32> to vector<8x128xf32>
    %391 = vector.shape_cast %388 : vector<8x128xf32> to vector<1x1x8x128xf32>
    tpu.vector_store %arg26[%c2_223, %c0_224, %c0_225, %c0_226], %391 {strides = array<i32>} : memref<3x1x8x128xf32, #tpu.memory_space<vmem>>, vector<1x1x8x128xf32>,
    return
  }
  func.func @transform_0(%arg0: i32) -> (i32, i32, i32) {
    %c0_i32 = arith.constant 0 : i32
    %c0_i32_0 = arith.constant 0 : i32
    %c0_i32_1 = arith.constant 0 : i32
    return %arg0, %c0_i32, %c0_i32_0 : i32, i32, i32
  }
  func.func @transform_1(%arg0: i32) -> (i32, i32) {
    %c0_i32 = arith.constant 0 : i32
    %c0_i32_0 = arith.constant 0 : i32
    %c0_i32_1 = arith.constant 0 : i32
    return %c0_i32, %c0_i32_0 : i32, i32
  }
  func.func @transform_2(%arg0: i32) -> (i32, i32) {
    %c0_i32 = arith.constant 0 : i32
    %c0_i32_0 = arith.constant 0 : i32
    %c0_i32_1 = arith.constant 0 : i32
    return %c0_i32, %c0_i32_0 : i32, i32
  }
  func.func @transform_3(%arg0: i32) -> (i32, i32, i32) {
    %c0_i32 = arith.constant 0 : i32
    %c0_i32_0 = arith.constant 0 : i32
    %c0_i32_1 = arith.constant 0 : i32
    %c0_i32_2 = arith.constant 0 : i32
    return %c0_i32, %c0_i32_0, %c0_i32_1 : i32, i32, i32
  }
  func.func @transform_4(%arg0: i32) -> (i32, i32, i32) {
    %c0_i32 = arith.constant 0 : i32
    %c0_i32_0 = arith.constant 0 : i32
    %c0_i32_1 = arith.constant 0 : i32
    %c0_i32_2 = arith.constant 0 : i32
    return %c0_i32, %c0_i32_0, %c0_i32_1 : i32, i32, i32
  }
  func.func @transform_5(%arg0: i32) -> (i32, i32, i32) {
    %c0_i32 = arith.constant 0 : i32
    %c0_i32_0 = arith.constant 0 : i32
    %c0_i32_1 = arith.constant 0 : i32
    %c0_i32_2 = arith.constant 0 : i32
    return %c0_i32, %c0_i32_0, %c0_i32_1 : i32, i32, i32
  }
  func.func @transform_6(%arg0: i32) -> (i32, i32, i32) {
    %c0_i32 = arith.constant 0 : i32
    %c0_i32_0 = arith.constant 0 : i32
    %c0_i32_1 = arith.constant 0 : i32
    %c0_i32_2 = arith.constant 0 : i32
    return %c0_i32, %c0_i32_0, %c0_i32_1 : i32, i32, i32
  }
  func.func @transform_7(%arg0: i32) -> (i32, i32) {
    %c0_i32 = arith.constant 0 : i32
    %c0_i32_0 = arith.constant 0 : i32
    %c0_i32_1 = arith.constant 0 : i32
    return %c0_i32, %c0_i32_0 : i32, i32
  }
  func.func @transform_8(%arg0: i32) -> (i32, i32) {
    %c0_i32 = arith.constant 0 : i32
    %c0_i32_0 = arith.constant 0 : i32
    %c0_i32_1 = arith.constant 0 : i32
    return %c0_i32, %c0_i32_0 : i32, i32
  }
  func.func @transform_9(%arg0: i32) -> (i32, i32) {
    %c0_i32 = arith.constant 0 : i32
    %c0_i32_0 = arith.constant 0 : i32
    %c0_i32_1 = arith.constant 0 : i32
    return %c0_i32, %c0_i32_0 : i32, i32
  }
  func.func @transform_10(%arg0: i32) -> (i32, i32) {
    %c0_i32 = arith.constant 0 : i32
    %c0_i32_0 = arith.constant 0 : i32
    %c0_i32_1 = arith.constant 0 : i32
    return %c0_i32, %c0_i32_0 : i32, i32
  }
  func.func @transform_11(%arg0: i32) -> (i32, i32, i32) {
    %c0_i32 = arith.constant 0 : i32
    %c0_i32_0 = arith.constant 0 : i32
    %c0_i32_1 = arith.constant 0 : i32
    %c0_i32_2 = arith.constant 0 : i32
    return %c0_i32, %c0_i32_0, %c0_i32_1 : i32, i32, i32
  }
  func.func @transform_12(%arg0: i32) -> (i32, i32, i32) {
    %c0_i32 = arith.constant 0 : i32
    %c0_i32_0 = arith.constant 0 : i32
    %c0_i32_1 = arith.constant 0 : i32
    %c0_i32_2 = arith.constant 0 : i32
    return %c0_i32, %c0_i32_0, %c0_i32_1 : i32, i32, i32
  }
  func.func @transform_13(%arg0: i32) -> (i32, i32, i32) {
    %c0_i32 = arith.constant 0 : i32
    %c0_i32_0 = arith.constant 0 : i32
    %c0_i32_1 = arith.constant 0 : i32
    %c0_i32_2 = arith.constant 0 : i32
    return %c0_i32, %c0_i32_0, %c0_i32_1 : i32, i32, i32
  }
  func.func @transform_14(%arg0: i32) -> (i32, i32, i32) {
    %c0_i32 = arith.constant 0 : i32
    %c0_i32_0 = arith.constant 0 : i32
    %c0_i32_1 = arith.constant 0 : i32
    %c0_i32_2 = arith.constant 0 : i32
    return %c0_i32, %c0_i32_0, %c0_i32_1 : i32, i32, i32
  }
  func.func @transform_15(%arg0: i32) -> (i32, i32) {
    %c0_i32 = arith.constant 0 : i32
    %c0_i32_0 = arith.constant 0 : i32
    %c0_i32_1 = arith.constant 0 : i32
    return %c0_i32, %c0_i32_0 : i32, i32
  }
  func.func @transform_16(%arg0: i32) -> (i32, i32) {
    %c0_i32 = arith.constant 0 : i32
    %c0_i32_0 = arith.constant 0 : i32
    %c0_i32_1 = arith.constant 0 : i32
    return %c0_i32, %c0_i32_0 : i32, i32
  }
  func.func @transform_17(%arg0: i32) -> (i32, i32) {
    %c0_i32 = arith.constant 0 : i32
    %c0_i32_0 = arith.constant 0 : i32
    %c0_i32_1 = arith.constant 0 : i32
    return %c0_i32, %c0_i32_0 : i32, i32
  }
  func.func @transform_18(%arg0: i32) -> (i32, i32) {
    %c0_i32 = arith.constant 0 : i32
    %c0_i32_0 = arith.constant 0 : i32
    %c0_i32_1 = arith.constant 0 : i32
    return %c0_i32, %c0_i32_0 : i32, i32
  }
  func.func @transform_19(%arg0: i32) -> (i32, i32, i32) {
    %c0_i32 = arith.constant 0 : i32
    %c0_i32_0 = arith.constant 0 : i32
    %c0_i32_1 = arith.constant 0 : i32
    %c0_i32_2 = arith.constant 0 : i32
    return %c0_i32, %c0_i32_0, %c0_i32_1 : i32, i32, i32
  }
  func.func @transform_20(%arg0: i32) -> (i32, i32, i32) {
    %c0_i32 = arith.constant 0 : i32
    %c0_i32_0 = arith.constant 0 : i32
    %c0_i32_1 = arith.constant 0 : i32
    %c0_i32_2 = arith.constant 0 : i32
    return %c0_i32, %c0_i32_0, %c0_i32_1 : i32, i32, i32
  }
  func.func @transform_21(%arg0: i32) -> (i32, i32, i32) {
    %c0_i32 = arith.constant 0 : i32
    %c0_i32_0 = arith.constant 0 : i32
    %c0_i32_1 = arith.constant 0 : i32
    %c0_i32_2 = arith.constant 0 : i32
    return %c0_i32, %c0_i32_0, %c0_i32_1 : i32, i32, i32
  }
  func.func @transform_22(%arg0: i32) -> (i32, i32, i32) {
    %c0_i32 = arith.constant 0 : i32
    %c0_i32_0 = arith.constant 0 : i32
    %c0_i32_1 = arith.constant 0 : i32
    %c0_i32_2 = arith.constant 0 : i32
    return %c0_i32, %c0_i32_0, %c0_i32_1 : i32, i32, i32
  }
  func.func @transform_23(%arg0: i32) -> (i32, i32) {
    %c0_i32 = arith.constant 0 : i32
    %c0_i32_0 = arith.constant 0 : i32
    %c0_i32_1 = arith.constant 0 : i32
    return %c0_i32, %c0_i32_0 : i32, i32
  }
  func.func @transform_24(%arg0: i32) -> (i32, i32) {
    %c0_i32 = arith.constant 0 : i32
    %c0_i32_0 = arith.constant 0 : i32
    %c0_i32_1 = arith.constant 0 : i32
    return %c0_i32, %c0_i32_0 : i32, i32
  }
  func.func @transform_25(%arg0: i32) -> (i32, i32, i32, i32) {
    %c0_i32 = arith.constant 0 : i32
    %c0_i32_0 = arith.constant 0 : i32
    %c0_i32_1 = arith.constant 0 : i32
    %c0_i32_2 = arith.constant 0 : i32
    return %c0_i32, %arg0, %c0_i32_0, %c0_i32_1 : i32, i32, i32, i32
  }
}

</mosaic_0001>

<llo_original>
// kernel: tpu_custom_call.1
$region0: #{tpu_custom_call.1}
  #allocation0 [shape = 'u32[]', space=smem, size = 0x4, offset = 0x4, fixed_abs, tag = 'smem constant byte address 0x4 - core index']
  #allocation1 [shape = 'u32[72,128]{1,0:T(1,128)}', space=vmem, size = 0x9000, scoped, tag = 'internal scratch']
  %s0 = inlined_call_operand.vmem [shape: f32[2,4,128], index: 0, kind: input, shape index: {}]
  %s1 = inlined_call_operand.vmem [shape: bf16[32,4], index: 1, kind: input, shape index: {}]
  %s2 = inlined_call_operand.vmem [shape: f32[32,1], index: 2, kind: input, shape index: {}]
  %s3 = inlined_call_operand.vmem [shape: bf16[3,32,96], index: 3, kind: input, shape index: {}]
  %s4 = inlined_call_operand.vmem [shape: f32[3,32,1], index: 4, kind: input, shape index: {}]
  %s5 = inlined_call_operand.vmem [shape: bf16[3,32,32], index: 5, kind: input, shape index: {}]
  %s6 = inlined_call_operand.vmem [shape: f32[3,32,1], index: 6, kind: input, shape index: {}]
  %s7 = inlined_call_operand.vmem [shape: bf16[8,32], index: 7, kind: input, shape index: {}]
  %s8 = inlined_call_operand.vmem [shape: f32[8,1], index: 8, kind: input, shape index: {}]
  %s9 = inlined_call_operand.vmem [shape: bf16[32,8], index: 9, kind: input, shape index: {}]
  %s10 = inlined_call_operand.vmem [shape: f32[32,1], index: 10, kind: input, shape index: {}]
  %s11 = inlined_call_operand.vmem [shape: bf16[3,32,96], index: 11, kind: input, shape index: {}]
  %s12 = inlined_call_operand.vmem [shape: f32[3,32,1], index: 12, kind: input, shape index: {}]
  %s13 = inlined_call_operand.vmem [shape: bf16[3,32,32], index: 13, kind: input, shape index: {}]
  %s14 = inlined_call_operand.vmem [shape: f32[3,32,1], index: 14, kind: input, shape index: {}]
  %s15 = inlined_call_operand.vmem [shape: bf16[8,32], index: 15, kind: input, shape index: {}]
  %s16 = inlined_call_operand.vmem [shape: f32[8,1], index: 16, kind: input, shape index: {}]
  %s17 = inlined_call_operand.vmem [shape: bf16[32,8], index: 17, kind: input, shape index: {}]
  %s18 = inlined_call_operand.vmem [shape: f32[32,1], index: 18, kind: input, shape index: {}]
  %s19 = inlined_call_operand.vmem [shape: bf16[3,32,96], index: 19, kind: input, shape index: {}]
  %s20 = inlined_call_operand.vmem [shape: f32[3,32,1], index: 20, kind: input, shape index: {}]
  %s21 = inlined_call_operand.vmem [shape: bf16[3,32,32], index: 21, kind: input, shape index: {}]
  %s22 = inlined_call_operand.vmem [shape: f32[3,32,1], index: 22, kind: input, shape index: {}]
  %s23 = inlined_call_operand.vmem [shape: bf16[8,32], index: 23, kind: input, shape index: {}]
  %s24 = inlined_call_operand.vmem [shape: f32[8,1], index: 24, kind: input, shape index: {}]
  %s25 = inlined_call_operand.hbm [shape: f32[3,2,8,128], index: 25, kind: output, shape index: {}]
  %s26 = sld [smem:[#allocation0]]
  $region133: #{tpu_custom_call.1} parent=0
    _
  %s28 = ssub.s32 1, %s26
  %s29 = scalar_select 0, %s28, %s26
  $region1: #{tpu_custom_call.1} parent=0
    #allocation2 [shape = 'u8[24576]{0}', space=vmem, size = 0x6000, scoped, tag = 'output window, operand 0']
    #allocation3 [shape = 's32[2]{0}', space=sflag, size = 0x8, scoped, tag = 'scoped memory for tpu_custom_call.1']
    %30 = vsyncpa [#allocation3], 0
    %s31 = scalar_lea.sflag [#allocation3], 1
    %32 = vsyncpa %s31, 0
    loop: start=0, step=1, limit=4
    $region2: #{tpu_custom_call.1} parent=1 // loop_pre_header
      _
    $region3: #{tpu_custom_call.1} parent=1 // loop_header
      %s34 = sphi 0, %s38
      %p35 = scmp.ge.s32.totalorder %s34, 4
      %s44 = sphi 0, %s46
      %s47 = sphi 0, %s44
      %s48 = sphi 0, %s47
      %s64 = sphi 0, %s48
      %s68 = sphi 0, %s68
      %s70 = sphi 0, %s68
      %s71 = sphi 0, %s70
      %s85 = sphi 0, %s71
      %s89 = sphi 0, %s89
      %s91 = sphi 0, %s89
      %s92 = sphi 0, %s91
      %s106 = sphi 0, %s92
      %s110 = sphi 0, %s110
      %s112 = sphi 0, %s110
      %s113 = sphi 0, %s112
      %s127 = sphi 0, %s113
      %s131 = sphi 0, %s131
      %s133 = sphi 0, %s131
      %s134 = sphi 0, %s133
      %s148 = sphi 0, %s134
      %s152 = sphi 0, %s152
      %s154 = sphi 0, %s152
      %s155 = sphi 0, %s154
      %s169 = sphi 0, %s155
      %s173 = sphi 0, %s173
      %s175 = sphi 0, %s173
      %s176 = sphi 0, %s175
      %s190 = sphi 0, %s176
      %s194 = sphi 0, %s194
      %s196 = sphi 0, %s194
      %s197 = sphi 0, %s196
      %s211 = sphi 0, %s197
      %s215 = sphi 0, %s215
      %s217 = sphi 0, %s215
      %s218 = sphi 0, %s217
      %s232 = sphi 0, %s218
      %s236 = sphi 0, %s236
      %s238 = sphi 0, %s236
      %s239 = sphi 0, %s238
      %s253 = sphi 0, %s239
      %s257 = sphi 0, %s257
      %s259 = sphi 0, %s257
      %s260 = sphi 0, %s259
      %s274 = sphi 0, %s260
      %s278 = sphi 0, %s278
      %s280 = sphi 0, %s278
      %s281 = sphi 0, %s280
      %s295 = sphi 0, %s281
      %s299 = sphi 0, %s299
      %s301 = sphi 0, %s299
      %s302 = sphi 0, %s301
      %s316 = sphi 0, %s302
      %s320 = sphi 0, %s320
      %s322 = sphi 0, %s320
      %s323 = sphi 0, %s322
      %s337 = sphi 0, %s323
      %s341 = sphi 0, %s341
      %s343 = sphi 0, %s341
      %s344 = sphi 0, %s343
      %s358 = sphi 0, %s344
      %s362 = sphi 0, %s362
      %s364 = sphi 0, %s362
      %s365 = sphi 0, %s364
      %s379 = sphi 0, %s365
      %s383 = sphi 0, %s383
      %s385 = sphi 0, %s383
      %s386 = sphi 0, %s385
      %s400 = sphi 0, %s386
      %s404 = sphi 0, %s404
      %s406 = sphi 0, %s404
      %s407 = sphi 0, %s406
      %s421 = sphi 0, %s407
      %s425 = sphi 0, %s425
      %s427 = sphi 0, %s425
      %s428 = sphi 0, %s427
      %s442 = sphi 0, %s428
      %s446 = sphi 0, %s446
      %s448 = sphi 0, %s446
      %s449 = sphi 0, %s448
      %s463 = sphi 0, %s449
      %s467 = sphi 0, %s467
      %s469 = sphi 0, %s467
      %s470 = sphi 0, %s469
      %s484 = sphi 0, %s470
      %s488 = sphi 0, %s488
      %s490 = sphi 0, %s488
      %s491 = sphi 0, %s490
      %s505 = sphi 0, %s491
      %s509 = sphi 0, %s509
      %s511 = sphi 0, %s509
      %s512 = sphi 0, %s511
      %s526 = sphi 0, %s512
      %s530 = sphi 0, %s530
      %s532 = sphi 0, %s530
      %s533 = sphi 0, %s532
      %s547 = sphi 0, %s533
      %s551 = sphi 0, %s551
      %s553 = sphi 0, %s551
      %s554 = sphi 0, %s553
      %s568 = sphi 0, %s554
      %s574 = sphi 0, %s576
      %s577 = sphi 0, %s574
      %s578 = sphi 0, %s577
      %s594 = sphi 0, %s578
    $region4: #{tpu_custom_call.1} parent=1 // loop_header_branch
      %37 = sbr.rel (%p35) target = $region8
    $region5: #{tpu_custom_call.1} parent=1 // loop_body
      %s39 = ssub.s32 %s34, 1
      %s40 = ssub.s32 %s34, 2
      %s41 = sadd.s32 %s34, 1
      %s42 = ssub.s32 %s34, %s41
      %p43 = scmp.eq.s32.totalorder %s42, 0
      %s45 = sadd.s32 %s44, 1
      %s46 = scalar_select %p43, %s44, %s45
      %p49 = pneg %p43
      %p50 = scmp.eq.s32.totalorder %s34, 1
      %p51 = por %p49, %p50
      %p52 = scmp.ne.s32.totalorder %s44, %s47
      %p53 = scmp.eq.s32.totalorder %s34, 0
      %p54 = por %p52, %p53
      %p55 = scmp.ne.s32.totalorder %s44, %s47
      %p56 = scmp.eq.s32.totalorder %s39, 1
      %p57 = por %p55, %p56
      %p58 = scmp.ne.s32.totalorder %s47, %s48
      %p59 = scmp.eq.s32.totalorder %s39, 0
      %p60 = por %p58, %p59
      %p61 = scmp.ne.s32.totalorder %s47, %s48
      %p62 = scmp.eq.s32.totalorder %s40, 1
      %p63 = por %p61, %p62
      %p65 = scmp.ne.s32.totalorder %s48, %s64
      %p66 = scmp.eq.s32.totalorder %s40, 0
      %p67 = por %p65, %p66
      %s69 = sadd.s32 %s68, 1
      %p72 = scmp.eq.s32.totalorder %s34, 1
      %p73 = scmp.ne.s32.totalorder %s68, %s70
      %p74 = scmp.eq.s32.totalorder %s34, 0
      %p75 = por %p73, %p74
      %p76 = scmp.ne.s32.totalorder %s68, %s70
      %p77 = scmp.eq.s32.totalorder %s39, 1
      %p78 = por %p76, %p77
      %p79 = scmp.ne.s32.totalorder %s70, %s71
      %p80 = scmp.eq.s32.totalorder %s39, 0
      %p81 = por %p79, %p80
      %p82 = scmp.ne.s32.totalorder %s70, %s71
      %p83 = scmp.eq.s32.totalorder %s40, 1
      %p84 = por %p82, %p83
      %p86 = scmp.ne.s32.totalorder %s71, %s85
      %p87 = scmp.eq.s32.totalorder %s40, 0
      %p88 = por %p86, %p87
      %s90 = sadd.s32 %s89, 1
      %p93 = scmp.eq.s32.totalorder %s34, 1
      %p94 = scmp.ne.s32.totalorder %s89, %s91
      %p95 = scmp.eq.s32.totalorder %s34, 0
      %p96 = por %p94, %p95
      %p97 = scmp.ne.s32.totalorder %s89, %s91
      %p98 = scmp.eq.s32.totalorder %s39, 1
      %p99 = por %p97, %p98
      %p100 = scmp.ne.s32.totalorder %s91, %s92
      %p101 = scmp.eq.s32.totalorder %s39, 0
      %p102 = por %p100, %p101
      %p103 = scmp.ne.s32.totalorder %s91, %s92
      %p104 = scmp.eq.s32.totalorder %s40, 1
      %p105 = por %p103, %p104
      %p107 = scmp.ne.s32.totalorder %s92, %s106
      %p108 = scmp.eq.s32.totalorder %s40, 0
      %p109 = por %p107, %p108
      %s111 = sadd.s32 %s110, 1
      %p114 = scmp.eq.s32.totalorder %s34, 1
      %p115 = scmp.ne.s32.totalorder %s110, %s112
      %p116 = scmp.eq.s32.totalorder %s34, 0
      %p117 = por %p115, %p116
      %p118 = scmp.ne.s32.totalorder %s110, %s112
      %p119 = scmp.eq.s32.totalorder %s39, 1
      %p120 = por %p118, %p119
      %p121 = scmp.ne.s32.totalorder %s112, %s113
      %p122 = scmp.eq.s32.totalorder %s39, 0
      %p123 = por %p121, %p122
      %p124 = scmp.ne.s32.totalorder %s112, %s113
      %p125 = scmp.eq.s32.totalorder %s40, 1
      %p126 = por %p124, %p125
      %p128 = scmp.ne.s32.totalorder %s113, %s127
      %p129 = scmp.eq.s32.totalorder %s40, 0
      %p130 = por %p128, %p129
      %s132 = sadd.s32 %s131, 1
      %p135 = scmp.eq.s32.totalorder %s34, 1
      %p136 = scmp.ne.s32.totalorder %s131, %s133
      %p137 = scmp.eq.s32.totalorder %s34, 0
      %p138 = por %p136, %p137
      %p139 = scmp.ne.s32.totalorder %s131, %s133
      %p140 = scmp.eq.s32.totalorder %s39, 1
      %p141 = por %p139, %p140
      %p142 = scmp.ne.s32.totalorder %s133, %s134
      %p143 = scmp.eq.s32.totalorder %s39, 0
      %p144 = por %p142, %p143
      %p145 = scmp.ne.s32.totalorder %s133, %s134
      %p146 = scmp.eq.s32.totalorder %s40, 1
      %p147 = por %p145, %p146
      %p149 = scmp.ne.s32.totalorder %s134, %s148
      %p150 = scmp.eq.s32.totalorder %s40, 0
      %p151 = por %p149, %p150
      %s153 = sadd.s32 %s152, 1
      %p156 = scmp.eq.s32.totalorder %s34, 1
      %p157 = scmp.ne.s32.totalorder %s152, %s154
      %p158 = scmp.eq.s32.totalorder %s34, 0
      %p159 = por %p157, %p158
      %p160 = scmp.ne.s32.totalorder %s152, %s154
      %p161 = scmp.eq.s32.totalorder %s39, 1
      %p162 = por %p160, %p161
      %p163 = scmp.ne.s32.totalorder %s154, %s155
      %p164 = scmp.eq.s32.totalorder %s39, 0
      %p165 = por %p163, %p164
      %p166 = scmp.ne.s32.totalorder %s154, %s155
      %p167 = scmp.eq.s32.totalorder %s40, 1
      %p168 = por %p166, %p167
      %p170 = scmp.ne.s32.totalorder %s155, %s169
      %p171 = scmp.eq.s32.totalorder %s40, 0
      %p172 = por %p170, %p171
      %s174 = sadd.s32 %s173, 1
      %p177 = scmp.eq.s32.totalorder %s34, 1
      %p178 = scmp.ne.s32.totalorder %s173, %s175
      %p179 = scmp.eq.s32.totalorder %s34, 0
      %p180 = por %p178, %p179
      %p181 = scmp.ne.s32.totalorder %s173, %s175
      %p182 = scmp.eq.s32.totalorder %s39, 1
      %p183 = por %p181, %p182
      %p184 = scmp.ne.s32.totalorder %s175, %s176
      %p185 = scmp.eq.s32.totalorder %s39, 0
      %p186 = por %p184, %p185
      %p187 = scmp.ne.s32.totalorder %s175, %s176
      %p188 = scmp.eq.s32.totalorder %s40, 1
      %p189 = por %p187, %p188
      %p191 = scmp.ne.s32.totalorder %s176, %s190
      %p192 = scmp.eq.s32.totalorder %s40, 0
      %p193 = por %p191, %p192
      %s195 = sadd.s32 %s194, 1
      %p198 = scmp.eq.s32.totalorder %s34, 1
      %p199 = scmp.ne.s32.totalorder %s194, %s196
      %p200 = scmp.eq.s32.totalorder %s34, 0
      %p201 = por %p199, %p200
      %p202 = scmp.ne.s32.totalorder %s194, %s196
      %p203 = scmp.eq.s32.totalorder %s39, 1
      %p204 = por %p202, %p203
      %p205 = scmp.ne.s32.totalorder %s196, %s197
      %p206 = scmp.eq.s32.totalorder %s39, 0
      %p207 = por %p205, %p206
      %p208 = scmp.ne.s32.totalorder %s196, %s197
      %p209 = scmp.eq.s32.totalorder %s40, 1
      %p210 = por %p208, %p209
      %p212 = scmp.ne.s32.totalorder %s197, %s211
      %p213 = scmp.eq.s32.totalorder %s40, 0
      %p214 = por %p212, %p213
      %s216 = sadd.s32 %s215, 1
      %p219 = scmp.eq.s32.totalorder %s34, 1
      %p220 = scmp.ne.s32.totalorder %s215, %s217
      %p221 = scmp.eq.s32.totalorder %s34, 0
      %p222 = por %p220, %p221
      %p223 = scmp.ne.s32.totalorder %s215, %s217
      %p224 = scmp.eq.s32.totalorder %s39, 1
      %p225 = por %p223, %p224
      %p226 = scmp.ne.s32.totalorder %s217, %s218
      %p227 = scmp.eq.s32.totalorder %s39, 0
      %p228 = por %p226, %p227
      %p229 = scmp.ne.s32.totalorder %s217, %s218
      %p230 = scmp.eq.s32.totalorder %s40, 1
      %p231 = por %p229, %p230
      %p233 = scmp.ne.s32.totalorder %s218, %s232
      %p234 = scmp.eq.s32.totalorder %s40, 0
      %p235 = por %p233, %p234
      %s237 = sadd.s32 %s236, 1
      %p240 = scmp.eq.s32.totalorder %s34, 1
      %p241 = scmp.ne.s32.totalorder %s236, %s238
      %p242 = scmp.eq.s32.totalorder %s34, 0
      %p243 = por %p241, %p242
      %p244 = scmp.ne.s32.totalorder %s236, %s238
      %p245 = scmp.eq.s32.totalorder %s39, 1
      %p246 = por %p244, %p245
      %p247 = scmp.ne.s32.totalorder %s238, %s239
      %p248 = scmp.eq.s32.totalorder %s39, 0
      %p249 = por %p247, %p248
      %p250 = scmp.ne.s32.totalorder %s238, %s239
      %p251 = scmp.eq.s32.totalorder %s40, 1
      %p252 = por %p250, %p251
      %p254 = scmp.ne.s32.totalorder %s239, %s253
      %p255 = scmp.eq.s32.totalorder %s40, 0
      %p256 = por %p254, %p255
      %s258 = sadd.s32 %s257, 1
      %p261 = scmp.eq.s32.totalorder %s34, 1
      %p262 = scmp.ne.s32.totalorder %s257, %s259
      %p263 = scmp.eq.s32.totalorder %s34, 0
      %p264 = por %p262, %p263
      %p265 = scmp.ne.s32.totalorder %s257, %s259
      %p266 = scmp.eq.s32.totalorder %s39, 1
      %p267 = por %p265, %p266
      %p268 = scmp.ne.s32.totalorder %s259, %s260
      %p269 = scmp.eq.s32.totalorder %s39, 0
      %p270 = por %p268, %p269
      %p271 = scmp.ne.s32.totalorder %s259, %s260
      %p272 = scmp.eq.s32.totalorder %s40, 1
      %p273 = por %p271, %p272
      %p275 = scmp.ne.s32.totalorder %s260, %s274
      %p276 = scmp.eq.s32.totalorder %s40, 0
      %p277 = por %p275, %p276
      %s279 = sadd.s32 %s278, 1
      %p282 = scmp.eq.s32.totalorder %s34, 1
      %p283 = scmp.ne.s32.totalorder %s278, %s280
      %p284 = scmp.eq.s32.totalorder %s34, 0
      %p285 = por %p283, %p284
      %p286 = scmp.ne.s32.totalorder %s278, %s280
      %p287 = scmp.eq.s32.totalorder %s39, 1
      %p288 = por %p286, %p287
      %p289 = scmp.ne.s32.totalorder %s280, %s281
      %p290 = scmp.eq.s32.totalorder %s39, 0
      %p291 = por %p289, %p290
      %p292 = scmp.ne.s32.totalorder %s280, %s281
      %p293 = scmp.eq.s32.totalorder %s40, 1
      %p294 = por %p292, %p293
      %p296 = scmp.ne.s32.totalorder %s281, %s295
      %p297 = scmp.eq.s32.totalorder %s40, 0
      %p298 = por %p296, %p297
      %s300 = sadd.s32 %s299, 1
      %p303 = scmp.eq.s32.totalorder %s34, 1
      %p304 = scmp.ne.s32.totalorder %s299, %s301
      %p305 = scmp.eq.s32.totalorder %s34, 0
      %p306 = por %p304, %p305
      %p307 = scmp.ne.s32.totalorder %s299, %s301
      %p308 = scmp.eq.s32.totalorder %s39, 1
      %p309 = por %p307, %p308
      %p310 = scmp.ne.s32.totalorder %s301, %s302
      %p311 = scmp.eq.s32.totalorder %s39, 0
      %p312 = por %p310, %p311
      %p313 = scmp.ne.s32.totalorder %s301, %s302
      %p314 = scmp.eq.s32.totalorder %s40, 1
      %p315 = por %p313, %p314
      %p317 = scmp.ne.s32.totalorder %s302, %s316
      %p318 = scmp.eq.s32.totalorder %s40, 0
      %p319 = por %p317, %p318
      %s321 = sadd.s32 %s320, 1
      %p324 = scmp.eq.s32.totalorder %s34, 1
      %p325 = scmp.ne.s32.totalorder %s320, %s322
      %p326 = scmp.eq.s32.totalorder %s34, 0
      %p327 = por %p325, %p326
      %p328 = scmp.ne.s32.totalorder %s320, %s322
      %p329 = scmp.eq.s32.totalorder %s39, 1
      %p330 = por %p328, %p329
      %p331 = scmp.ne.s32.totalorder %s322, %s323
      %p332 = scmp.eq.s32.totalorder %s39, 0
      %p333 = por %p331, %p332
      %p334 = scmp.ne.s32.totalorder %s322, %s323
      %p335 = scmp.eq.s32.totalorder %s40, 1
      %p336 = por %p334, %p335
      %p338 = scmp.ne.s32.totalorder %s323, %s337
      %p339 = scmp.eq.s32.totalorder %s40, 0
      %p340 = por %p338, %p339
      %s342 = sadd.s32 %s341, 1
      %p345 = scmp.eq.s32.totalorder %s34, 1
      %p346 = scmp.ne.s32.totalorder %s341, %s343
      %p347 = scmp.eq.s32.totalorder %s34, 0
      %p348 = por %p346, %p347
      %p349 = scmp.ne.s32.totalorder %s341, %s343
      %p350 = scmp.eq.s32.totalorder %s39, 1
      %p351 = por %p349, %p350
      %p352 = scmp.ne.s32.totalorder %s343, %s344
      %p353 = scmp.eq.s32.totalorder %s39, 0
      %p354 = por %p352, %p353
      %p355 = scmp.ne.s32.totalorder %s343, %s344
      %p356 = scmp.eq.s32.totalorder %s40, 1
      %p357 = por %p355, %p356
      %p359 = scmp.ne.s32.totalorder %s344, %s358
      %p360 = scmp.eq.s32.totalorder %s40, 0
      %p361 = por %p359, %p360
      %s363 = sadd.s32 %s362, 1
      %p366 = scmp.eq.s32.totalorder %s34, 1
      %p367 = scmp.ne.s32.totalorder %s362, %s364
      %p368 = scmp.eq.s32.totalorder %s34, 0
      %p369 = por %p367, %p368
      %p370 = scmp.ne.s32.totalorder %s362, %s364
      %p371 = scmp.eq.s32.totalorder %s39, 1
      %p372 = por %p370, %p371
      %p373 = scmp.ne.s32.totalorder %s364, %s365
      %p374 = scmp.eq.s32.totalorder %s39, 0
      %p375 = por %p373, %p374
      %p376 = scmp.ne.s32.totalorder %s364, %s365
      %p377 = scmp.eq.s32.totalorder %s40, 1
      %p378 = por %p376, %p377
      %p380 = scmp.ne.s32.totalorder %s365, %s379
      %p381 = scmp.eq.s32.totalorder %s40, 0
      %p382 = por %p380, %p381
      %s384 = sadd.s32 %s383, 1
      %p387 = scmp.eq.s32.totalorder %s34, 1
      %p388 = scmp.ne.s32.totalorder %s383, %s385
      %p389 = scmp.eq.s32.totalorder %s34, 0
      %p390 = por %p388, %p389
      %p391 = scmp.ne.s32.totalorder %s383, %s385
      %p392 = scmp.eq.s32.totalorder %s39, 1
      %p393 = por %p391, %p392
      %p394 = scmp.ne.s32.totalorder %s385, %s386
      %p395 = scmp.eq.s32.totalorder %s39, 0
      %p396 = por %p394, %p395
      %p397 = scmp.ne.s32.totalorder %s385, %s386
      %p398 = scmp.eq.s32.totalorder %s40, 1
      %p399 = por %p397, %p398
      %p401 = scmp.ne.s32.totalorder %s386, %s400
      %p402 = scmp.eq.s32.totalorder %s40, 0
      %p403 = por %p401, %p402
      %s405 = sadd.s32 %s404, 1
      %p408 = scmp.eq.s32.totalorder %s34, 1
      %p409 = scmp.ne.s32.totalorder %s404, %s406
      %p410 = scmp.eq.s32.totalorder %s34, 0
      %p411 = por %p409, %p410
      %p412 = scmp.ne.s32.totalorder %s404, %s406
      %p413 = scmp.eq.s32.totalorder %s39, 1
      %p414 = por %p412, %p413
      %p415 = scmp.ne.s32.totalorder %s406, %s407
      %p416 = scmp.eq.s32.totalorder %s39, 0
      %p417 = por %p415, %p416
      %p418 = scmp.ne.s32.totalorder %s406, %s407
      %p419 = scmp.eq.s32.totalorder %s40, 1
      %p420 = por %p418, %p419
      %p422 = scmp.ne.s32.totalorder %s407, %s421
      %p423 = scmp.eq.s32.totalorder %s40, 0
      %p424 = por %p422, %p423
      %s426 = sadd.s32 %s425, 1
      %p429 = scmp.eq.s32.totalorder %s34, 1
      %p430 = scmp.ne.s32.totalorder %s425, %s427
      %p431 = scmp.eq.s32.totalorder %s34, 0
      %p432 = por %p430, %p431
      %p433 = scmp.ne.s32.totalorder %s425, %s427
      %p434 = scmp.eq.s32.totalorder %s39, 1
      %p435 = por %p433, %p434
      %p436 = scmp.ne.s32.totalorder %s427, %s428
      %p437 = scmp.eq.s32.totalorder %s39, 0
      %p438 = por %p436, %p437
      %p439 = scmp.ne.s32.totalorder %s427, %s428
      %p440 = scmp.eq.s32.totalorder %s40, 1
      %p441 = por %p439, %p440
      %p443 = scmp.ne.s32.totalorder %s428, %s442
      %p444 = scmp.eq.s32.totalorder %s40, 0
      %p445 = por %p443, %p444
      %s447 = sadd.s32 %s446, 1
      %p450 = scmp.eq.s32.totalorder %s34, 1
      %p451 = scmp.ne.s32.totalorder %s446, %s448
      %p452 = scmp.eq.s32.totalorder %s34, 0
      %p453 = por %p451, %p452
      %p454 = scmp.ne.s32.totalorder %s446, %s448
      %p455 = scmp.eq.s32.totalorder %s39, 1
      %p456 = por %p454, %p455
      %p457 = scmp.ne.s32.totalorder %s448, %s449
      %p458 = scmp.eq.s32.totalorder %s39, 0
      %p459 = por %p457, %p458
      %p460 = scmp.ne.s32.totalorder %s448, %s449
      %p461 = scmp.eq.s32.totalorder %s40, 1
      %p462 = por %p460, %p461
      %p464 = scmp.ne.s32.totalorder %s449, %s463
      %p465 = scmp.eq.s32.totalorder %s40, 0
      %p466 = por %p464, %p465
      %s468 = sadd.s32 %s467, 1
      %p471 = scmp.eq.s32.totalorder %s34, 1
      %p472 = scmp.ne.s32.totalorder %s467, %s469
      %p473 = scmp.eq.s32.totalorder %s34, 0
      %p474 = por %p472, %p473
      %p475 = scmp.ne.s32.totalorder %s467, %s469
      %p476 = scmp.eq.s32.totalorder %s39, 1
      %p477 = por %p475, %p476
      %p478 = scmp.ne.s32.totalorder %s469, %s470
      %p479 = scmp.eq.s32.totalorder %s39, 0
      %p480 = por %p478, %p479
      %p481 = scmp.ne.s32.totalorder %s469, %s470
      %p482 = scmp.eq.s32.totalorder %s40, 1
      %p483 = por %p481, %p482
      %p485 = scmp.ne.s32.totalorder %s470, %s484
      %p486 = scmp.eq.s32.totalorder %s40, 0
      %p487 = por %p485, %p486
      %s489 = sadd.s32 %s488, 1
      %p492 = scmp.eq.s32.totalorder %s34, 1
      %p493 = scmp.ne.s32.totalorder %s488, %s490
      %p494 = scmp.eq.s32.totalorder %s34, 0
      %p495 = por %p493, %p494
      %p496 = scmp.ne.s32.totalorder %s488, %s490
      %p497 = scmp.eq.s32.totalorder %s39, 1
      %p498 = por %p496, %p497
      %p499 = scmp.ne.s32.totalorder %s490, %s491
      %p500 = scmp.eq.s32.totalorder %s39, 0
      %p501 = por %p499, %p500
      %p502 = scmp.ne.s32.totalorder %s490, %s491
      %p503 = scmp.eq.s32.totalorder %s40, 1
      %p504 = por %p502, %p503
      %p506 = scmp.ne.s32.totalorder %s491, %s505
      %p507 = scmp.eq.s32.totalorder %s40, 0
      %p508 = por %p506, %p507
      %s510 = sadd.s32 %s509, 1
      %p513 = scmp.eq.s32.totalorder %s34, 1
      %p514 = scmp.ne.s32.totalorder %s509, %s511
      %p515 = scmp.eq.s32.totalorder %s34, 0
      %p516 = por %p514, %p515
      %p517 = scmp.ne.s32.totalorder %s509, %s511
      %p518 = scmp.eq.s32.totalorder %s39, 1
      %p519 = por %p517, %p518
      %p520 = scmp.ne.s32.totalorder %s511, %s512
      %p521 = scmp.eq.s32.totalorder %s39, 0
      %p522 = por %p520, %p521
      %p523 = scmp.ne.s32.totalorder %s511, %s512
      %p524 = scmp.eq.s32.totalorder %s40, 1
      %p525 = por %p523, %p524
      %p527 = scmp.ne.s32.totalorder %s512, %s526
      %p528 = scmp.eq.s32.totalorder %s40, 0
      %p529 = por %p527, %p528
      %s531 = sadd.s32 %s530, 1
      %p534 = scmp.eq.s32.totalorder %s34, 1
      %p535 = scmp.ne.s32.totalorder %s530, %s532
      %p536 = scmp.eq.s32.totalorder %s34, 0
      %p537 = por %p535, %p536
      %p538 = scmp.ne.s32.totalorder %s530, %s532
      %p539 = scmp.eq.s32.totalorder %s39, 1
      %p540 = por %p538, %p539
      %p541 = scmp.ne.s32.totalorder %s532, %s533
      %p542 = scmp.eq.s32.totalorder %s39, 0
      %p543 = por %p541, %p542
      %p544 = scmp.ne.s32.totalorder %s532, %s533
      %p545 = scmp.eq.s32.totalorder %s40, 1
      %p546 = por %p544, %p545
      %p548 = scmp.ne.s32.totalorder %s533, %s547
      %p549 = scmp.eq.s32.totalorder %s40, 0
      %p550 = por %p548, %p549
      %s552 = sadd.s32 %s551, 1
      %p555 = scmp.eq.s32.totalorder %s34, 1
      %p556 = scmp.ne.s32.totalorder %s551, %s553
      %p557 = scmp.eq.s32.totalorder %s34, 0
      %p558 = por %p556, %p557
      %p559 = scmp.ne.s32.totalorder %s551, %s553
      %p560 = scmp.eq.s32.totalorder %s39, 1
      %p561 = por %p559, %p560
      %p562 = scmp.ne.s32.totalorder %s553, %s554
      %p563 = scmp.eq.s32.totalorder %s39, 0
      %p564 = por %p562, %p563
      %p565 = scmp.ne.s32.totalorder %s553, %s554
      %p566 = scmp.eq.s32.totalorder %s40, 1
      %p567 = por %p565, %p566
      %p569 = scmp.ne.s32.totalorder %s554, %s568
      %p570 = scmp.eq.s32.totalorder %s40, 0
      %p571 = por %p569, %p570
      %s572 = ssub.s32 %s34, %s41
      %p573 = scmp.eq.s32.totalorder %s572, 0
      %s575 = sadd.s32 %s574, 1
      %s576 = scalar_select %p573, %s574, %s575
      %p579 = pneg %p573
      %p580 = scmp.eq.s32.totalorder %s34, 1
      %p581 = por %p579, %p580
      %p582 = scmp.ne.s32.totalorder %s574, %s577
      %p583 = scmp.eq.s32.totalorder %s34, 0
      %p584 = por %p582, %p583
      %p585 = scmp.ne.s32.totalorder %s574, %s577
      %p586 = scmp.eq.s32.totalorder %s39, 1
      %p587 = por %p585, %p586
      %p588 = scmp.ne.s32.totalorder %s577, %s578
      %p589 = scmp.eq.s32.totalorder %s39, 0
      %p590 = por %p588, %p589
      %p591 = scmp.ne.s32.totalorder %s577, %s578
      %p592 = scmp.eq.s32.totalorder %s40, 1
      %p593 = por %p591, %p592
      %p595 = scmp.ne.s32.totalorder %s578, %s594
      %p596 = scmp.eq.s32.totalorder %s40, 0
      %p597 = por %p595, %p596
      %p598 = scmp.le.s32.totalorder 1, %s34
      %p599 = scmp.lt.s32.totalorder %s34, 3
      %p600 = pnand %p598, %p599
      %p601 = pneg %p600
      // Predicated region
      $region9: #{tpu_custom_call.1} parent=5 // pred_check
        _
      $region10: #{tpu_custom_call.1} parent=5 // pred_check_branch
        %603 = sbr.rel (%p600) target = $region12
      $region11: #{tpu_custom_call.1} parent=5 // pred_region
        %s604 = ssub.s32 %s34, 1
        // Predicated region
        $region13: #{tpu_custom_call.1} parent=11 // pred_check
          %p605 = pneg %p81
        $region14: #{tpu_custom_call.1} parent=11 // pred_check_branch
          %607 = sbr.rel (%p605) target = $region16
        $region15: #{tpu_custom_call.1} parent=11 // pred_region
          _
        $region16: #{tpu_custom_call.1} parent=11 // pred_fallthru
          _
        // Predicated region
        $region17: #{tpu_custom_call.1} parent=11 // pred_check
          %p608 = pneg %p102
        $region18: #{tpu_custom_call.1} parent=11 // pred_check_branch
          %610 = sbr.rel (%p608) target = $region20
        $region19: #{tpu_custom_call.1} parent=11 // pred_region
          _
        $region20: #{tpu_custom_call.1} parent=11 // pred_fallthru
          _
        // Predicated region
        $region21: #{tpu_custom_call.1} parent=11 // pred_check
          %p611 = pneg %p123
        $region22: #{tpu_custom_call.1} parent=11 // pred_check_branch
          %613 = sbr.rel (%p611) target = $region24
        $region23: #{tpu_custom_call.1} parent=11 // pred_region
          _
        $region24: #{tpu_custom_call.1} parent=11 // pred_fallthru
          _
        // Predicated region
        $region25: #{tpu_custom_call.1} parent=11 // pred_check
          %p614 = pneg %p144
        $region26: #{tpu_custom_call.1} parent=11 // pred_check_branch
          %616 = sbr.rel (%p614) target = $region28
        $region27: #{tpu_custom_call.1} parent=11 // pred_region
          _
        $region28: #{tpu_custom_call.1} parent=11 // pred_fallthru
          _
        // Predicated region
        $region29: #{tpu_custom_call.1} parent=11 // pred_check
          %p617 = pneg %p165
        $region30: #{tpu_custom_call.1} parent=11 // pred_check_branch
          %619 = sbr.rel (%p617) target = $region32
        $region31: #{tpu_custom_call.1} parent=11 // pred_region
          _
        $region32: #{tpu_custom_call.1} parent=11 // pred_fallthru
          _
        // Predicated region
        $region33: #{tpu_custom_call.1} parent=11 // pred_check
          %p620 = pneg %p186
        $region34: #{tpu_custom_call.1} parent=11 // pred_check_branch
          %622 = sbr.rel (%p620) target = $region36
        $region35: #{tpu_custom_call.1} parent=11 // pred_region
          _
        $region36: #{tpu_custom_call.1} parent=11 // pred_fallthru
          _
        // Predicated region
        $region37: #{tpu_custom_call.1} parent=11 // pred_check
          %p623 = pneg %p207
        $region38: #{tpu_custom_call.1} parent=11 // pred_check_branch
          %625 = sbr.rel (%p623) target = $region40
        $region39: #{tpu_custom_call.1} parent=11 // pred_region
          _
        $region40: #{tpu_custom_call.1} parent=11 // pred_fallthru
          _
        // Predicated region
        $region41: #{tpu_custom_call.1} parent=11 // pred_check
          %p626 = pneg %p228
        $region42: #{tpu_custom_call.1} parent=11 // pred_check_branch
          %628 = sbr.rel (%p626) target = $region44
        $region43: #{tpu_custom_call.1} parent=11 // pred_region
          _
        $region44: #{tpu_custom_call.1} parent=11 // pred_fallthru
          _
        // Predicated region
        $region45: #{tpu_custom_call.1} parent=11 // pred_check
          %p629 = pneg %p249
        $region46: #{tpu_custom_call.1} parent=11 // pred_check_branch
          %631 = sbr.rel (%p629) target = $region48
        $region47: #{tpu_custom_call.1} parent=11 // pred_region
          _
        $region48: #{tpu_custom_call.1} parent=11 // pred_fallthru
          _
        // Predicated region
        $region49: #{tpu_custom_call.1} parent=11 // pred_check
          %p632 = pneg %p270
        $region50: #{tpu_custom_call.1} parent=11 // pred_check_branch
          %634 = sbr.rel (%p632) target = $region52
        $region51: #{tpu_custom_call.1} parent=11 // pred_region
          _
        $region52: #{tpu_custom_call.1} parent=11 // pred_fallthru
          _
        // Predicated region
        $region53: #{tpu_custom_call.1} parent=11 // pred_check
          %p635 = pneg %p291
        $region54: #{tpu_custom_call.1} parent=11 // pred_check_branch
          %637 = sbr.rel (%p635) target = $region56
        $region55: #{tpu_custom_call.1} parent=11 // pred_region
          _
        $region56: #{tpu_custom_call.1} parent=11 // pred_fallthru
          _
        // Predicated region
        $region57: #{tpu_custom_call.1} parent=11 // pred_check
          %p638 = pneg %p312
        $region58: #{tpu_custom_call.1} parent=11 // pred_check_branch
          %640 = sbr.rel (%p638) target = $region60
        $region59: #{tpu_custom_call.1} parent=11 // pred_region
          _
        $region60: #{tpu_custom_call.1} parent=11 // pred_fallthru
          _
        // Predicated region
        $region61: #{tpu_custom_call.1} parent=11 // pred_check
          %p641 = pneg %p333
        $region62: #{tpu_custom_call.1} parent=11 // pred_check_branch
          %643 = sbr.rel (%p641) target = $region64
        $region63: #{tpu_custom_call.1} parent=11 // pred_region
          _
        $region64: #{tpu_custom_call.1} parent=11 // pred_fallthru
          _
        // Predicated region
        $region65: #{tpu_custom_call.1} parent=11 // pred_check
          %p644 = pneg %p354
        $region66: #{tpu_custom_call.1} parent=11 // pred_check_branch
          %646 = sbr.rel (%p644) target = $region68
        $region67: #{tpu_custom_call.1} parent=11 // pred_region
          _
        $region68: #{tpu_custom_call.1} parent=11 // pred_fallthru
          _
        // Predicated region
        $region69: #{tpu_custom_call.1} parent=11 // pred_check
          %p647 = pneg %p375
        $region70: #{tpu_custom_call.1} parent=11 // pred_check_branch
          %649 = sbr.rel (%p647) target = $region72
        $region71: #{tpu_custom_call.1} parent=11 // pred_region
          _
        $region72: #{tpu_custom_call.1} parent=11 // pred_fallthru
          _
        // Predicated region
        $region73: #{tpu_custom_call.1} parent=11 // pred_check
          %p650 = pneg %p396
        $region74: #{tpu_custom_call.1} parent=11 // pred_check_branch
          %652 = sbr.rel (%p650) target = $region76
        $region75: #{tpu_custom_call.1} parent=11 // pred_region
          _
        $region76: #{tpu_custom_call.1} parent=11 // pred_fallthru
          _
        // Predicated region
        $region77: #{tpu_custom_call.1} parent=11 // pred_check
          %p653 = pneg %p417
        $region78: #{tpu_custom_call.1} parent=11 // pred_check_branch
          %655 = sbr.rel (%p653) target = $region80
        $region79: #{tpu_custom_call.1} parent=11 // pred_region
          _
        $region80: #{tpu_custom_call.1} parent=11 // pred_fallthru
          _
        // Predicated region
        $region81: #{tpu_custom_call.1} parent=11 // pred_check
          %p656 = pneg %p438
        $region82: #{tpu_custom_call.1} parent=11 // pred_check_branch
          %658 = sbr.rel (%p656) target = $region84
        $region83: #{tpu_custom_call.1} parent=11 // pred_region
          _
        $region84: #{tpu_custom_call.1} parent=11 // pred_fallthru
          _
        // Predicated region
        $region85: #{tpu_custom_call.1} parent=11 // pred_check
          %p659 = pneg %p459
        $region86: #{tpu_custom_call.1} parent=11 // pred_check_branch
          %661 = sbr.rel (%p659) target = $region88
        $region87: #{tpu_custom_call.1} parent=11 // pred_region
          _
        $region88: #{tpu_custom_call.1} parent=11 // pred_fallthru
          _
        // Predicated region
        $region89: #{tpu_custom_call.1} parent=11 // pred_check
          %p662 = pneg %p480
        $region90: #{tpu_custom_call.1} parent=11 // pred_check_branch
          %664 = sbr.rel (%p662) target = $region92
        $region91: #{tpu_custom_call.1} parent=11 // pred_region
          _
        $region92: #{tpu_custom_call.1} parent=11 // pred_fallthru
          _
        // Predicated region
        $region93: #{tpu_custom_call.1} parent=11 // pred_check
          %p665 = pneg %p501
        $region94: #{tpu_custom_call.1} parent=11 // pred_check_branch
          %667 = sbr.rel (%p665) target = $region96
        $region95: #{tpu_custom_call.1} parent=11 // pred_region
          _
        $region96: #{tpu_custom_call.1} parent=11 // pred_fallthru
          _
        // Predicated region
        $region97: #{tpu_custom_call.1} parent=11 // pred_check
          %p668 = pneg %p522
        $region98: #{tpu_custom_call.1} parent=11 // pred_check_branch
          %670 = sbr.rel (%p668) target = $region100
        $region99: #{tpu_custom_call.1} parent=11 // pred_region
          _
        $region100: #{tpu_custom_call.1} parent=11 // pred_fallthru
          _
        // Predicated region
        $region101: #{tpu_custom_call.1} parent=11 // pred_check
          %p671 = pneg %p543
        $region102: #{tpu_custom_call.1} parent=11 // pred_check_branch
          %673 = sbr.rel (%p671) target = $region104
        $region103: #{tpu_custom_call.1} parent=11 // pred_region
          _
        $region104: #{tpu_custom_call.1} parent=11 // pred_fallthru
          _
        // Predicated region
        $region105: #{tpu_custom_call.1} parent=11 // pred_check
          %p674 = pneg %p564
        $region106: #{tpu_custom_call.1} parent=11 // pred_check_branch
          %676 = sbr.rel (%p674) target = $region108
        $region107: #{tpu_custom_call.1} parent=11 // pred_region
          _
        $region108: #{tpu_custom_call.1} parent=11 // pred_fallthru
          _
      $region12: #{tpu_custom_call.1} parent=5 // pred_fallthru
        _
      %p677 = scmp.lt.s32.totalorder %s34, 2
      // Predicated region
      $region109: #{tpu_custom_call.1} parent=5 // pred_check
        %p678 = pneg %p677
      $region110: #{tpu_custom_call.1} parent=5 // pred_check_branch
        %680 = sbr.rel (%p678) target = $region112
      $region111: #{tpu_custom_call.1} parent=5 // pred_region
        // Predicated region
        $region113: #{tpu_custom_call.1} parent=111 // pred_check
          %p681 = pneg %p54
        $region114: #{tpu_custom_call.1} parent=111 // pred_check_branch
          %683 = sbr.rel (%p681) target = $region116
        $region115: #{tpu_custom_call.1} parent=111 // pred_region
          %p684 = scmp.lt.s32.totalorder %s34, 1
          %s685 = scalar_select %p684, %s34, 1
          %s686 = smul.addr %s685, 4
          %s687 = scalar_lea.vmem %s0, %s686
        $region116: #{tpu_custom_call.1} parent=111 // pred_fallthru
          _
      $region112: #{tpu_custom_call.1} parent=5 // pred_fallthru
        _
      %p688 = scmp.le.s32.totalorder 1, %s34
      %p689 = scmp.lt.s32.totalorder %s34, 3
      %p690 = pnand %p688, %p689
      %p691 = pneg %p690
      // Predicated region
      $region117: #{tpu_custom_call.1} parent=5 // pred_check
        _
      $region118: #{tpu_custom_call.1} parent=5 // pred_check_branch
        %693 = sbr.rel (%p690) target = $region120
      $region119: #{tpu_custom_call.1} parent=5 // pred_region
        %s694 = ssub.s32 %s34, 1
        %p695 = scmp.lt.s32.totalorder %s39, 1
        %s696 = scalar_select %p695, %s39, 1
        %s697 = smul.addr %s696, 4
        %s698 = scalar_lea.vmem %s0, %s697
        %p699 = pneg %p60
        %p700 = pneg %p57
        %p701 = pneg %p81
        %p702 = pneg %p78
        %p703 = pneg %p102
        %p704 = pneg %p99
        %p705 = pneg %p123
        %p706 = pneg %p120
        %p707 = pneg %p144
        %p708 = pneg %p141
        %p709 = pneg %p165
        %p710 = pneg %p162
        %p711 = pneg %p186
        %p712 = pneg %p183
        %p713 = pneg %p207
        %p714 = pneg %p204
        %p715 = pneg %p228
        %p716 = pneg %p225
        %p717 = pneg %p249
        %p718 = pneg %p246
        %p719 = pneg %p270
        %p720 = pneg %p267
        %p721 = pneg %p291
        %p722 = pneg %p288
        %p723 = pneg %p312
        %p724 = pneg %p309
        %p725 = pneg %p333
        %p726 = pneg %p330
        %p727 = pneg %p354
        %p728 = pneg %p351
        %p729 = pneg %p375
        %p730 = pneg %p372
        %p731 = pneg %p396
        %p732 = pneg %p393
        %p733 = pneg %p417
        %p734 = pneg %p414
        %p735 = pneg %p438
        %p736 = pneg %p435
        %p737 = pneg %p459
        %p738 = pneg %p456
        %p739 = pneg %p480
        %p740 = pneg %p477
        %p741 = pneg %p501
        %p742 = pneg %p498
        %p743 = pneg %p522
        %p744 = pneg %p519
        %p745 = pneg %p543
        %p746 = pneg %p540
        %p747 = pneg %p564
        %p748 = pneg %p561
        %p749 = pneg %p590
        %p750 = pneg %p587
        %s751 = sand.u32 %s577, 1
        %s752 = scalar_lea.sflag [#allocation3], %s751
        %s753 = sand.u32 %s577, 1
        %s754 = smul.addr %s753, 24
        %s755 = scalar_lea.vmem [#allocation2], %s754
        %p756 = scmp.lt.s32.totalorder %s39, 1
        %s757 = scalar_select %p756, %s39, 1
        %s758 = smul.addr %s757, 4
        %s759 = scalar_lea.vmem %s0, %s758
        %v761 = vld [vmem:[%s759] sm:$0xf]
        %v762 = vlaneseq
        %v763 = vand.u32 %v762, 127
        %v764 = vld [vmem:[%s1] sm:$0xf]
        %v765 = vld [vmem:[%s1 + $0x4] sm:$0xf]
        %v766 = vld [vmem:[%s1 + $0x8] sm:$0xf]
        %v767 = vld [vmem:[%s1 + $0xc] sm:$0xf]
        %v768 = vpack.c.bf16 %v761, %v761
        %v769 = vld [vmem:[%s2] sm:$0xff]
        %v770 = vld [vmem:[%s2 + $0x8] sm:$0xff]
        %v771 = vld [vmem:[%s2 + $0x10] sm:$0xff]
        %v772 = vld [vmem:[%s2 + $0x18] sm:$0xff]
        %774 = vset.pattern.permute.xlu0 0
        %775 = vperm.xlu0 %774, %v769
        %v776 = vpop.permute.xlu0 %775
        %779 = vset.pattern.permute.xlu0 0
        %780 = vperm.xlu0 %779, %v770
        %v781 = vpop.permute.xlu0 %780
        %784 = vset.pattern.permute.xlu0 0
        %785 = vperm.xlu0 %784, %v771
        %v786 = vpop.permute.xlu0 %785
        %789 = vset.pattern.permute.xlu0 0
        %790 = vperm.xlu0 %789, %v772
        %v791 = vpop.permute.xlu0 %790
        %v797 = vunpack.c.l.b16 %v764
        %v798 = vunpack.c.l.b16 %v765
        %v799 = vunpack.c.l.b16 %v766
        %v800 = vunpack.c.l.b16 %v767
        %v801 = vpack.c.b16 %v798, %v797
        %v802 = vpack.c.b16 %v800, %v799
        %vm803 = vcmask 31744
        %v805 = vsel %vm803, %v801, 0
        %v808 = vsel %vm803, %v802, 0
        %vm810 = vcmask 1041408
        %v812 = vsel %vm810, %v768, 0
        %814 = vmatpush.bf16.msra.mxu0 0
        %815 = vmatpush.bf16.msra.mxu0 0
        %816 = vmatpush.bf16.msra.mxu0 0
        %817 = vmatpush.bf16.msra.mxu0 0
        %818 = vmatpush.bf16.msra.mxu0 0
        %819 = vmatpush.bf16.msra.mxu0 0
        %820 = vmatpush.bf16.msra.mxu0 0
        %821 = vmatpush.bf16.msra.mxu0 %v812
        %822 = vmatmul.bf16.gmra.mxu0 %v805
        %v823 = vpop.f32.mrf.mxu0
        %v824 = vadd.f32 %v776, %v823
        %v825 = vpop.f32.mrf.mxu0
        %v826 = vadd.f32 %v781, %v825
        %827 = vmatmul.bf16.gmra.mxu0 %v808
        %v828 = vpop.f32.mrf.mxu0
        %v829 = vadd.f32 %v786, %v828
        %v830 = vpop.f32.mrf.mxu0
        %v831 = vadd.f32 %v791, %v830
        %832 = vdwg.mxu0
        %vm833 = vcmp.ge.s32.totalorder %v763, 1
        %834 = vrot.lane.b32.xlu0 %v824, 1
        %v835 = vpop.permute.xlu0 %834
        %836 = vrot.lane.b32.xlu0 %v826, 1
        %v837 = vpop.permute.xlu0 %836
        %838 = vrot.lane.b32.xlu0 %v829, 1
        %v839 = vpop.permute.xlu0 %838
        %840 = vrot.lane.b32.xlu0 %v831, 1
        %v841 = vpop.permute.xlu0 %840
        %v842 = vsel %vm833, 1, 0
        %vm843 = vcmp.eq.s32.totalorder %v842, 1
        %v844 = vsel %vm843, %v835, 0.0
        %v845 = vsel %vm843, %v837, 0.0
        %v846 = vsel %vm843, %v839, 0.0
        %v847 = vsel %vm843, %v841, 0.0
        %vm848 = vcmp.lt.s32.totalorder %v763, 127
        %849 = vrot.lane.b32.xlu0 %v824, 127
        %v850 = vpop.permute.xlu0 %849
        %851 = vrot.lane.b32.xlu0 %v826, 127
        %v852 = vpop.permute.xlu0 %851
        %853 = vrot.lane.b32.xlu0 %v829, 127
        %v854 = vpop.permute.xlu0 %853
        %855 = vrot.lane.b32.xlu0 %v831, 127
        %v856 = vpop.permute.xlu0 %855
        %v857 = vsel %vm848, 1, 0
        %vm858 = vcmp.eq.s32.totalorder %v857, 1
        %v859 = vsel %vm858, %v850, 0.0
        %v860 = vsel %vm858, %v852, 0.0
        %v861 = vsel %vm858, %v854, 0.0
        %v862 = vsel %vm858, %v856, 0.0
        %v863 = vpack.c.bf16 %v845, %v844
        %v864 = vpack.c.bf16 %v847, %v846
        %v865 = vpack.c.bf16 %v826, %v824
        %v866 = vpack.c.bf16 %v831, %v829
        %v867 = vpack.c.bf16 %v860, %v859
        %v868 = vpack.c.bf16 %v862, %v861
        %v869 = vld [vmem:[%s3] sm:$0xf]
        %v870 = vld [vmem:[%s3 + $0x4] sm:$0xf]
        %v871 = vld [vmem:[%s3 + $0x8] sm:$0xf]
        %v872 = vld [vmem:[%s3 + $0xc] sm:$0xf]
        %v873 = vld [vmem:[%s4] sm:$0xff]
        %v874 = vld [vmem:[%s4 + $0x8] sm:$0xff]
        %v875 = vld [vmem:[%s4 + $0x10] sm:$0xff]
        %v876 = vld [vmem:[%s4 + $0x18] sm:$0xff]
        %878 = vset.pattern.permute.xlu0 0
        %879 = vperm.xlu0 %878, %v873
        %v880 = vpop.permute.xlu0 %879
        %883 = vset.pattern.permute.xlu0 0
        %884 = vperm.xlu0 %883, %v874
        %v885 = vpop.permute.xlu0 %884
        %888 = vset.pattern.permute.xlu0 0
        %889 = vperm.xlu0 %888, %v875
        %v890 = vpop.permute.xlu0 %889
        %893 = vset.pattern.permute.xlu0 0
        %894 = vperm.xlu0 %893, %v876
        %v895 = vpop.permute.xlu0 %894
        %v901 = vunpack.c.l.b16 %v869
        %v902 = vunpack.c.l.b16 %v870
        %v903 = vunpack.c.l.b16 %v871
        %v904 = vunpack.c.l.b16 %v872
        %v905 = vpack.c.b16 %v902, %v901
        %v906 = vpack.c.b16 %v904, %v903
        %vm907 = vcmask 785408
        %v909 = vsel %vm907, %v905, 0
        %v912 = vsel %vm907, %v906, 0
        %914 = vmatpush.bf16.msra.mxu0 0
        %915 = vmatpush.bf16.msra.mxu0 0
        %916 = vmatpush.bf16.msra.mxu0 %v868
        %917 = vmatpush.bf16.msra.mxu0 %v867
        %918 = vmatpush.bf16.msra.mxu0 %v866
        %919 = vmatpush.bf16.msra.mxu0 %v865
        %920 = vmatpush.bf16.msra.mxu0 %v864
        %921 = vmatpush.bf16.msra.mxu0 %v863
        %922 = vmatmul.bf16.gmra.mxu0 %v909
        %v923 = vpop.f32.mrf.mxu0
        %v924 = vadd.f32 %v880, %v923
        %v925 = vpop.f32.mrf.mxu0
        %v926 = vadd.f32 %v885, %v925
        %927 = vmatmul.bf16.gmra.mxu0 %v912
        %v928 = vpop.f32.mrf.mxu0
        %v929 = vadd.f32 %v890, %v928
        %v930 = vpop.f32.mrf.mxu0
        %v931 = vadd.f32 %v895, %v930
        %932 = vdwg.mxu0
        %v933 = vmax.f32 %v924, 0.0
        %v934 = vmax.f32 %v926, 0.0
        %v935 = vmax.f32 %v929, 0.0
        %v936 = vmax.f32 %v931, 0.0
        %v937 = vpack.c.bf16 %v934, %v933
        %v938 = vpack.c.bf16 %v936, %v935
        %v939 = vld [vmem:[%s5] sm:$0xf]
        %v940 = vld [vmem:[%s5 + $0x4] sm:$0xf]
        %v941 = vld [vmem:[%s5 + $0x8] sm:$0xf]
        %v942 = vld [vmem:[%s5 + $0xc] sm:$0xf]
        %v943 = vld [vmem:[%s6] sm:$0xff]
        %v944 = vld [vmem:[%s6 + $0x8] sm:$0xff]
        %v945 = vld [vmem:[%s6 + $0x10] sm:$0xff]
        %v946 = vld [vmem:[%s6 + $0x18] sm:$0xff]
        %948 = vset.pattern.permute.xlu0 0
        %949 = vperm.xlu0 %948, %v943
        %v950 = vpop.permute.xlu0 %949
        %953 = vset.pattern.permute.xlu0 0
        %954 = vperm.xlu0 %953, %v944
        %v955 = vpop.permute.xlu0 %954
        %958 = vset.pattern.permute.xlu0 0
        %959 = vperm.xlu0 %958, %v945
        %v960 = vpop.permute.xlu0 %959
        %963 = vset.pattern.permute.xlu0 0
        %964 = vperm.xlu0 %963, %v946
        %v965 = vpop.permute.xlu0 %964
        %v971 = vunpack.c.l.b16 %v939
        %v972 = vunpack.c.l.b16 %v940
        %v973 = vunpack.c.l.b16 %v941
        %v974 = vunpack.c.l.b16 %v942
        %v975 = vpack.c.b16 %v972, %v971
        %v976 = vpack.c.b16 %v974, %v973
        %vm977 = vcmask 261120
        %v979 = vsel %vm977, %v975, 0
        %v982 = vsel %vm977, %v976, 0
        %984 = vmatpush.bf16.msra.mxu0 0
        %985 = vmatpush.bf16.msra.mxu0 0
        %986 = vmatpush.bf16.msra.mxu0 0
        %987 = vmatpush.bf16.msra.mxu0 0
        %988 = vmatpush.bf16.msra.mxu0 0
        %989 = vmatpush.bf16.msra.mxu0 0
        %990 = vmatpush.bf16.msra.mxu0 %v938
        %991 = vmatpush.bf16.msra.mxu0 %v937
        %992 = vmatmul.bf16.gmra.mxu0 %v979
        %v993 = vpop.f32.mrf.mxu0
        %v994 = vadd.f32 %v950, %v993
        %v995 = vpop.f32.mrf.mxu0
        %v996 = vadd.f32 %v955, %v995
        %997 = vmatmul.bf16.gmra.mxu0 %v982
        %v998 = vpop.f32.mrf.mxu0
        %v999 = vadd.f32 %v960, %v998
        %v1000 = vpop.f32.mrf.mxu0
        %v1001 = vadd.f32 %v965, %v1000
        %1002 = vdwg.mxu0
        %v1003 = vadd.f32 %v824, %v994
        %v1004 = vadd.f32 %v826, %v996
        %v1005 = vadd.f32 %v829, %v999
        %v1006 = vadd.f32 %v831, %v1001
        %vm1007 = vcmp.ge.s32.totalorder %v763, 2
        %1008 = vrot.lane.b32.xlu0 %v1003, 2
        %v1009 = vpop.permute.xlu0 %1008
        %1010 = vrot.lane.b32.xlu0 %v1004, 2
        %v1011 = vpop.permute.xlu0 %1010
        %1012 = vrot.lane.b32.xlu0 %v1005, 2
        %v1013 = vpop.permute.xlu0 %1012
        %1014 = vrot.lane.b32.xlu0 %v1006, 2
        %v1015 = vpop.permute.xlu0 %1014
        %v1016 = vsel %vm1007, 1, 0
        %vm1017 = vcmp.eq.s32.totalorder %v1016, 1
        %v1018 = vsel %vm1017, %v1009, 0.0
        %v1019 = vsel %vm1017, %v1011, 0.0
        %v1020 = vsel %vm1017, %v1013, 0.0
        %v1021 = vsel %vm1017, %v1015, 0.0
        %vm1022 = vcmp.lt.s32.totalorder %v763, 126
        %1023 = vrot.lane.b32.xlu0 %v1003, 126
        %v1024 = vpop.permute.xlu0 %1023
        %1025 = vrot.lane.b32.xlu0 %v1004, 126
        %v1026 = vpop.permute.xlu0 %1025
        %1027 = vrot.lane.b32.xlu0 %v1005, 126
        %v1028 = vpop.permute.xlu0 %1027
        %1029 = vrot.lane.b32.xlu0 %v1006, 126
        %v1030 = vpop.permute.xlu0 %1029
        %v1031 = vsel %vm1022, 1, 0
        %vm1032 = vcmp.eq.s32.totalorder %v1031, 1
        %v1033 = vsel %vm1032, %v1024, 0.0
        %v1034 = vsel %vm1032, %v1026, 0.0
        %v1035 = vsel %vm1032, %v1028, 0.0
        %v1036 = vsel %vm1032, %v1030, 0.0
        %v1037 = vpack.c.bf16 %v1019, %v1018
        %v1038 = vpack.c.bf16 %v1021, %v1020
        %v1039 = vpack.c.bf16 %v1004, %v1003
        %v1040 = vpack.c.bf16 %v1006, %v1005
        %v1041 = vpack.c.bf16 %v1034, %v1033
        %v1042 = vpack.c.bf16 %v1036, %v1035
        %s1043 = scalar_lea.vmem %s3, 16
        %v1044 = vld [vmem:[%s1043] sm:$0xf]
        %v1045 = vld [vmem:[%s1043 + $0x4] sm:$0xf]
        %v1046 = vld [vmem:[%s1043 + $0x8] sm:$0xf]
        %v1047 = vld [vmem:[%s1043 + $0xc] sm:$0xf]
        %s1048 = scalar_lea.vmem %s4, 32
        %v1049 = vld [vmem:[%s1048] sm:$0xff]
        %v1050 = vld [vmem:[%s1048 + $0x8] sm:$0xff]
        %v1051 = vld [vmem:[%s1048 + $0x10] sm:$0xff]
        %v1052 = vld [vmem:[%s1048 + $0x18] sm:$0xff]
        %1054 = vset.pattern.permute.xlu0 0
        %1055 = vperm.xlu0 %1054, %v1049
        %v1056 = vpop.permute.xlu0 %1055
        %1059 = vset.pattern.permute.xlu0 0
        %1060 = vperm.xlu0 %1059, %v1050
        %v1061 = vpop.permute.xlu0 %1060
        %1064 = vset.pattern.permute.xlu0 0
        %1065 = vperm.xlu0 %1064, %v1051
        %v1066 = vpop.permute.xlu0 %1065
        %1069 = vset.pattern.permute.xlu0 0
        %1070 = vperm.xlu0 %1069, %v1052
        %v1071 = vpop.permute.xlu0 %1070
        %v1077 = vunpack.c.l.b16 %v1044
        %v1078 = vunpack.c.l.b16 %v1045
        %v1079 = vunpack.c.l.b16 %v1046
        %v1080 = vunpack.c.l.b16 %v1047
        %v1081 = vpack.c.b16 %v1078, %v1077
        %v1082 = vpack.c.b16 %v1080, %v1079
        %v1084 = vsel %vm907, %v1081, 0
        %v1087 = vsel %vm907, %v1082, 0
        %1089 = vmatpush.bf16.msra.mxu0 0
        %1090 = vmatpush.bf16.msra.mxu0 0
        %1091 = vmatpush.bf16.msra.mxu0 %v1042
        %1092 = vmatpush.bf16.msra.mxu0 %v1041
        %1093 = vmatpush.bf16.msra.mxu0 %v1040
        %1094 = vmatpush.bf16.msra.mxu0 %v1039
        %1095 = vmatpush.bf16.msra.mxu0 %v1038
        %1096 = vmatpush.bf16.msra.mxu0 %v1037
        %1097 = vmatmul.bf16.gmra.mxu0 %v1084
        %v1098 = vpop.f32.mrf.mxu0
        %v1099 = vadd.f32 %v1056, %v1098
        %v1100 = vpop.f32.mrf.mxu0
        %v1101 = vadd.f32 %v1061, %v1100
        %1102 = vmatmul.bf16.gmra.mxu0 %v1087
        %v1103 = vpop.f32.mrf.mxu0
        %v1104 = vadd.f32 %v1066, %v1103
        %v1105 = vpop.f32.mrf.mxu0
        %v1106 = vadd.f32 %v1071, %v1105
        %1107 = vdwg.mxu0
        %v1108 = vmax.f32 %v1099, 0.0
        %v1109 = vmax.f32 %v1101, 0.0
        %v1110 = vmax.f32 %v1104, 0.0
        %v1111 = vmax.f32 %v1106, 0.0
        %v1112 = vpack.c.bf16 %v1109, %v1108
        %v1113 = vpack.c.bf16 %v1111, %v1110
        %s1114 = scalar_lea.vmem %s5, 16
        %v1115 = vld [vmem:[%s1114] sm:$0xf]
        %v1116 = vld [vmem:[%s1114 + $0x4] sm:$0xf]
        %v1117 = vld [vmem:[%s1114 + $0x8] sm:$0xf]
        %v1118 = vld [vmem:[%s1114 + $0xc] sm:$0xf]
        %s1119 = scalar_lea.vmem %s6, 32
        %v1120 = vld [vmem:[%s1119] sm:$0xff]
        %v1121 = vld [vmem:[%s1119 + $0x8] sm:$0xff]
        %v1122 = vld [vmem:[%s1119 + $0x10] sm:$0xff]
        %v1123 = vld [vmem:[%s1119 + $0x18] sm:$0xff]
        %1125 = vset.pattern.permute.xlu0 0
        %1126 = vperm.xlu0 %1125, %v1120
        %v1127 = vpop.permute.xlu0 %1126
        %1130 = vset.pattern.permute.xlu0 0
        %1131 = vperm.xlu0 %1130, %v1121
        %v1132 = vpop.permute.xlu0 %1131
        %1135 = vset.pattern.permute.xlu0 0
        %1136 = vperm.xlu0 %1135, %v1122
        %v1137 = vpop.permute.xlu0 %1136
        %1140 = vset.pattern.permute.xlu0 0
        %1141 = vperm.xlu0 %1140, %v1123
        %v1142 = vpop.permute.xlu0 %1141
        %v1148 = vunpack.c.l.b16 %v1115
        %v1149 = vunpack.c.l.b16 %v1116
        %v1150 = vunpack.c.l.b16 %v1117
        %v1151 = vunpack.c.l.b16 %v1118
        %v1152 = vpack.c.b16 %v1149, %v1148
        %v1153 = vpack.c.b16 %v1151, %v1150
        %v1155 = vsel %vm977, %v1152, 0
        %v1158 = vsel %vm977, %v1153, 0
        %1160 = vmatpush.bf16.msra.mxu0 0
        %1161 = vmatpush.bf16.msra.mxu0 0
        %1162 = vmatpush.bf16.msra.mxu0 0
        %1163 = vmatpush.bf16.msra.mxu0 0
        %1164 = vmatpush.bf16.msra.mxu0 0
        %1165 = vmatpush.bf16.msra.mxu0 0
        %1166 = vmatpush.bf16.msra.mxu0 %v1113
        %1167 = vmatpush.bf16.msra.mxu0 %v1112
        %1168 = vmatmul.bf16.gmra.mxu0 %v1155
        %v1169 = vpop.f32.mrf.mxu0
        %v1170 = vadd.f32 %v1127, %v1169
        %v1171 = vpop.f32.mrf.mxu0
        %v1172 = vadd.f32 %v1132, %v1171
        %1173 = vmatmul.bf16.gmra.mxu0 %v1158
        %v1174 = vpop.f32.mrf.mxu0
        %v1175 = vadd.f32 %v1137, %v1174
        %v1176 = vpop.f32.mrf.mxu0
        %v1177 = vadd.f32 %v1142, %v1176
        %1178 = vdwg.mxu0
        %v1179 = vadd.f32 %v1003, %v1170
        %v1180 = vadd.f32 %v1004, %v1172
        %v1181 = vadd.f32 %v1005, %v1175
        %v1182 = vadd.f32 %v1006, %v1177
        %vm1183 = vcmp.ge.s32.totalorder %v763, 4
        %1184 = vrot.lane.b32.xlu0 %v1179, 4
        %v1185 = vpop.permute.xlu0 %1184
        %1186 = vrot.lane.b32.xlu0 %v1180, 4
        %v1187 = vpop.permute.xlu0 %1186
        %1188 = vrot.lane.b32.xlu0 %v1181, 4
        %v1189 = vpop.permute.xlu0 %1188
        %1190 = vrot.lane.b32.xlu0 %v1182, 4
        %v1191 = vpop.permute.xlu0 %1190
        %v1192 = vsel %vm1183, 1, 0
        %vm1193 = vcmp.eq.s32.totalorder %v1192, 1
        %v1194 = vsel %vm1193, %v1185, 0.0
        %v1195 = vsel %vm1193, %v1187, 0.0
        %v1196 = vsel %vm1193, %v1189, 0.0
        %v1197 = vsel %vm1193, %v1191, 0.0
        %vm1198 = vcmp.lt.s32.totalorder %v763, 124
        %1199 = vrot.lane.b32.xlu0 %v1179, 124
        %v1200 = vpop.permute.xlu0 %1199
        %1201 = vrot.lane.b32.xlu0 %v1180, 124
        %v1202 = vpop.permute.xlu0 %1201
        %1203 = vrot.lane.b32.xlu0 %v1181, 124
        %v1204 = vpop.permute.xlu0 %1203
        %1205 = vrot.lane.b32.xlu0 %v1182, 124
        %v1206 = vpop.permute.xlu0 %1205
        %v1207 = vsel %vm1198, 1, 0
        %vm1208 = vcmp.eq.s32.totalorder %v1207, 1
        %v1209 = vsel %vm1208, %v1200, 0.0
        %v1210 = vsel %vm1208, %v1202, 0.0
        %v1211 = vsel %vm1208, %v1204, 0.0
        %v1212 = vsel %vm1208, %v1206, 0.0
        %v1213 = vpack.c.bf16 %v1195, %v1194
        %v1214 = vpack.c.bf16 %v1197, %v1196
        %v1215 = vpack.c.bf16 %v1180, %v1179
        %v1216 = vpack.c.bf16 %v1182, %v1181
        %v1217 = vpack.c.bf16 %v1210, %v1209
        %v1218 = vpack.c.bf16 %v1212, %v1211
        %s1219 = scalar_lea.vmem %s3, 32
        %v1220 = vld [vmem:[%s1219] sm:$0xf]
        %v1221 = vld [vmem:[%s1219 + $0x4] sm:$0xf]
        %v1222 = vld [vmem:[%s1219 + $0x8] sm:$0xf]
        %v1223 = vld [vmem:[%s1219 + $0xc] sm:$0xf]
        %s1224 = scalar_lea.vmem %s4, 64
        %v1225 = vld [vmem:[%s1224] sm:$0xff]
        %v1226 = vld [vmem:[%s1224 + $0x8] sm:$0xff]
        %v1227 = vld [vmem:[%s1224 + $0x10] sm:$0xff]
        %v1228 = vld [vmem:[%s1224 + $0x18] sm:$0xff]
        %1230 = vset.pattern.permute.xlu0 0
        %1231 = vperm.xlu0 %1230, %v1225
        %v1232 = vpop.permute.xlu0 %1231
        %1235 = vset.pattern.permute.xlu0 0
        %1236 = vperm.xlu0 %1235, %v1226
        %v1237 = vpop.permute.xlu0 %1236
        %1240 = vset.pattern.permute.xlu0 0
        %1241 = vperm.xlu0 %1240, %v1227
        %v1242 = vpop.permute.xlu0 %1241
        %1245 = vset.pattern.permute.xlu0 0
        %1246 = vperm.xlu0 %1245, %v1228
        %v1247 = vpop.permute.xlu0 %1246
        %v1253 = vunpack.c.l.b16 %v1220
        %v1254 = vunpack.c.l.b16 %v1221
        %v1255 = vunpack.c.l.b16 %v1222
        %v1256 = vunpack.c.l.b16 %v1223
        %v1257 = vpack.c.b16 %v1254, %v1253
        %v1258 = vpack.c.b16 %v1256, %v1255
        %v1260 = vsel %vm907, %v1257, 0
        %v1263 = vsel %vm907, %v1258, 0
        %1265 = vmatpush.bf16.msra.mxu0 0
        %1266 = vmatpush.bf16.msra.mxu0 0
        %1267 = vmatpush.bf16.msra.mxu0 %v1218
        %1268 = vmatpush.bf16.msra.mxu0 %v1217
        %1269 = vmatpush.bf16.msra.mxu0 %v1216
        %1270 = vmatpush.bf16.msra.mxu0 %v1215
        %1271 = vmatpush.bf16.msra.mxu0 %v1214
        %1272 = vmatpush.bf16.msra.mxu0 %v1213
        %1273 = vmatmul.bf16.gmra.mxu0 %v1260
        %v1274 = vpop.f32.mrf.mxu0
        %v1275 = vadd.f32 %v1232, %v1274
        %v1276 = vpop.f32.mrf.mxu0
        %v1277 = vadd.f32 %v1237, %v1276
        %1278 = vmatmul.bf16.gmra.mxu0 %v1263
        %v1279 = vpop.f32.mrf.mxu0
        %v1280 = vadd.f32 %v1242, %v1279
        %v1281 = vpop.f32.mrf.mxu0
        %v1282 = vadd.f32 %v1247, %v1281
        %1283 = vdwg.mxu0
        %v1284 = vmax.f32 %v1275, 0.0
        %v1285 = vmax.f32 %v1277, 0.0
        %v1286 = vmax.f32 %v1280, 0.0
        %v1287 = vmax.f32 %v1282, 0.0
        %v1288 = vpack.c.bf16 %v1285, %v1284
        %v1289 = vpack.c.bf16 %v1287, %v1286
        %s1290 = scalar_lea.vmem %s5, 32
        %v1291 = vld [vmem:[%s1290] sm:$0xf]
        %v1292 = vld [vmem:[%s1290 + $0x4] sm:$0xf]
        %v1293 = vld [vmem:[%s1290 + $0x8] sm:$0xf]
        %v1294 = vld [vmem:[%s1290 + $0xc] sm:$0xf]
        %s1295 = scalar_lea.vmem %s6, 64
        %v1296 = vld [vmem:[%s1295] sm:$0xff]
        %v1297 = vld [vmem:[%s1295 + $0x8] sm:$0xff]
        %v1298 = vld [vmem:[%s1295 + $0x10] sm:$0xff]
        %v1299 = vld [vmem:[%s1295 + $0x18] sm:$0xff]
        %1301 = vset.pattern.permute.xlu0 0
        %1302 = vperm.xlu0 %1301, %v1296
        %v1303 = vpop.permute.xlu0 %1302
        %1306 = vset.pattern.permute.xlu0 0
        %1307 = vperm.xlu0 %1306, %v1297
        %v1308 = vpop.permute.xlu0 %1307
        %1311 = vset.pattern.permute.xlu0 0
        %1312 = vperm.xlu0 %1311, %v1298
        %v1313 = vpop.permute.xlu0 %1312
        %1316 = vset.pattern.permute.xlu0 0
        %1317 = vperm.xlu0 %1316, %v1299
        %v1318 = vpop.permute.xlu0 %1317
        %v1324 = vunpack.c.l.b16 %v1291
        %v1325 = vunpack.c.l.b16 %v1292
        %v1326 = vunpack.c.l.b16 %v1293
        %v1327 = vunpack.c.l.b16 %v1294
        %v1328 = vpack.c.b16 %v1325, %v1324
        %v1329 = vpack.c.b16 %v1327, %v1326
        %v1331 = vsel %vm977, %v1328, 0
        %v1334 = vsel %vm977, %v1329, 0
        %1336 = vmatpush.bf16.msra.mxu0 0
        %1337 = vmatpush.bf16.msra.mxu0 0
        %1338 = vmatpush.bf16.msra.mxu0 0
        %1339 = vmatpush.bf16.msra.mxu0 0
        %1340 = vmatpush.bf16.msra.mxu0 0
        %1341 = vmatpush.bf16.msra.mxu0 0
        %1342 = vmatpush.bf16.msra.mxu0 %v1289
        %1343 = vmatpush.bf16.msra.mxu0 %v1288
        %1344 = vmatmul.bf16.gmra.mxu0 %v1331
        %v1345 = vpop.f32.mrf.mxu0
        %v1346 = vadd.f32 %v1303, %v1345
        %v1347 = vpop.f32.mrf.mxu0
        %v1348 = vadd.f32 %v1308, %v1347
        %1349 = vmatmul.bf16.gmra.mxu0 %v1334
        %v1350 = vpop.f32.mrf.mxu0
        %v1351 = vadd.f32 %v1313, %v1350
        %v1352 = vpop.f32.mrf.mxu0
        %v1353 = vadd.f32 %v1318, %v1352
        %1354 = vdwg.mxu0
        %v1355 = vadd.f32 %v1179, %v1346
        %v1356 = vadd.f32 %v1180, %v1348
        %v1357 = vadd.f32 %v1181, %v1351
        %v1358 = vadd.f32 %v1182, %v1353
        %v1359 = vld [vmem:[%s7] sm:$0xf]
        %v1360 = vpack.c.bf16 %v1356, %v1355
        %v1361 = vpack.c.bf16 %v1358, %v1357
        %v1362 = vld [vmem:[%s8] sm:$0xff]
        %1364 = vset.pattern.permute.xlu0 0
        %1365 = vperm.xlu0 %1364, %v1362
        %v1366 = vpop.permute.xlu0 %1365
        %v1369 = vsel %vm977, %v1359, 0
        %1371 = vmatpush.bf16.msra.mxu0 0
        %1372 = vmatpush.bf16.msra.mxu0 0
        %1373 = vmatpush.bf16.msra.mxu0 0
        %1374 = vmatpush.bf16.msra.mxu0 0
        %1375 = vmatpush.bf16.msra.mxu0 0
        %1376 = vmatpush.bf16.msra.mxu0 0
        %1377 = vmatpush.bf16.msra.mxu0 %v1361
        %1378 = vmatpush.bf16.msra.mxu0 %v1360
        %1379 = vmatmul.bf16.gmra.mxu0 %v1369
        %v1380 = vpop.f32.mrf.mxu0
        %v1381 = vadd.f32 %v1366, %v1380
        %v1382 = vpop.f32.mrf.mxu0
        %1383 = vdwg.mxu0
        %1384 = vst [vmem:[%s755] sm:$0xff] %v1381
        %v1385 = vrot.slane %v1381, 4
        %v1386 = vmax.f32 %v1381, %v1385
        %v1387 = vrot.slane %v1386, 2
        %v1388 = vmax.f32 %v1386, %v1387
        %v1389 = vrot.slane %v1388, 1
        %v1390 = vmax.f32 %v1388, %v1389
        %v1391 = vsub.f32 %v1381, %v1390
        %v1392 = vmul.f32 %v1391, 1.442695
        %v1393 = vpow.pop %v1392
        %v1394 = vrot.slane %v1393, 4
        %v1395 = vadd.f32 %v1393, %v1394
        %v1396 = vrot.slane %v1395, 2
        %v1397 = vadd.f32 %v1395, %v1396
        %v1398 = vrot.slane %v1397, 1
        %v1399 = vadd.f32 %v1397, %v1398
        %v1400 = vrcp.pop %v1399
        %v1401 = vmul.f32 %v1393, %v1400
        %v1402 = vld [vmem:[%s9] sm:$0xf]
        %v1403 = vld [vmem:[%s9 + $0x4] sm:$0xf]
        %v1404 = vld [vmem:[%s9 + $0x8] sm:$0xf]
        %v1405 = vld [vmem:[%s9 + $0xc] sm:$0xf]
        %v1406 = vpack.c.bf16 %v1401, %v1401
        %v1407 = vld [vmem:[%s10] sm:$0xff]
        %v1408 = vld [vmem:[%s10 + $0x8] sm:$0xff]
        %v1409 = vld [vmem:[%s10 + $0x10] sm:$0xff]
        %v1410 = vld [vmem:[%s10 + $0x18] sm:$0xff]
        %1412 = vset.pattern.permute.xlu0 0
        %1413 = vperm.xlu0 %1412, %v1407
        %v1414 = vpop.permute.xlu0 %1413
        %1417 = vset.pattern.permute.xlu0 0
        %1418 = vperm.xlu0 %1417, %v1408
        %v1419 = vpop.permute.xlu0 %1418
        %1422 = vset.pattern.permute.xlu0 0
        %1423 = vperm.xlu0 %1422, %v1409
        %v1424 = vpop.permute.xlu0 %1423
        %1427 = vset.pattern.permute.xlu0 0
        %1428 = vperm.xlu0 %1427, %v1410
        %v1429 = vpop.permute.xlu0 %1428
        %v1435 = vunpack.c.l.b16 %v1402
        %v1436 = vunpack.c.l.b16 %v1403
        %v1437 = vunpack.c.l.b16 %v1404
        %v1438 = vunpack.c.l.b16 %v1405
        %v1439 = vpack.c.b16 %v1436, %v1435
        %v1440 = vpack.c.b16 %v1438, %v1437
        %vm1441 = vcmask 64512
        %v1443 = vsel %vm1441, %v1439, 0
        %v1446 = vsel %vm1441, %v1440, 0
        %vm1448 = vcmask 1043456
        %v1450 = vsel %vm1448, %v1406, 0
        %1452 = vmatpush.bf16.msra.mxu0 0
        %1453 = vmatpush.bf16.msra.mxu0 0
        %1454 = vmatpush.bf16.msra.mxu0 0
        %1455 = vmatpush.bf16.msra.mxu0 0
        %1456 = vmatpush.bf16.msra.mxu0 0
        %1457 = vmatpush.bf16.msra.mxu0 0
        %1458 = vmatpush.bf16.msra.mxu0 0
        %1459 = vmatpush.bf16.msra.mxu0 %v1450
        %1460 = vmatmul.bf16.gmra.mxu0 %v1443
        %v1461 = vpop.f32.mrf.mxu0
        %v1462 = vadd.f32 %v1414, %v1461
        %v1463 = vpop.f32.mrf.mxu0
        %v1464 = vadd.f32 %v1419, %v1463
        %1465 = vmatmul.bf16.gmra.mxu0 %v1446
        %v1466 = vpop.f32.mrf.mxu0
        %v1467 = vadd.f32 %v1424, %v1466
        %v1468 = vpop.f32.mrf.mxu0
        %v1469 = vadd.f32 %v1429, %v1468
        %1470 = vdwg.mxu0
        %1471 = vrot.lane.b32.xlu0 %v1462, 1
        %v1472 = vpop.permute.xlu0 %1471
        %1473 = vrot.lane.b32.xlu0 %v1464, 1
        %v1474 = vpop.permute.xlu0 %1473
        %1475 = vrot.lane.b32.xlu0 %v1467, 1
        %v1476 = vpop.permute.xlu0 %1475
        %1477 = vrot.lane.b32.xlu0 %v1469, 1
        %v1478 = vpop.permute.xlu0 %1477
        %v1479 = vsel %vm843, %v1472, 0.0
        %v1480 = vsel %vm843, %v1474, 0.0
        %v1481 = vsel %vm843, %v1476, 0.0
        %v1482 = vsel %vm843, %v1478, 0.0
        %1483 = vrot.lane.b32.xlu0 %v1462, 127
        %v1484 = vpop.permute.xlu0 %1483
        %1485 = vrot.lane.b32.xlu0 %v1464, 127
        %v1486 = vpop.permute.xlu0 %1485
        %1487 = vrot.lane.b32.xlu0 %v1467, 127
        %v1488 = vpop.permute.xlu0 %1487
        %1489 = vrot.lane.b32.xlu0 %v1469, 127
        %v1490 = vpop.permute.xlu0 %1489
        %v1491 = vsel %vm858, %v1484, 0.0
        %v1492 = vsel %vm858, %v1486, 0.0
        %v1493 = vsel %vm858, %v1488, 0.0
        %v1494 = vsel %vm858, %v1490, 0.0
        %v1495 = vpack.c.bf16 %v1480, %v1479
        %v1496 = vpack.c.bf16 %v1482, %v1481
        %v1497 = vpack.c.bf16 %v1464, %v1462
        %v1498 = vpack.c.bf16 %v1469, %v1467
        %v1499 = vpack.c.bf16 %v1492, %v1491
        %v1500 = vpack.c.bf16 %v1494, %v1493
        %v1501 = vld [vmem:[%s11] sm:$0xf]
        %v1502 = vld [vmem:[%s11 + $0x4] sm:$0xf]
        %v1503 = vld [vmem:[%s11 + $0x8] sm:$0xf]
        %v1504 = vld [vmem:[%s11 + $0xc] sm:$0xf]
        %v1505 = vld [vmem:[%s12] sm:$0xff]
        %v1506 = vld [vmem:[%s12 + $0x8] sm:$0xff]
        %v1507 = vld [vmem:[%s12 + $0x10] sm:$0xff]
        %v1508 = vld [vmem:[%s12 + $0x18] sm:$0xff]
        %1510 = vset.pattern.permute.xlu0 0
        %1511 = vperm.xlu0 %1510, %v1505
        %v1512 = vpop.permute.xlu0 %1511
        %1515 = vset.pattern.permute.xlu0 0
        %1516 = vperm.xlu0 %1515, %v1506
        %v1517 = vpop.permute.xlu0 %1516
        %1520 = vset.pattern.permute.xlu0 0
        %1521 = vperm.xlu0 %1520, %v1507
        %v1522 = vpop.permute.xlu0 %1521
        %1525 = vset.pattern.permute.xlu0 0
        %1526 = vperm.xlu0 %1525, %v1508
        %v1527 = vpop.permute.xlu0 %1526
        %v1533 = vunpack.c.l.b16 %v1501
        %v1534 = vunpack.c.l.b16 %v1502
        %v1535 = vunpack.c.l.b16 %v1503
        %v1536 = vunpack.c.l.b16 %v1504
        %v1537 = vpack.c.b16 %v1534, %v1533
        %v1538 = vpack.c.b16 %v1536, %v1535
        %v1540 = vsel %vm907, %v1537, 0
        %v1543 = vsel %vm907, %v1538, 0
        %1545 = vmatpush.bf16.msra.mxu0 0
        %1546 = vmatpush.bf16.msra.mxu0 0
        %1547 = vmatpush.bf16.msra.mxu0 %v1500
        %1548 = vmatpush.bf16.msra.mxu0 %v1499
        %1549 = vmatpush.bf16.msra.mxu0 %v1498
        %1550 = vmatpush.bf16.msra.mxu0 %v1497
        %1551 = vmatpush.bf16.msra.mxu0 %v1496
        %1552 = vmatpush.bf16.msra.mxu0 %v1495
        %1553 = vmatmul.bf16.gmra.mxu0 %v1540
        %v1554 = vpop.f32.mrf.mxu0
        %v1555 = vadd.f32 %v1512, %v1554
        %v1556 = vpop.f32.mrf.mxu0
        %v1557 = vadd.f32 %v1517, %v1556
        %1558 = vmatmul.bf16.gmra.mxu0 %v1543
        %v1559 = vpop.f32.mrf.mxu0
        %v1560 = vadd.f32 %v1522, %v1559
        %v1561 = vpop.f32.mrf.mxu0
        %v1562 = vadd.f32 %v1527, %v1561
        %1563 = vdwg.mxu0
        %v1564 = vmax.f32 %v1555, 0.0
        %v1565 = vmax.f32 %v1557, 0.0
        %v1566 = vmax.f32 %v1560, 0.0
        %v1567 = vmax.f32 %v1562, 0.0
        %v1568 = vpack.c.bf16 %v1565, %v1564
        %v1569 = vpack.c.bf16 %v1567, %v1566
        %v1570 = vld [vmem:[%s13] sm:$0xf]
        %v1571 = vld [vmem:[%s13 + $0x4] sm:$0xf]
        %v1572 = vld [vmem:[%s13 + $0x8] sm:$0xf]
        %v1573 = vld [vmem:[%s13 + $0xc] sm:$0xf]
        %v1574 = vld [vmem:[%s14] sm:$0xff]
        %v1575 = vld [vmem:[%s14 + $0x8] sm:$0xff]
        %v1576 = vld [vmem:[%s14 + $0x10] sm:$0xff]
        %v1577 = vld [vmem:[%s14 + $0x18] sm:$0xff]
        %1579 = vset.pattern.permute.xlu0 0
        %1580 = vperm.xlu0 %1579, %v1574
        %v1581 = vpop.permute.xlu0 %1580
        %1584 = vset.pattern.permute.xlu0 0
        %1585 = vperm.xlu0 %1584, %v1575
        %v1586 = vpop.permute.xlu0 %1585
        %1589 = vset.pattern.permute.xlu0 0
        %1590 = vperm.xlu0 %1589, %v1576
        %v1591 = vpop.permute.xlu0 %1590
        %1594 = vset.pattern.permute.xlu0 0
        %1595 = vperm.xlu0 %1594, %v1577
        %v1596 = vpop.permute.xlu0 %1595
        %v1602 = vunpack.c.l.b16 %v1570
        %v1603 = vunpack.c.l.b16 %v1571
        %v1604 = vunpack.c.l.b16 %v1572
        %v1605 = vunpack.c.l.b16 %v1573
        %v1606 = vpack.c.b16 %v1603, %v1602
        %v1607 = vpack.c.b16 %v1605, %v1604
        %v1609 = vsel %vm977, %v1606, 0
        %v1612 = vsel %vm977, %v1607, 0
        %1614 = vmatpush.bf16.msra.mxu0 0
        %1615 = vmatpush.bf16.msra.mxu0 0
        %1616 = vmatpush.bf16.msra.mxu0 0
        %1617 = vmatpush.bf16.msra.mxu0 0
        %1618 = vmatpush.bf16.msra.mxu0 0
        %1619 = vmatpush.bf16.msra.mxu0 0
        %1620 = vmatpush.bf16.msra.mxu0 %v1569
        %1621 = vmatpush.bf16.msra.mxu0 %v1568
        %1622 = vmatmul.bf16.gmra.mxu0 %v1609
        %v1623 = vpop.f32.mrf.mxu0
        %v1624 = vadd.f32 %v1581, %v1623
        %v1625 = vpop.f32.mrf.mxu0
        %v1626 = vadd.f32 %v1586, %v1625
        %1627 = vmatmul.bf16.gmra.mxu0 %v1612
        %v1628 = vpop.f32.mrf.mxu0
        %v1629 = vadd.f32 %v1591, %v1628
        %v1630 = vpop.f32.mrf.mxu0
        %v1631 = vadd.f32 %v1596, %v1630
        %1632 = vdwg.mxu0
        %v1633 = vadd.f32 %v1462, %v1624
        %v1634 = vadd.f32 %v1464, %v1626
        %v1635 = vadd.f32 %v1467, %v1629
        %v1636 = vadd.f32 %v1469, %v1631
        %1637 = vrot.lane.b32.xlu0 %v1633, 2
        %v1638 = vpop.permute.xlu0 %1637
        %1639 = vrot.lane.b32.xlu0 %v1634, 2
        %v1640 = vpop.permute.xlu0 %1639
        %1641 = vrot.lane.b32.xlu0 %v1635, 2
        %v1642 = vpop.permute.xlu0 %1641
        %1643 = vrot.lane.b32.xlu0 %v1636, 2
        %v1644 = vpop.permute.xlu0 %1643
        %v1645 = vsel %vm1017, %v1638, 0.0
        %v1646 = vsel %vm1017, %v1640, 0.0
        %v1647 = vsel %vm1017, %v1642, 0.0
        %v1648 = vsel %vm1017, %v1644, 0.0
        %1649 = vrot.lane.b32.xlu0 %v1633, 126
        %v1650 = vpop.permute.xlu0 %1649
        %1651 = vrot.lane.b32.xlu0 %v1634, 126
        %v1652 = vpop.permute.xlu0 %1651
        %1653 = vrot.lane.b32.xlu0 %v1635, 126
        %v1654 = vpop.permute.xlu0 %1653
        %1655 = vrot.lane.b32.xlu0 %v1636, 126
        %v1656 = vpop.permute.xlu0 %1655
        %v1657 = vsel %vm1032, %v1650, 0.0
        %v1658 = vsel %vm1032, %v1652, 0.0
        %v1659 = vsel %vm1032, %v1654, 0.0
        %v1660 = vsel %vm1032, %v1656, 0.0
        %v1661 = vpack.c.bf16 %v1646, %v1645
        %v1662 = vpack.c.bf16 %v1648, %v1647
        %v1663 = vpack.c.bf16 %v1634, %v1633
        %v1664 = vpack.c.bf16 %v1636, %v1635
        %v1665 = vpack.c.bf16 %v1658, %v1657
        %v1666 = vpack.c.bf16 %v1660, %v1659
        %s1667 = scalar_lea.vmem %s11, 16
        %v1668 = vld [vmem:[%s1667] sm:$0xf]
        %v1669 = vld [vmem:[%s1667 + $0x4] sm:$0xf]
        %v1670 = vld [vmem:[%s1667 + $0x8] sm:$0xf]
        %v1671 = vld [vmem:[%s1667 + $0xc] sm:$0xf]
        %s1672 = scalar_lea.vmem %s12, 32
        %v1673 = vld [vmem:[%s1672] sm:$0xff]
        %v1674 = vld [vmem:[%s1672 + $0x8] sm:$0xff]
        %v1675 = vld [vmem:[%s1672 + $0x10] sm:$0xff]
        %v1676 = vld [vmem:[%s1672 + $0x18] sm:$0xff]
        %1678 = vset.pattern.permute.xlu0 0
        %1679 = vperm.xlu0 %1678, %v1673
        %v1680 = vpop.permute.xlu0 %1679
        %1683 = vset.pattern.permute.xlu0 0
        %1684 = vperm.xlu0 %1683, %v1674
        %v1685 = vpop.permute.xlu0 %1684
        %1688 = vset.pattern.permute.xlu0 0
        %1689 = vperm.xlu0 %1688, %v1675
        %v1690 = vpop.permute.xlu0 %1689
        %1693 = vset.pattern.permute.xlu0 0
        %1694 = vperm.xlu0 %1693, %v1676
        %v1695 = vpop.permute.xlu0 %1694
        %v1701 = vunpack.c.l.b16 %v1668
        %v1702 = vunpack.c.l.b16 %v1669
        %v1703 = vunpack.c.l.b16 %v1670
        %v1704 = vunpack.c.l.b16 %v1671
        %v1705 = vpack.c.b16 %v1702, %v1701
        %v1706 = vpack.c.b16 %v1704, %v1703
        %v1708 = vsel %vm907, %v1705, 0
        %v1711 = vsel %vm907, %v1706, 0
        %1713 = vmatpush.bf16.msra.mxu0 0
        %1714 = vmatpush.bf16.msra.mxu0 0
        %1715 = vmatpush.bf16.msra.mxu0 %v1666
        %1716 = vmatpush.bf16.msra.mxu0 %v1665
        %1717 = vmatpush.bf16.msra.mxu0 %v1664
        %1718 = vmatpush.bf16.msra.mxu0 %v1663
        %1719 = vmatpush.bf16.msra.mxu0 %v1662
        %1720 = vmatpush.bf16.msra.mxu0 %v1661
        %1721 = vmatmul.bf16.gmra.mxu0 %v1708
        %v1722 = vpop.f32.mrf.mxu0
        %v1723 = vadd.f32 %v1680, %v1722
        %v1724 = vpop.f32.mrf.mxu0
        %v1725 = vadd.f32 %v1685, %v1724
        %1726 = vmatmul.bf16.gmra.mxu0 %v1711
        %v1727 = vpop.f32.mrf.mxu0
        %v1728 = vadd.f32 %v1690, %v1727
        %v1729 = vpop.f32.mrf.mxu0
        %v1730 = vadd.f32 %v1695, %v1729
        %1731 = vdwg.mxu0
        %v1732 = vmax.f32 %v1723, 0.0
        %v1733 = vmax.f32 %v1725, 0.0
        %v1734 = vmax.f32 %v1728, 0.0
        %v1735 = vmax.f32 %v1730, 0.0
        %v1736 = vpack.c.bf16 %v1733, %v1732
        %v1737 = vpack.c.bf16 %v1735, %v1734
        %s1738 = scalar_lea.vmem %s13, 16
        %v1739 = vld [vmem:[%s1738] sm:$0xf]
        %v1740 = vld [vmem:[%s1738 + $0x4] sm:$0xf]
        %v1741 = vld [vmem:[%s1738 + $0x8] sm:$0xf]
        %v1742 = vld [vmem:[%s1738 + $0xc] sm:$0xf]
        %s1743 = scalar_lea.vmem %s14, 32
        %v1744 = vld [vmem:[%s1743] sm:$0xff]
        %v1745 = vld [vmem:[%s1743 + $0x8] sm:$0xff]
        %v1746 = vld [vmem:[%s1743 + $0x10] sm:$0xff]
        %v1747 = vld [vmem:[%s1743 + $0x18] sm:$0xff]
        %1749 = vset.pattern.permute.xlu0 0
        %1750 = vperm.xlu0 %1749, %v1744
        %v1751 = vpop.permute.xlu0 %1750
        %1754 = vset.pattern.permute.xlu0 0
        %1755 = vperm.xlu0 %1754, %v1745
        %v1756 = vpop.permute.xlu0 %1755
        %1759 = vset.pattern.permute.xlu0 0
        %1760 = vperm.xlu0 %1759, %v1746
        %v1761 = vpop.permute.xlu0 %1760
        %1764 = vset.pattern.permute.xlu0 0
        %1765 = vperm.xlu0 %1764, %v1747
        %v1766 = vpop.permute.xlu0 %1765
        %v1772 = vunpack.c.l.b16 %v1739
        %v1773 = vunpack.c.l.b16 %v1740
        %v1774 = vunpack.c.l.b16 %v1741
        %v1775 = vunpack.c.l.b16 %v1742
        %v1776 = vpack.c.b16 %v1773, %v1772
        %v1777 = vpack.c.b16 %v1775, %v1774
        %v1779 = vsel %vm977, %v1776, 0
        %v1782 = vsel %vm977, %v1777, 0
        %1784 = vmatpush.bf16.msra.mxu0 0
        %1785 = vmatpush.bf16.msra.mxu0 0
        %1786 = vmatpush.bf16.msra.mxu0 0
        %1787 = vmatpush.bf16.msra.mxu0 0
        %1788 = vmatpush.bf16.msra.mxu0 0
        %1789 = vmatpush.bf16.msra.mxu0 0
        %1790 = vmatpush.bf16.msra.mxu0 %v1737
        %1791 = vmatpush.bf16.msra.mxu0 %v1736
        %1792 = vmatmul.bf16.gmra.mxu0 %v1779
        %v1793 = vpop.f32.mrf.mxu0
        %v1794 = vadd.f32 %v1751, %v1793
        %v1795 = vpop.f32.mrf.mxu0
        %v1796 = vadd.f32 %v1756, %v1795
        %1797 = vmatmul.bf16.gmra.mxu0 %v1782
        %v1798 = vpop.f32.mrf.mxu0
        %v1799 = vadd.f32 %v1761, %v1798
        %v1800 = vpop.f32.mrf.mxu0
        %v1801 = vadd.f32 %v1766, %v1800
        %1802 = vdwg.mxu0
        %v1803 = vadd.f32 %v1633, %v1794
        %v1804 = vadd.f32 %v1634, %v1796
        %v1805 = vadd.f32 %v1635, %v1799
        %v1806 = vadd.f32 %v1636, %v1801
        %1807 = vrot.lane.b32.xlu0 %v1803, 4
        %v1808 = vpop.permute.xlu0 %1807
        %1809 = vrot.lane.b32.xlu0 %v1804, 4
        %v1810 = vpop.permute.xlu0 %1809
        %1811 = vrot.lane.b32.xlu0 %v1805, 4
        %v1812 = vpop.permute.xlu0 %1811
        %1813 = vrot.lane.b32.xlu0 %v1806, 4
        %v1814 = vpop.permute.xlu0 %1813
        %v1815 = vsel %vm1193, %v1808, 0.0
        %v1816 = vsel %vm1193, %v1810, 0.0
        %v1817 = vsel %vm1193, %v1812, 0.0
        %v1818 = vsel %vm1193, %v1814, 0.0
        %1819 = vrot.lane.b32.xlu0 %v1803, 124
        %v1820 = vpop.permute.xlu0 %1819
        %1821 = vrot.lane.b32.xlu0 %v1804, 124
        %v1822 = vpop.permute.xlu0 %1821
        %1823 = vrot.lane.b32.xlu0 %v1805, 124
        %v1824 = vpop.permute.xlu0 %1823
        %1825 = vrot.lane.b32.xlu0 %v1806, 124
        %v1826 = vpop.permute.xlu0 %1825
        %v1827 = vsel %vm1208, %v1820, 0.0
        %v1828 = vsel %vm1208, %v1822, 0.0
        %v1829 = vsel %vm1208, %v1824, 0.0
        %v1830 = vsel %vm1208, %v1826, 0.0
        %v1831 = vpack.c.bf16 %v1816, %v1815
        %v1832 = vpack.c.bf16 %v1818, %v1817
        %v1833 = vpack.c.bf16 %v1804, %v1803
        %v1834 = vpack.c.bf16 %v1806, %v1805
        %v1835 = vpack.c.bf16 %v1828, %v1827
        %v1836 = vpack.c.bf16 %v1830, %v1829
        %s1837 = scalar_lea.vmem %s11, 32
        %v1838 = vld [vmem:[%s1837] sm:$0xf]
        %v1839 = vld [vmem:[%s1837 + $0x4] sm:$0xf]
        %v1840 = vld [vmem:[%s1837 + $0x8] sm:$0xf]
        %v1841 = vld [vmem:[%s1837 + $0xc] sm:$0xf]
        %s1842 = scalar_lea.vmem %s12, 64
        %v1843 = vld [vmem:[%s1842] sm:$0xff]
        %v1844 = vld [vmem:[%s1842 + $0x8] sm:$0xff]
        %v1845 = vld [vmem:[%s1842 + $0x10] sm:$0xff]
        %v1846 = vld [vmem:[%s1842 + $0x18] sm:$0xff]
        %1848 = vset.pattern.permute.xlu0 0
        %1849 = vperm.xlu0 %1848, %v1843
        %v1850 = vpop.permute.xlu0 %1849
        %1853 = vset.pattern.permute.xlu0 0
        %1854 = vperm.xlu0 %1853, %v1844
        %v1855 = vpop.permute.xlu0 %1854
        %1858 = vset.pattern.permute.xlu0 0
        %1859 = vperm.xlu0 %1858, %v1845
        %v1860 = vpop.permute.xlu0 %1859
        %1863 = vset.pattern.permute.xlu0 0
        %1864 = vperm.xlu0 %1863, %v1846
        %v1865 = vpop.permute.xlu0 %1864
        %v1871 = vunpack.c.l.b16 %v1838
        %v1872 = vunpack.c.l.b16 %v1839
        %v1873 = vunpack.c.l.b16 %v1840
        %v1874 = vunpack.c.l.b16 %v1841
        %v1875 = vpack.c.b16 %v1872, %v1871
        %v1876 = vpack.c.b16 %v1874, %v1873
        %v1878 = vsel %vm907, %v1875, 0
        %v1881 = vsel %vm907, %v1876, 0
        %1883 = vmatpush.bf16.msra.mxu0 0
        %1884 = vmatpush.bf16.msra.mxu0 0
        %1885 = vmatpush.bf16.msra.mxu0 %v1836
        %1886 = vmatpush.bf16.msra.mxu0 %v1835
        %1887 = vmatpush.bf16.msra.mxu0 %v1834
        %1888 = vmatpush.bf16.msra.mxu0 %v1833
        %1889 = vmatpush.bf16.msra.mxu0 %v1832
        %1890 = vmatpush.bf16.msra.mxu0 %v1831
        %1891 = vmatmul.bf16.gmra.mxu0 %v1878
        %v1892 = vpop.f32.mrf.mxu0
        %v1893 = vadd.f32 %v1850, %v1892
        %v1894 = vpop.f32.mrf.mxu0
        %v1895 = vadd.f32 %v1855, %v1894
        %1896 = vmatmul.bf16.gmra.mxu0 %v1881
        %v1897 = vpop.f32.mrf.mxu0
        %v1898 = vadd.f32 %v1860, %v1897
        %v1899 = vpop.f32.mrf.mxu0
        %v1900 = vadd.f32 %v1865, %v1899
        %1901 = vdwg.mxu0
        %v1902 = vmax.f32 %v1893, 0.0
        %v1903 = vmax.f32 %v1895, 0.0
        %v1904 = vmax.f32 %v1898, 0.0
        %v1905 = vmax.f32 %v1900, 0.0
        %v1906 = vpack.c.bf16 %v1903, %v1902
        %v1907 = vpack.c.bf16 %v1905, %v1904
        %s1908 = scalar_lea.vmem %s13, 32
        %v1909 = vld [vmem:[%s1908] sm:$0xf]
        %v1910 = vld [vmem:[%s1908 + $0x4] sm:$0xf]
        %v1911 = vld [vmem:[%s1908 + $0x8] sm:$0xf]
        %v1912 = vld [vmem:[%s1908 + $0xc] sm:$0xf]
        %s1913 = scalar_lea.vmem %s14, 64
        %v1914 = vld [vmem:[%s1913] sm:$0xff]
        %v1915 = vld [vmem:[%s1913 + $0x8] sm:$0xff]
        %v1916 = vld [vmem:[%s1913 + $0x10] sm:$0xff]
        %v1917 = vld [vmem:[%s1913 + $0x18] sm:$0xff]
        %1919 = vset.pattern.permute.xlu0 0
        %1920 = vperm.xlu0 %1919, %v1914
        %v1921 = vpop.permute.xlu0 %1920
        %1924 = vset.pattern.permute.xlu0 0
        %1925 = vperm.xlu0 %1924, %v1915
        %v1926 = vpop.permute.xlu0 %1925
        %1929 = vset.pattern.permute.xlu0 0
        %1930 = vperm.xlu0 %1929, %v1916
        %v1931 = vpop.permute.xlu0 %1930
        %1934 = vset.pattern.permute.xlu0 0
        %1935 = vperm.xlu0 %1934, %v1917
        %v1936 = vpop.permute.xlu0 %1935
        %v1942 = vunpack.c.l.b16 %v1909
        %v1943 = vunpack.c.l.b16 %v1910
        %v1944 = vunpack.c.l.b16 %v1911
        %v1945 = vunpack.c.l.b16 %v1912
        %v1946 = vpack.c.b16 %v1943, %v1942
        %v1947 = vpack.c.b16 %v1945, %v1944
        %v1949 = vsel %vm977, %v1946, 0
        %v1952 = vsel %vm977, %v1947, 0
        %1954 = vmatpush.bf16.msra.mxu0 0
        %1955 = vmatpush.bf16.msra.mxu0 0
        %1956 = vmatpush.bf16.msra.mxu0 0
        %1957 = vmatpush.bf16.msra.mxu0 0
        %1958 = vmatpush.bf16.msra.mxu0 0
        %1959 = vmatpush.bf16.msra.mxu0 0
        %1960 = vmatpush.bf16.msra.mxu0 %v1907
        %1961 = vmatpush.bf16.msra.mxu0 %v1906
        %1962 = vmatmul.bf16.gmra.mxu0 %v1949
        %v1963 = vpop.f32.mrf.mxu0
        %v1964 = vadd.f32 %v1921, %v1963
        %v1965 = vpop.f32.mrf.mxu0
        %v1966 = vadd.f32 %v1926, %v1965
        %1967 = vmatmul.bf16.gmra.mxu0 %v1952
        %v1968 = vpop.f32.mrf.mxu0
        %v1969 = vadd.f32 %v1931, %v1968
        %v1970 = vpop.f32.mrf.mxu0
        %v1971 = vadd.f32 %v1936, %v1970
        %1972 = vdwg.mxu0
        %v1973 = vadd.f32 %v1803, %v1964
        %v1974 = vadd.f32 %v1804, %v1966
        %v1975 = vadd.f32 %v1805, %v1969
        %v1976 = vadd.f32 %v1806, %v1971
        %v1977 = vld [vmem:[%s15] sm:$0xf]
        %v1978 = vpack.c.bf16 %v1974, %v1973
        %v1979 = vpack.c.bf16 %v1976, %v1975
        %v1980 = vld [vmem:[%s16] sm:$0xff]
        %1982 = vset.pattern.permute.xlu0 0
        %1983 = vperm.xlu0 %1982, %v1980
        %v1984 = vpop.permute.xlu0 %1983
        %v1987 = vsel %vm977, %v1977, 0
        %1989 = vmatpush.bf16.msra.mxu0 0
        %1990 = vmatpush.bf16.msra.mxu0 0
        %1991 = vmatpush.bf16.msra.mxu0 0
        %1992 = vmatpush.bf16.msra.mxu0 0
        %1993 = vmatpush.bf16.msra.mxu0 0
        %1994 = vmatpush.bf16.msra.mxu0 0
        %1995 = vmatpush.bf16.msra.mxu0 %v1979
        %1996 = vmatpush.bf16.msra.mxu0 %v1978
        %1997 = vmatmul.bf16.gmra.mxu0 %v1987
        %v1998 = vpop.f32.mrf.mxu0
        %v1999 = vadd.f32 %v1984, %v1998
        %v2000 = vpop.f32.mrf.mxu0
        %2001 = vdwg.mxu0
        %s2002 = scalar_lea.vmem %s755, 8 [#allocation2]
        %2003 = vst [vmem:[%s2002] sm:$0xff] %v1999
        %v2004 = vrot.slane %v1999, 4
        %v2005 = vmax.f32 %v1999, %v2004
        %v2006 = vrot.slane %v2005, 2
        %v2007 = vmax.f32 %v2005, %v2006
        %v2008 = vrot.slane %v2007, 1
        %v2009 = vmax.f32 %v2007, %v2008
        %v2010 = vsub.f32 %v1999, %v2009
        %v2011 = vmul.f32 %v2010, 1.442695
        %v2012 = vpow.pop %v2011
        %v2013 = vrot.slane %v2012, 4
        %v2014 = vadd.f32 %v2012, %v2013
        %v2015 = vrot.slane %v2014, 2
        %v2016 = vadd.f32 %v2014, %v2015
        %v2017 = vrot.slane %v2016, 1
        %v2018 = vadd.f32 %v2016, %v2017
        %v2019 = vrcp.pop %v2018
        %v2020 = vmul.f32 %v2012, %v2019
        %v2021 = vld [vmem:[%s17] sm:$0xf]
        %v2022 = vld [vmem:[%s17 + $0x4] sm:$0xf]
        %v2023 = vld [vmem:[%s17 + $0x8] sm:$0xf]
        %v2024 = vld [vmem:[%s17 + $0xc] sm:$0xf]
        %v2025 = vpack.c.bf16 %v2020, %v2020
        %v2026 = vld [vmem:[%s18] sm:$0xff]
        %v2027 = vld [vmem:[%s18 + $0x8] sm:$0xff]
        %v2028 = vld [vmem:[%s18 + $0x10] sm:$0xff]
        %v2029 = vld [vmem:[%s18 + $0x18] sm:$0xff]
        %2031 = vset.pattern.permute.xlu0 0
        %2032 = vperm.xlu0 %2031, %v2026
        %v2033 = vpop.permute.xlu0 %2032
        %2036 = vset.pattern.permute.xlu0 0
        %2037 = vperm.xlu0 %2036, %v2027
        %v2038 = vpop.permute.xlu0 %2037
        %2041 = vset.pattern.permute.xlu0 0
        %2042 = vperm.xlu0 %2041, %v2028
        %v2043 = vpop.permute.xlu0 %2042
        %2046 = vset.pattern.permute.xlu0 0
        %2047 = vperm.xlu0 %2046, %v2029
        %v2048 = vpop.permute.xlu0 %2047
        %v2054 = vunpack.c.l.b16 %v2021
        %v2055 = vunpack.c.l.b16 %v2022
        %v2056 = vunpack.c.l.b16 %v2023
        %v2057 = vunpack.c.l.b16 %v2024
        %v2058 = vpack.c.b16 %v2055, %v2054
        %v2059 = vpack.c.b16 %v2057, %v2056
        %v2061 = vsel %vm1441, %v2058, 0
        %v2064 = vsel %vm1441, %v2059, 0
        %v2067 = vsel %vm1448, %v2025, 0
        %2069 = vmatpush.bf16.msra.mxu0 0
        %2070 = vmatpush.bf16.msra.mxu0 0
        %2071 = vmatpush.bf16.msra.mxu0 0
        %2072 = vmatpush.bf16.msra.mxu0 0
        %2073 = vmatpush.bf16.msra.mxu0 0
        %2074 = vmatpush.bf16.msra.mxu0 0
        %2075 = vmatpush.bf16.msra.mxu0 0
        %2076 = vmatpush.bf16.msra.mxu0 %v2067
        %2077 = vmatmul.bf16.gmra.mxu0 %v2061
        %v2078 = vpop.f32.mrf.mxu0
        %v2079 = vadd.f32 %v2033, %v2078
        %v2080 = vpop.f32.mrf.mxu0
        %v2081 = vadd.f32 %v2038, %v2080
        %2082 = vmatmul.bf16.gmra.mxu0 %v2064
        %v2083 = vpop.f32.mrf.mxu0
        %v2084 = vadd.f32 %v2043, %v2083
        %v2085 = vpop.f32.mrf.mxu0
        %v2086 = vadd.f32 %v2048, %v2085
        %2087 = vdwg.mxu0
        %2088 = vrot.lane.b32.xlu0 %v2079, 1
        %v2089 = vpop.permute.xlu0 %2088
        %2090 = vrot.lane.b32.xlu0 %v2081, 1
        %v2091 = vpop.permute.xlu0 %2090
        %2092 = vrot.lane.b32.xlu0 %v2084, 1
        %v2093 = vpop.permute.xlu0 %2092
        %2094 = vrot.lane.b32.xlu0 %v2086, 1
        %v2095 = vpop.permute.xlu0 %2094
        %v2096 = vsel %vm843, %v2089, 0.0
        %v2097 = vsel %vm843, %v2091, 0.0
        %v2098 = vsel %vm843, %v2093, 0.0
        %v2099 = vsel %vm843, %v2095, 0.0
        %2100 = vrot.lane.b32.xlu0 %v2079, 127
        %v2101 = vpop.permute.xlu0 %2100
        %2102 = vrot.lane.b32.xlu0 %v2081, 127
        %v2103 = vpop.permute.xlu0 %2102
        %2104 = vrot.lane.b32.xlu0 %v2084, 127
        %v2105 = vpop.permute.xlu0 %2104
        %2106 = vrot.lane.b32.xlu0 %v2086, 127
        %v2107 = vpop.permute.xlu0 %2106
        %v2108 = vsel %vm858, %v2101, 0.0
        %v2109 = vsel %vm858, %v2103, 0.0
        %v2110 = vsel %vm858, %v2105, 0.0
        %v2111 = vsel %vm858, %v2107, 0.0
        %v2112 = vpack.c.bf16 %v2097, %v2096
        %v2113 = vpack.c.bf16 %v2099, %v2098
        %v2114 = vpack.c.bf16 %v2081, %v2079
        %v2115 = vpack.c.bf16 %v2086, %v2084
        %v2116 = vpack.c.bf16 %v2109, %v2108
        %v2117 = vpack.c.bf16 %v2111, %v2110
        %v2118 = vld [vmem:[%s19] sm:$0xf]
        %v2119 = vld [vmem:[%s19 + $0x4] sm:$0xf]
        %v2120 = vld [vmem:[%s19 + $0x8] sm:$0xf]
        %v2121 = vld [vmem:[%s19 + $0xc] sm:$0xf]
        %v2122 = vld [vmem:[%s20] sm:$0xff]
        %v2123 = vld [vmem:[%s20 + $0x8] sm:$0xff]
        %v2124 = vld [vmem:[%s20 + $0x10] sm:$0xff]
        %v2125 = vld [vmem:[%s20 + $0x18] sm:$0xff]
        %2127 = vset.pattern.permute.xlu0 0
        %2128 = vperm.xlu0 %2127, %v2122
        %v2129 = vpop.permute.xlu0 %2128
        %2132 = vset.pattern.permute.xlu0 0
        %2133 = vperm.xlu0 %2132, %v2123
        %v2134 = vpop.permute.xlu0 %2133
        %2137 = vset.pattern.permute.xlu0 0
        %2138 = vperm.xlu0 %2137, %v2124
        %v2139 = vpop.permute.xlu0 %2138
        %2142 = vset.pattern.permute.xlu0 0
        %2143 = vperm.xlu0 %2142, %v2125
        %v2144 = vpop.permute.xlu0 %2143
        %v2150 = vunpack.c.l.b16 %v2118
        %v2151 = vunpack.c.l.b16 %v2119
        %v2152 = vunpack.c.l.b16 %v2120
        %v2153 = vunpack.c.l.b16 %v2121
        %v2154 = vpack.c.b16 %v2151, %v2150
        %v2155 = vpack.c.b16 %v2153, %v2152
        %v2157 = vsel %vm907, %v2154, 0
        %v2160 = vsel %vm907, %v2155, 0
        %2162 = vmatpush.bf16.msra.mxu0 0
        %2163 = vmatpush.bf16.msra.mxu0 0
        %2164 = vmatpush.bf16.msra.mxu0 %v2117
        %2165 = vmatpush.bf16.msra.mxu0 %v2116
        %2166 = vmatpush.bf16.msra.mxu0 %v2115
        %2167 = vmatpush.bf16.msra.mxu0 %v2114
        %2168 = vmatpush.bf16.msra.mxu0 %v2113
        %2169 = vmatpush.bf16.msra.mxu0 %v2112
        %2170 = vmatmul.bf16.gmra.mxu0 %v2157
        %v2171 = vpop.f32.mrf.mxu0
        %v2172 = vadd.f32 %v2129, %v2171
        %v2173 = vpop.f32.mrf.mxu0
        %v2174 = vadd.f32 %v2134, %v2173
        %2175 = vmatmul.bf16.gmra.mxu0 %v2160
        %v2176 = vpop.f32.mrf.mxu0
        %v2177 = vadd.f32 %v2139, %v2176
        %v2178 = vpop.f32.mrf.mxu0
        %v2179 = vadd.f32 %v2144, %v2178
        %2180 = vdwg.mxu0
        %v2181 = vmax.f32 %v2172, 0.0
        %v2182 = vmax.f32 %v2174, 0.0
        %v2183 = vmax.f32 %v2177, 0.0
        %v2184 = vmax.f32 %v2179, 0.0
        %v2185 = vpack.c.bf16 %v2182, %v2181
        %v2186 = vpack.c.bf16 %v2184, %v2183
        %v2187 = vld [vmem:[%s21] sm:$0xf]
        %v2188 = vld [vmem:[%s21 + $0x4] sm:$0xf]
        %v2189 = vld [vmem:[%s21 + $0x8] sm:$0xf]
        %v2190 = vld [vmem:[%s21 + $0xc] sm:$0xf]
        %v2191 = vld [vmem:[%s22] sm:$0xff]
        %v2192 = vld [vmem:[%s22 + $0x8] sm:$0xff]
        %v2193 = vld [vmem:[%s22 + $0x10] sm:$0xff]
        %v2194 = vld [vmem:[%s22 + $0x18] sm:$0xff]
        %2196 = vset.pattern.permute.xlu0 0
        %2197 = vperm.xlu0 %2196, %v2191
        %v2198 = vpop.permute.xlu0 %2197
        %2201 = vset.pattern.permute.xlu0 0
        %2202 = vperm.xlu0 %2201, %v2192
        %v2203 = vpop.permute.xlu0 %2202
        %2206 = vset.pattern.permute.xlu0 0
        %2207 = vperm.xlu0 %2206, %v2193
        %v2208 = vpop.permute.xlu0 %2207
        %2211 = vset.pattern.permute.xlu0 0
        %2212 = vperm.xlu0 %2211, %v2194
        %v2213 = vpop.permute.xlu0 %2212
        %v2219 = vunpack.c.l.b16 %v2187
        %v2220 = vunpack.c.l.b16 %v2188
        %v2221 = vunpack.c.l.b16 %v2189
        %v2222 = vunpack.c.l.b16 %v2190
        %v2223 = vpack.c.b16 %v2220, %v2219
        %v2224 = vpack.c.b16 %v2222, %v2221
        %v2226 = vsel %vm977, %v2223, 0
        %v2229 = vsel %vm977, %v2224, 0
        %2231 = vmatpush.bf16.msra.mxu0 0
        %2232 = vmatpush.bf16.msra.mxu0 0
        %2233 = vmatpush.bf16.msra.mxu0 0
        %2234 = vmatpush.bf16.msra.mxu0 0
        %2235 = vmatpush.bf16.msra.mxu0 0
        %2236 = vmatpush.bf16.msra.mxu0 0
        %2237 = vmatpush.bf16.msra.mxu0 %v2186
        %2238 = vmatpush.bf16.msra.mxu0 %v2185
        %2239 = vmatmul.bf16.gmra.mxu0 %v2226
        %v2240 = vpop.f32.mrf.mxu0
        %v2241 = vadd.f32 %v2198, %v2240
        %v2242 = vpop.f32.mrf.mxu0
        %v2243 = vadd.f32 %v2203, %v2242
        %2244 = vmatmul.bf16.gmra.mxu0 %v2229
        %v2245 = vpop.f32.mrf.mxu0
        %v2246 = vadd.f32 %v2208, %v2245
        %v2247 = vpop.f32.mrf.mxu0
        %v2248 = vadd.f32 %v2213, %v2247
        %2249 = vdwg.mxu0
        %v2250 = vadd.f32 %v2079, %v2241
        %v2251 = vadd.f32 %v2081, %v2243
        %v2252 = vadd.f32 %v2084, %v2246
        %v2253 = vadd.f32 %v2086, %v2248
        %2254 = vrot.lane.b32.xlu0 %v2250, 2
        %v2255 = vpop.permute.xlu0 %2254
        %2256 = vrot.lane.b32.xlu0 %v2251, 2
        %v2257 = vpop.permute.xlu0 %2256
        %2258 = vrot.lane.b32.xlu0 %v2252, 2
        %v2259 = vpop.permute.xlu0 %2258
        %2260 = vrot.lane.b32.xlu0 %v2253, 2
        %v2261 = vpop.permute.xlu0 %2260
        %v2262 = vsel %vm1017, %v2255, 0.0
        %v2263 = vsel %vm1017, %v2257, 0.0
        %v2264 = vsel %vm1017, %v2259, 0.0
        %v2265 = vsel %vm1017, %v2261, 0.0
        %2266 = vrot.lane.b32.xlu0 %v2250, 126
        %v2267 = vpop.permute.xlu0 %2266
        %2268 = vrot.lane.b32.xlu0 %v2251, 126
        %v2269 = vpop.permute.xlu0 %2268
        %2270 = vrot.lane.b32.xlu0 %v2252, 126
        %v2271 = vpop.permute.xlu0 %2270
        %2272 = vrot.lane.b32.xlu0 %v2253, 126
        %v2273 = vpop.permute.xlu0 %2272
        %v2274 = vsel %vm1032, %v2267, 0.0
        %v2275 = vsel %vm1032, %v2269, 0.0
        %v2276 = vsel %vm1032, %v2271, 0.0
        %v2277 = vsel %vm1032, %v2273, 0.0
        %v2278 = vpack.c.bf16 %v2263, %v2262
        %v2279 = vpack.c.bf16 %v2265, %v2264
        %v2280 = vpack.c.bf16 %v2251, %v2250
        %v2281 = vpack.c.bf16 %v2253, %v2252
        %v2282 = vpack.c.bf16 %v2275, %v2274
        %v2283 = vpack.c.bf16 %v2277, %v2276
        %s2284 = scalar_lea.vmem %s19, 16
        %v2285 = vld [vmem:[%s2284] sm:$0xf]
        %v2286 = vld [vmem:[%s2284 + $0x4] sm:$0xf]
        %v2287 = vld [vmem:[%s2284 + $0x8] sm:$0xf]
        %v2288 = vld [vmem:[%s2284 + $0xc] sm:$0xf]
        %s2289 = scalar_lea.vmem %s20, 32
        %v2290 = vld [vmem:[%s2289] sm:$0xff]
        %v2291 = vld [vmem:[%s2289 + $0x8] sm:$0xff]
        %v2292 = vld [vmem:[%s2289 + $0x10] sm:$0xff]
        %v2293 = vld [vmem:[%s2289 + $0x18] sm:$0xff]
        %2295 = vset.pattern.permute.xlu0 0
        %2296 = vperm.xlu0 %2295, %v2290
        %v2297 = vpop.permute.xlu0 %2296
        %2300 = vset.pattern.permute.xlu0 0
        %2301 = vperm.xlu0 %2300, %v2291
        %v2302 = vpop.permute.xlu0 %2301
        %2305 = vset.pattern.permute.xlu0 0
        %2306 = vperm.xlu0 %2305, %v2292
        %v2307 = vpop.permute.xlu0 %2306
        %2310 = vset.pattern.permute.xlu0 0
        %2311 = vperm.xlu0 %2310, %v2293
        %v2312 = vpop.permute.xlu0 %2311
        %v2318 = vunpack.c.l.b16 %v2285
        %v2319 = vunpack.c.l.b16 %v2286
        %v2320 = vunpack.c.l.b16 %v2287
        %v2321 = vunpack.c.l.b16 %v2288
        %v2322 = vpack.c.b16 %v2319, %v2318
        %v2323 = vpack.c.b16 %v2321, %v2320
        %v2325 = vsel %vm907, %v2322, 0
        %v2328 = vsel %vm907, %v2323, 0
        %2330 = vmatpush.bf16.msra.mxu0 0
        %2331 = vmatpush.bf16.msra.mxu0 0
        %2332 = vmatpush.bf16.msra.mxu0 %v2283
        %2333 = vmatpush.bf16.msra.mxu0 %v2282
        %2334 = vmatpush.bf16.msra.mxu0 %v2281
        %2335 = vmatpush.bf16.msra.mxu0 %v2280
        %2336 = vmatpush.bf16.msra.mxu0 %v2279
        %2337 = vmatpush.bf16.msra.mxu0 %v2278
        %2338 = vmatmul.bf16.gmra.mxu0 %v2325
        %v2339 = vpop.f32.mrf.mxu0
        %v2340 = vadd.f32 %v2297, %v2339
        %v2341 = vpop.f32.mrf.mxu0
        %v2342 = vadd.f32 %v2302, %v2341
        %2343 = vmatmul.bf16.gmra.mxu0 %v2328
        %v2344 = vpop.f32.mrf.mxu0
        %v2345 = vadd.f32 %v2307, %v2344
        %v2346 = vpop.f32.mrf.mxu0
        %v2347 = vadd.f32 %v2312, %v2346
        %2348 = vdwg.mxu0
        %v2349 = vmax.f32 %v2340, 0.0
        %v2350 = vmax.f32 %v2342, 0.0
        %v2351 = vmax.f32 %v2345, 0.0
        %v2352 = vmax.f32 %v2347, 0.0
        %v2353 = vpack.c.bf16 %v2350, %v2349
        %v2354 = vpack.c.bf16 %v2352, %v2351
        %s2355 = scalar_lea.vmem %s21, 16
        %v2356 = vld [vmem:[%s2355] sm:$0xf]
        %v2357 = vld [vmem:[%s2355 + $0x4] sm:$0xf]
        %v2358 = vld [vmem:[%s2355 + $0x8] sm:$0xf]
        %v2359 = vld [vmem:[%s2355 + $0xc] sm:$0xf]
        %s2360 = scalar_lea.vmem %s22, 32
        %v2361 = vld [vmem:[%s2360] sm:$0xff]
        %v2362 = vld [vmem:[%s2360 + $0x8] sm:$0xff]
        %v2363 = vld [vmem:[%s2360 + $0x10] sm:$0xff]
        %v2364 = vld [vmem:[%s2360 + $0x18] sm:$0xff]
        %2366 = vset.pattern.permute.xlu0 0
        %2367 = vperm.xlu0 %2366, %v2361
        %v2368 = vpop.permute.xlu0 %2367
        %2371 = vset.pattern.permute.xlu0 0
        %2372 = vperm.xlu0 %2371, %v2362
        %v2373 = vpop.permute.xlu0 %2372
        %2376 = vset.pattern.permute.xlu0 0
        %2377 = vperm.xlu0 %2376, %v2363
        %v2378 = vpop.permute.xlu0 %2377
        %2381 = vset.pattern.permute.xlu0 0
        %2382 = vperm.xlu0 %2381, %v2364
        %v2383 = vpop.permute.xlu0 %2382
        %v2389 = vunpack.c.l.b16 %v2356
        %v2390 = vunpack.c.l.b16 %v2357
        %v2391 = vunpack.c.l.b16 %v2358
        %v2392 = vunpack.c.l.b16 %v2359
        %v2393 = vpack.c.b16 %v2390, %v2389
        %v2394 = vpack.c.b16 %v2392, %v2391
        %v2396 = vsel %vm977, %v2393, 0
        %v2399 = vsel %vm977, %v2394, 0
        %2401 = vmatpush.bf16.msra.mxu0 0
        %2402 = vmatpush.bf16.msra.mxu0 0
        %2403 = vmatpush.bf16.msra.mxu0 0
        %2404 = vmatpush.bf16.msra.mxu0 0
        %2405 = vmatpush.bf16.msra.mxu0 0
        %2406 = vmatpush.bf16.msra.mxu0 0
        %2407 = vmatpush.bf16.msra.mxu0 %v2354
        %2408 = vmatpush.bf16.msra.mxu0 %v2353
        %2409 = vmatmul.bf16.gmra.mxu0 %v2396
        %v2410 = vpop.f32.mrf.mxu0
        %v2411 = vadd.f32 %v2368, %v2410
        %v2412 = vpop.f32.mrf.mxu0
        %v2413 = vadd.f32 %v2373, %v2412
        %2414 = vmatmul.bf16.gmra.mxu0 %v2399
        %v2415 = vpop.f32.mrf.mxu0
        %v2416 = vadd.f32 %v2378, %v2415
        %v2417 = vpop.f32.mrf.mxu0
        %v2418 = vadd.f32 %v2383, %v2417
        %2419 = vdwg.mxu0
        %v2420 = vadd.f32 %v2250, %v2411
        %v2421 = vadd.f32 %v2251, %v2413
        %v2422 = vadd.f32 %v2252, %v2416
        %v2423 = vadd.f32 %v2253, %v2418
        %2424 = vrot.lane.b32.xlu0 %v2420, 4
        %v2425 = vpop.permute.xlu0 %2424
        %2426 = vrot.lane.b32.xlu0 %v2421, 4
        %v2427 = vpop.permute.xlu0 %2426
        %2428 = vrot.lane.b32.xlu0 %v2422, 4
        %v2429 = vpop.permute.xlu0 %2428
        %2430 = vrot.lane.b32.xlu0 %v2423, 4
        %v2431 = vpop.permute.xlu0 %2430
        %v2432 = vsel %vm1193, %v2425, 0.0
        %v2433 = vsel %vm1193, %v2427, 0.0
        %v2434 = vsel %vm1193, %v2429, 0.0
        %v2435 = vsel %vm1193, %v2431, 0.0
        %2436 = vrot.lane.b32.xlu0 %v2420, 124
        %v2437 = vpop.permute.xlu0 %2436
        %2438 = vrot.lane.b32.xlu0 %v2421, 124
        %v2439 = vpop.permute.xlu0 %2438
        %2440 = vrot.lane.b32.xlu0 %v2422, 124
        %v2441 = vpop.permute.xlu0 %2440
        %2442 = vrot.lane.b32.xlu0 %v2423, 124
        %v2443 = vpop.permute.xlu0 %2442
        %v2444 = vsel %vm1208, %v2437, 0.0
        %v2445 = vsel %vm1208, %v2439, 0.0
        %v2446 = vsel %vm1208, %v2441, 0.0
        %v2447 = vsel %vm1208, %v2443, 0.0
        %v2448 = vpack.c.bf16 %v2433, %v2432
        %v2449 = vpack.c.bf16 %v2435, %v2434
        %v2450 = vpack.c.bf16 %v2421, %v2420
        %v2451 = vpack.c.bf16 %v2423, %v2422
        %v2452 = vpack.c.bf16 %v2445, %v2444
        %v2453 = vpack.c.bf16 %v2447, %v2446
        %s2454 = scalar_lea.vmem %s19, 32
        %v2455 = vld [vmem:[%s2454] sm:$0xf]
        %v2456 = vld [vmem:[%s2454 + $0x4] sm:$0xf]
        %v2457 = vld [vmem:[%s2454 + $0x8] sm:$0xf]
        %v2458 = vld [vmem:[%s2454 + $0xc] sm:$0xf]
        %s2459 = scalar_lea.vmem %s20, 64
        %v2460 = vld [vmem:[%s2459] sm:$0xff]
        %v2461 = vld [vmem:[%s2459 + $0x8] sm:$0xff]
        %v2462 = vld [vmem:[%s2459 + $0x10] sm:$0xff]
        %v2463 = vld [vmem:[%s2459 + $0x18] sm:$0xff]
        %2465 = vset.pattern.permute.xlu0 0
        %2466 = vperm.xlu0 %2465, %v2460
        %v2467 = vpop.permute.xlu0 %2466
        %2470 = vset.pattern.permute.xlu0 0
        %2471 = vperm.xlu0 %2470, %v2461
        %v2472 = vpop.permute.xlu0 %2471
        %2475 = vset.pattern.permute.xlu0 0
        %2476 = vperm.xlu0 %2475, %v2462
        %v2477 = vpop.permute.xlu0 %2476
        %2480 = vset.pattern.permute.xlu0 0
        %2481 = vperm.xlu0 %2480, %v2463
        %v2482 = vpop.permute.xlu0 %2481
        %v2488 = vunpack.c.l.b16 %v2455
        %v2489 = vunpack.c.l.b16 %v2456
        %v2490 = vunpack.c.l.b16 %v2457
        %v2491 = vunpack.c.l.b16 %v2458
        %v2492 = vpack.c.b16 %v2489, %v2488
        %v2493 = vpack.c.b16 %v2491, %v2490
        %v2495 = vsel %vm907, %v2492, 0
        %v2498 = vsel %vm907, %v2493, 0
        %2500 = vmatpush.bf16.msra.mxu0 0
        %2501 = vmatpush.bf16.msra.mxu0 0
        %2502 = vmatpush.bf16.msra.mxu0 %v2453
        %2503 = vmatpush.bf16.msra.mxu0 %v2452
        %2504 = vmatpush.bf16.msra.mxu0 %v2451
        %2505 = vmatpush.bf16.msra.mxu0 %v2450
        %2506 = vmatpush.bf16.msra.mxu0 %v2449
        %2507 = vmatpush.bf16.msra.mxu0 %v2448
        %2508 = vmatmul.bf16.gmra.mxu0 %v2495
        %v2509 = vpop.f32.mrf.mxu0
        %v2510 = vadd.f32 %v2467, %v2509
        %v2511 = vpop.f32.mrf.mxu0
        %v2512 = vadd.f32 %v2472, %v2511
        %2513 = vmatmul.bf16.gmra.mxu0 %v2498
        %v2514 = vpop.f32.mrf.mxu0
        %v2515 = vadd.f32 %v2477, %v2514
        %v2516 = vpop.f32.mrf.mxu0
        %v2517 = vadd.f32 %v2482, %v2516
        %2518 = vdwg.mxu0
        %v2519 = vmax.f32 %v2510, 0.0
        %v2520 = vmax.f32 %v2512, 0.0
        %v2521 = vmax.f32 %v2515, 0.0
        %v2522 = vmax.f32 %v2517, 0.0
        %v2523 = vpack.c.bf16 %v2520, %v2519
        %v2524 = vpack.c.bf16 %v2522, %v2521
        %s2525 = scalar_lea.vmem %s21, 32
        %v2526 = vld [vmem:[%s2525] sm:$0xf]
        %v2527 = vld [vmem:[%s2525 + $0x4] sm:$0xf]
        %v2528 = vld [vmem:[%s2525 + $0x8] sm:$0xf]
        %v2529 = vld [vmem:[%s2525 + $0xc] sm:$0xf]
        %s2530 = scalar_lea.vmem %s22, 64
        %v2531 = vld [vmem:[%s2530] sm:$0xff]
        %v2532 = vld [vmem:[%s2530 + $0x8] sm:$0xff]
        %v2533 = vld [vmem:[%s2530 + $0x10] sm:$0xff]
        %v2534 = vld [vmem:[%s2530 + $0x18] sm:$0xff]
        %2536 = vset.pattern.permute.xlu0 0
        %2537 = vperm.xlu0 %2536, %v2531
        %v2538 = vpop.permute.xlu0 %2537
        %2541 = vset.pattern.permute.xlu0 0
        %2542 = vperm.xlu0 %2541, %v2532
        %v2543 = vpop.permute.xlu0 %2542
        %2546 = vset.pattern.permute.xlu0 0
        %2547 = vperm.xlu0 %2546, %v2533
        %v2548 = vpop.permute.xlu0 %2547
        %2551 = vset.pattern.permute.xlu0 0
        %2552 = vperm.xlu0 %2551, %v2534
        %v2553 = vpop.permute.xlu0 %2552
        %v2559 = vunpack.c.l.b16 %v2526
        %v2560 = vunpack.c.l.b16 %v2527
        %v2561 = vunpack.c.l.b16 %v2528
        %v2562 = vunpack.c.l.b16 %v2529
        %v2563 = vpack.c.b16 %v2560, %v2559
        %v2564 = vpack.c.b16 %v2562, %v2561
        %v2566 = vsel %vm977, %v2563, 0
        %v2569 = vsel %vm977, %v2564, 0
        %2571 = vmatpush.bf16.msra.mxu0 0
        %2572 = vmatpush.bf16.msra.mxu0 0
        %2573 = vmatpush.bf16.msra.mxu0 0
        %2574 = vmatpush.bf16.msra.mxu0 0
        %2575 = vmatpush.bf16.msra.mxu0 0
        %2576 = vmatpush.bf16.msra.mxu0 0
        %2577 = vmatpush.bf16.msra.mxu0 %v2524
        %2578 = vmatpush.bf16.msra.mxu0 %v2523
        %2579 = vmatmul.bf16.gmra.mxu0 %v2566
        %v2580 = vpop.f32.mrf.mxu0
        %v2581 = vadd.f32 %v2538, %v2580
        %v2582 = vpop.f32.mrf.mxu0
        %v2583 = vadd.f32 %v2543, %v2582
        %2584 = vmatmul.bf16.gmra.mxu0 %v2569
        %v2585 = vpop.f32.mrf.mxu0
        %v2586 = vadd.f32 %v2548, %v2585
        %v2587 = vpop.f32.mrf.mxu0
        %v2588 = vadd.f32 %v2553, %v2587
        %2589 = vdwg.mxu0
        %v2590 = vadd.f32 %v2420, %v2581
        %v2591 = vadd.f32 %v2421, %v2583
        %v2592 = vadd.f32 %v2422, %v2586
        %v2593 = vadd.f32 %v2423, %v2588
        %v2594 = vld [vmem:[%s23] sm:$0xf]
        %v2595 = vpack.c.bf16 %v2591, %v2590
        %v2596 = vpack.c.bf16 %v2593, %v2592
        %v2597 = vld [vmem:[%s24] sm:$0xff]
        %2599 = vset.pattern.permute.xlu0 0
        %2600 = vperm.xlu0 %2599, %v2597
        %v2601 = vpop.permute.xlu0 %2600
        %v2604 = vsel %vm977, %v2594, 0
        %2606 = vmatpush.bf16.msra.mxu0 0
        %2607 = vmatpush.bf16.msra.mxu0 0
        %2608 = vmatpush.bf16.msra.mxu0 0
        %2609 = vmatpush.bf16.msra.mxu0 0
        %2610 = vmatpush.bf16.msra.mxu0 0
        %2611 = vmatpush.bf16.msra.mxu0 0
        %2612 = vmatpush.bf16.msra.mxu0 %v2596
        %2613 = vmatpush.bf16.msra.mxu0 %v2595
        %2614 = vmatmul.bf16.gmra.mxu0 %v2604
        %v2615 = vpop.f32.mrf.mxu0
        %v2616 = vadd.f32 %v2601, %v2615
        %v2617 = vpop.f32.mrf.mxu0
        %2618 = vdwg.mxu0
        %s2619 = scalar_lea.vmem %s755, 16 [#allocation2]
        %2620 = vst [vmem:[%s2619] sm:$0xff] %v2616
        %s2621 = sand.u32 %s577, 1
        %s2622 = scalar_lea.sflag [#allocation3], %s2621
        %s2623 = sand.u32 %s577, 1
        %s2624 = smul.addr %s2623, 24
        %s2625 = scalar_lea.vmem [#allocation2], %s2624
        // Predicated region
        $region121: #{tpu_custom_call.1} parent=119 // pred_check
          %p2626 = pneg %p587
        $region122: #{tpu_custom_call.1} parent=119 // pred_check_branch
          %2628 = sbr.rel (%p2626) target = $region124
        $region123: #{tpu_custom_call.1} parent=119 // pred_region
          %2630 = vsyncadd %s2622, 0
          %s2631 = smul.addr %s39, 8
          %s2632 = scalar_lea.hbm %s25, %s2631
          %s2633 = sshll.u32 %s2625, 4
          %s2634 = int_to_ptr.vmem [resolvable:$true] %s2633
          %s2635 = sshll.u32 %s2632, 4
          %s2636 = int_to_ptr.hbm [resolvable:$true] %s2635
          %2641 = dma.vmem_to_hbm [thread:$0]  %s2634, 384, %s2636, %s2622, 128, 256, 8
        $region124: #{tpu_custom_call.1} parent=119 // pred_fallthru
          _
      $region120: #{tpu_custom_call.1} parent=5 // pred_fallthru
        _
      %p2642 = scmp.le.s32.totalorder 2, %s34
      // Predicated region
      $region125: #{tpu_custom_call.1} parent=5 // pred_check
        %p2643 = pneg %p2642
      $region126: #{tpu_custom_call.1} parent=5 // pred_check_branch
        %2645 = sbr.rel (%p2643) target = $region128
      $region127: #{tpu_custom_call.1} parent=5 // pred_region
        %s2646 = ssub.s32 %s34, 2
        // Predicated region
        $region129: #{tpu_custom_call.1} parent=127 // pred_check
          %p2647 = pneg %p593
        $region130: #{tpu_custom_call.1} parent=127 // pred_check_branch
          %2649 = sbr.rel (%p2647) target = $region132
        $region131: #{tpu_custom_call.1} parent=127 // pred_region
          %s2650 = sand.u32 %s578, 1
          %s2651 = scalar_lea.sflag [#allocation3], %s2650
          %s2652 = sand.u32 %s578, 1
          %s2653 = smul.addr %s2652, 24
          %s2654 = scalar_lea.vmem [#allocation2], %s2653
          %2656 = dma.done %s2651, 384
        $region132: #{tpu_custom_call.1} parent=127 // pred_fallthru
          _
      $region128: #{tpu_custom_call.1} parent=5 // pred_fallthru
        _
    $region6: #{tpu_custom_call.1} parent=1 // loop_footer
      %s38 = sadd.s32 1, %s34
    $region7: #{tpu_custom_call.1} parent=1 // loop_footer_branch
      %33 = sbr.rel target = $region3
    $region8: #{tpu_custom_call.1} parent=1 // loop_exit
      _
    %2657 = vsyncpa [#allocation3], 1
    %s2658 = scalar_lea.sflag [#allocation3], 1
    %2659 = vsyncpa %s2658, 1

</llo_original>
